<compile_context>
chip_gen: v7x
topology: tpu7x:2x2x1
jax: 0.10.0
libtpu: 0.0.40
codegen_flags: <defaults>
</compile_context>

<pallas_src>
import functools
import math

import jax
import jax.numpy as jnp
from jax import lax
from jax.experimental import pallas as pl
from jax.experimental.pallas import tpu as pltpu


# ---------------------------------------------------------------------------
# Config (stands in for `opt`)
# ---------------------------------------------------------------------------
IMG_FEATURE_SIZE = 64     # opt.img_feature_size
HIDDEN = 32               # opt.lstm_hidden_size
FUSION_LAYERS = 2         # opt.fusion_layer
HEADS = 4                 # multi-head count inside SF
FF_SIZE = 64              # FFN hidden size inside SF
NUM_ROUNDS = 10           # hard-coded in the PyTorch forward
DISENTANGLE = True
LN_EPS = 1e-5


# ---------------------------------------------------------------------------
# Fused encoder kernel: one grid step == one batch element
# ---------------------------------------------------------------------------
def _encoder_kernel(*refs, num_layers, heads, disentangle):
    (img_ref, proj_w_ref, proj_b_ref,
     wq_ref, bq_ref, wk_ref, bk_ref, wv_ref, bv_ref, wm_ref, bm_ref,
     wf1_ref, bf1_ref, wf2_ref, bf2_ref,
     ln1_g_ref, ln1_b_ref, ln2_g_ref, ln2_b_ref) = refs[:19]
    if disentangle:
        halve_w_ref, halve_b_ref = refs[19:21]
    feat_ref, masksum_ref = refs[-2], refs[-1]

    # feature_projection: (P, F) @ (F, D) + b
    x = jnp.dot(img_ref[0], proj_w_ref[...],
                preferred_element_type=jnp.float32) + proj_b_ref[...]        # (P, D)

    D = x.shape[-1]
    dh = D // heads
    scale = 1.0 / math.sqrt(dh)

    # make_mask on projected features: per-key |x| row-sum laid out along lanes
    # via a "q @ k.T"-style contraction (avoids any sublane->lane transpose).
    ones_row = jnp.ones((1, D), jnp.float32)
    key_abs = lax.dot_general(ones_row, jnp.abs(x), (((1,), (1,)), ((), ())),
                              preferred_element_type=jnp.float32)            # (1, P)
    masksum_ref[0] = key_abs
    add_mask = jnp.where(key_abs == 0.0, jnp.float32(-1e9), jnp.float32(0.0))  # (1, P)

    def layernorm(h, g, b):
        mu = jnp.mean(h, axis=-1, keepdims=True)
        d = h - mu
        var = jnp.mean(d * d, axis=-1, keepdims=True)
        return d * lax.rsqrt(var + LN_EPS) * g + b

    for l in range(num_layers):                       # static unroll (L=2)
        q = jnp.dot(x, wq_ref[l], preferred_element_type=jnp.float32) + bq_ref[l]
        k = jnp.dot(x, wk_ref[l], preferred_element_type=jnp.float32) + bk_ref[l]
        v = jnp.dot(x, wv_ref[l], preferred_element_type=jnp.float32) + bv_ref[l]
        wm_l = wm_ref[l]

        att = None
        for h in range(heads):                        # heads = lane slices of D
            lo, hi = h * dh, (h + 1) * dh
            qh, kh, vh = q[:, lo:hi], k[:, lo:hi], v[:, lo:hi]
            s = lax.dot_general(qh, kh, (((1,), (1,)), ((), ())),
                                preferred_element_type=jnp.float32) * scale  # (P, P)
            s = s + add_mask                          # mask padded keys
            s = s - jnp.max(s, axis=-1, keepdims=True)
            p = jnp.exp(s)
            p = p * pl.reciprocal(jnp.sum(p, axis=-1, keepdims=True), approx=True)
            oh = jnp.dot(p, vh, preferred_element_type=jnp.float32)          # (P, dh)
            # fused output projection: concat(heads) @ Wm == sum_h oh @ Wm[rows_h]
            contrib = jnp.dot(oh, wm_l[lo:hi, :], preferred_element_type=jnp.float32)
            att = contrib if att is None else att + contrib
        att = att + bm_ref[l]

        x = layernorm(att + x, ln1_g_ref[l], ln1_b_ref[l])                    # norm1

        ff = jnp.maximum(
            jnp.dot(x, wf1_ref[l], preferred_element_type=jnp.float32) + bf1_ref[l],
            0.0)
        ff = jnp.dot(ff, wf2_ref[l], preferred_element_type=jnp.float32) + bf2_ref[l]
        x = layernorm(ff + x, ln2_g_ref[l], ln2_b_ref[l])                     # norm2

    if disentangle:
        x = jnp.dot(x, halve_w_ref[...],
                    preferred_element_type=jnp.float32) + halve_b_ref[...]

    feat_ref[0] = x.astype(feat_ref.dtype)


def _full_spec(shape):
    n = len(shape)
    return pl.BlockSpec(shape, lambda b, n=n: (0,) * n)


# ---------------------------------------------------------------------------
# Parameter construction (deterministic, PyTorch-style init ranges)
# ---------------------------------------------------------------------------
def _uniform(key, shape, bound):
    return jax.random.uniform(key, shape, jnp.float32, -bound, bound)


def _linear_params(key, fan_in, fan_out, kaiming=False):
    kw, kb = jax.random.split(key)
    if kaiming:
        w_bound = math.sqrt(6.0 / fan_in)           # kaiming_uniform_, a=0
        b = jnp.zeros((fan_out,), jnp.float32)      # constant_(bias, 0)
    else:
        w_bound = 1.0 / math.sqrt(fan_in)           # default nn.Linear init
        b = _uniform(kb, (fan_out,), 1.0 / math.sqrt(fan_in))
    w = _uniform(kw, (fan_in, fan_out), w_bound)    # stored (in, out): y = x @ w
    return w, b


def make_params(key):
    keys = jax.random.split(key, 2 + 6 * FUSION_LAYERS)
    it = iter(keys)

    params = {}
    w, b = _linear_params(next(it), IMG_FEATURE_SIZE, HIDDEN, kaiming=True)
    params["proj_w"], params["proj_b"] = w, b.reshape(1, HIDDEN)

    names = [("wq", "bq", HIDDEN, HIDDEN), ("wk", "bk", HIDDEN, HIDDEN),
             ("wv", "bv", HIDDEN, HIDDEN), ("wm", "bm", HIDDEN, HIDDEN),
             ("wf1", "bf1", HIDDEN, FF_SIZE), ("wf2", "bf2", FF_SIZE, HIDDEN)]
    stacks = {n: [] for tup in names for n in tup[:2]}
    for _ in range(FUSION_LAYERS):
        for wn, bn, fin, fout in names:
            w, b = _linear_params(next(it), fin, fout)
            stacks[wn].append(w)
            stacks[bn].append(b.reshape(1, fout))
    for n, lst in stacks.items():
        params[n] = jnp.stack(lst)                  # [L, ...], biases [L, 1, D]

    params["ln1_g"] = jnp.ones((FUSION_LAYERS, 1, HIDDEN), jnp.float32)
    params["ln1_b"] = jnp.zeros((FUSION_LAYERS, 1, HIDDEN), jnp.float32)
    params["ln2_g"] = jnp.ones((FUSION_LAYERS, 1, HIDDEN), jnp.float32)
    params["ln2_b"] = jnp.zeros((FUSION_LAYERS, 1, HIDDEN), jnp.float32)

    if DISENTANGLE:
        w, b = _linear_params(next(it), HIDDEN, HIDDEN // 2, kaiming=True)
        params["halve_w"], params["halve_b"] = w, b.reshape(1, HIDDEN // 2)
    return params


# ---------------------------------------------------------------------------
# Forward pass
# ---------------------------------------------------------------------------
def image_encoder_forward(params, img_features):
    """img_features: [B, P, img_feature_size] (float32).

    Returns (features, mask) matching the PyTorch module:
      features: [B*10, P, HIDDEN//2] (disentangle=True) else [B*10, P, HIDDEN]
      mask:     bool [B*10, 1, 1, P]
    """
    B, P, F = img_features.shape
    D = HIDDEN
    OUT_D = D // 2 if DISENTANGLE else D

    arg_names = ["proj_w", "proj_b",
                 "wq", "bq", "wk", "bk", "wv", "bv", "wm", "bm",
                 "wf1", "bf1", "wf2", "bf2",
                 "ln1_g", "ln1_b", "ln2_g", "ln2_b"]
    if DISENTANGLE:
        arg_names += ["halve_w", "halve_b"]
    args = [params[n] for n in arg_names]

    in_specs = [pl.BlockSpec((1, P, F), lambda b: (b, 0, 0))]
    in_specs += [_full_spec(a.shape) for a in args]     # weights: full, VMEM-resident

    out_shapes = (jax.ShapeDtypeStruct((B, P, OUT_D), jnp.float32),
                  jax.ShapeDtypeStruct((B, 1, P), jnp.float32))
    out_specs = (pl.BlockSpec((1, P, OUT_D), lambda b: (b, 0, 0)),
                 pl.BlockSpec((1, 1, P), lambda b: (b, 0, 0)))

    feats_b, abs_row = pl.pallas_call(
        functools.partial(_encoder_kernel, num_layers=FUSION_LAYERS,
                          heads=HEADS, disentangle=DISENTANGLE),
        out_shape=out_shapes,
        grid=(B,),
        in_specs=in_specs,
        out_specs=out_specs,
        compiler_params=pltpu.CompilerParams(dimension_semantics=("parallel",)),
    )(img_features, *args)

    # All 10 rounds are identical -> compute once above, tile at the very end.
    feats = jnp.broadcast_to(feats_b[:, None], (B, NUM_ROUNDS, P, OUT_D)).reshape(
        B * NUM_ROUNDS, P, OUT_D)
    mask_b = (abs_row == 0.0)                                       # (B, 1, P) bool
    mask = jnp.broadcast_to(mask_b[:, None, None, :, :],
                            (B, NUM_ROUNDS, 1, 1, P)).reshape(B * NUM_ROUNDS, 1, 1, P)
    return feats, mask


# ---------------------------------------------------------------------------
# Pure-JAX reference (for correctness check)
# ---------------------------------------------------------------------------
def _ln_ref(h, g, b):
    mu = jnp.mean(h, axis=-1, keepdims=True)
    var = jnp.mean((h - mu) ** 2, axis=-1, keepdims=True)
    return (h - mu) * lax.rsqrt(var + LN_EPS) * g + b


def reference_forward(params, img):
    B, P, F = img.shape
    D = HIDDEN
    dh = D // HEADS
    x = img @ params["proj_w"] + params["proj_b"]
    mask = (jnp.sum(jnp.abs(x), axis=-1) == 0.0)                    # (B, P)
    add_mask = jnp.where(mask, -1e9, 0.0)[:, None, None, :]
    for l in range(FUSION_LAYERS):
        q = x @ params["wq"][l] + params["bq"][l]
        k = x @ params["wk"][l] + params["bk"][l]
        v = x @ params["wv"][l] + params["bv"][l]
        split = lambda t: t.reshape(B, P, HEADS, dh).transpose(0, 2, 1, 3)
        s = jnp.einsum("bhqd,bhkd->bhqk", split(q), split(k)) / math.sqrt(dh) + add_mask
        p = jax.nn.softmax(s, axis=-1)
        o = jnp.einsum("bhqk,bhkd->bhqd", p, split(v)).transpose(0, 2, 1, 3).reshape(B, P, D)
        o = o @ params["wm"][l] + params["bm"][l]
        x = _ln_ref(o + x, params["ln1_g"][l], params["ln1_b"][l])
        ff = jax.nn.relu(x @ params["wf1"][l] + params["bf1"][l])
        ff = ff @ params["wf2"][l] + params["bf2"][l]
        x = _ln_ref(ff + x, params["ln2_g"][l], params["ln2_b"][l])
    if DISENTANGLE:
        x = x @ params["halve_w"] + params["halve_b"]
    return x, mask


# ---------------------------------------------------------------------------
# Main
# ---------------------------------------------------------------------------
if __name__ == "__main__":
    key = jax.random.PRNGKey(0)
    k_param, k_data = jax.random.split(key)

    params = make_params(k_param)

    B, P = 2, 8   # batch, num image proposals
    img_features = jax.random.normal(k_data, (B, P, IMG_FEATURE_SIZE), jnp.float32)

    fwd = jax.jit(functools.partial(image_encoder_forward, params))
    out_feats, out_mask = fwd(img_features)
    jax.block_until_ready(out_feats)
    jax.block_until_ready(out_mask)

    expected_d = HIDDEN // 2 if DISENTANGLE else HIDDEN
    assert out_feats.shape == (B * NUM_ROUNDS, P, expected_d), out_feats.shape
    assert out_mask.shape == (B * NUM_ROUNDS, 1, 1, P), out_mask.shape
    assert out_mask.dtype == jnp.bool_
    assert bool(jnp.all(jnp.isfinite(out_feats)))

    # correctness vs pure-JAX reference (tolerance covers approx reciprocal)
    ref_feats, ref_mask = reference_forward(params, img_features)
    got = out_feats.reshape(B, NUM_ROUNDS, P, expected_d)[:, 0]
    assert bool(jnp.allclose(got, ref_feats, atol=1e-2, rtol=1e-2)), \
        float(jnp.max(jnp.abs(got - ref_feats)))
    assert bool(jnp.all(out_mask.reshape(B, NUM_ROUNDS, P)[:, 0] == ref_mask))

    print("KERNEL_OK")
</pallas_src>

<mosaic_0001>
module attributes {stable_mosaic.version = 11 : i64} {
  func.func @_encoder_kernel(%arg0: i32, %arg1: memref<1x8x64xf32, #tpu.memory_space<vmem>>, %arg2: memref<64x32xf32, #tpu.memory_space<vmem>>, %arg3: memref<1x32xf32, #tpu.memory_space<vmem>>, %arg4: memref<2x32x32xf32, #tpu.memory_space<vmem>>, %arg5: memref<2x1x32xf32, #tpu.memory_space<vmem>>, %arg6: memref<2x32x32xf32, #tpu.memory_space<vmem>>, %arg7: memref<2x1x32xf32, #tpu.memory_space<vmem>>, %arg8: memref<2x32x32xf32, #tpu.memory_space<vmem>>, %arg9: memref<2x1x32xf32, #tpu.memory_space<vmem>>, %arg10: memref<2x32x32xf32, #tpu.memory_space<vmem>>, %arg11: memref<2x1x32xf32, #tpu.memory_space<vmem>>, %arg12: memref<2x32x64xf32, #tpu.memory_space<vmem>>, %arg13: memref<2x1x64xf32, #tpu.memory_space<vmem>>, %arg14: memref<2x64x32xf32, #tpu.memory_space<vmem>>, %arg15: memref<2x1x32xf32, #tpu.memory_space<vmem>>, %arg16: memref<2x1x32xf32, #tpu.memory_space<vmem>>, %arg17: memref<2x1x32xf32, #tpu.memory_space<vmem>>, %arg18: memref<2x1x32xf32, #tpu.memory_space<vmem>>, %arg19: memref<2x1x32xf32, #tpu.memory_space<vmem>>, %arg20: memref<32x16xf32, #tpu.memory_space<vmem>>, %arg21: memref<1x16xf32, #tpu.memory_space<vmem>>, %arg22: memref<1x8x16xf32, #tpu.memory_space<vmem>>, %arg23: memref<1x1x8xf32, #tpu.memory_space<vmem>>) attributes {dimension_semantics = [#tpu.dimension_semantics<parallel>], iteration_bounds = array<i64: 2>, scalar_prefetch = 0 : i64, scratch_operands = 0 : i64, tpu.core_type = #tpu.core_type<tc>, window_params = [{transform_indices = @transform_0, window_bounds = array<i64: 1, 8, 64>}, {pipeline_mode = #tpu.pipeline_mode<synchronous>, transform_indices = @transform_1, window_bounds = array<i64: 64, 32>}, {pipeline_mode = #tpu.pipeline_mode<synchronous>, transform_indices = @transform_2, window_bounds = array<i64: 1, 32>}, {pipeline_mode = #tpu.pipeline_mode<synchronous>, transform_indices = @transform_3, window_bounds = array<i64: 2, 32, 32>}, {pipeline_mode = #tpu.pipeline_mode<synchronous>, transform_indices = @transform_4, window_bounds = array<i64: 2, 1, 32>}, {pipeline_mode = #tpu.pipeline_mode<synchronous>, transform_indices = @transform_5, window_bounds = array<i64: 2, 32, 32>}, {pipeline_mode = #tpu.pipeline_mode<synchronous>, transform_indices = @transform_6, window_bounds = array<i64: 2, 1, 32>}, {pipeline_mode = #tpu.pipeline_mode<synchronous>, transform_indices = @transform_7, window_bounds = array<i64: 2, 32, 32>}, {pipeline_mode = #tpu.pipeline_mode<synchronous>, transform_indices = @transform_8, window_bounds = array<i64: 2, 1, 32>}, {pipeline_mode = #tpu.pipeline_mode<synchronous>, transform_indices = @transform_9, window_bounds = array<i64: 2, 32, 32>}, {pipeline_mode = #tpu.pipeline_mode<synchronous>, transform_indices = @transform_10, window_bounds = array<i64: 2, 1, 32>}, {pipeline_mode = #tpu.pipeline_mode<synchronous>, transform_indices = @transform_11, window_bounds = array<i64: 2, 32, 64>}, {pipeline_mode = #tpu.pipeline_mode<synchronous>, transform_indices = @transform_12, window_bounds = array<i64: 2, 1, 64>}, {pipeline_mode = #tpu.pipeline_mode<synchronous>, transform_indices = @transform_13, window_bounds = array<i64: 2, 64, 32>}, {pipeline_mode = #tpu.pipeline_mode<synchronous>, transform_indices = @transform_14, window_bounds = array<i64: 2, 1, 32>}, {pipeline_mode = #tpu.pipeline_mode<synchronous>, transform_indices = @transform_15, window_bounds = array<i64: 2, 1, 32>}, {pipeline_mode = #tpu.pipeline_mode<synchronous>, transform_indices = @transform_16, window_bounds = array<i64: 2, 1, 32>}, {pipeline_mode = #tpu.pipeline_mode<synchronous>, transform_indices = @transform_17, window_bounds = array<i64: 2, 1, 32>}, {pipeline_mode = #tpu.pipeline_mode<synchronous>, transform_indices = @transform_18, window_bounds = array<i64: 2, 1, 32>}, {pipeline_mode = #tpu.pipeline_mode<synchronous>, transform_indices = @transform_19, window_bounds = array<i64: 32, 16>}, {pipeline_mode = #tpu.pipeline_mode<synchronous>, transform_indices = @transform_20, window_bounds = array<i64: 1, 16>}, {transform_indices = @transform_21, window_bounds = array<i64: 1, 8, 16>}, {transform_indices = @transform_22, window_bounds = array<i64: 1, 1, 8>}]} {
    %c0 = arith.constant 0 : index
    %c0_0 = arith.constant 0 : index
    %c0_1 = arith.constant 0 : index
    %0 = vector.load %arg1[%c0, %c0_0, %c0_1] : memref<1x8x64xf32, #tpu.memory_space<vmem>>, vector<1x8x64xf32>
    %1 = vector.shape_cast %0 : vector<1x8x64xf32> to vector<8x64xf32>
    %c0_2 = arith.constant 0 : index
    %c0_3 = arith.constant 0 : index
    %2 = vector.load %arg2[%c0_2, %c0_3] : memref<64x32xf32, #tpu.memory_space<vmem>>, vector<64x32xf32>
    %cst = arith.constant dense<0.000000e+00> : vector<8x32xf32>
    %3 = tpu.matmul %1, %2, %cst {dimension_numbers = #tpu.dot_dimension_numbers<[1], [0], [0], [1], [0, 0, 1, 1], [], []>} : vector<8x64xf32>, vector<64x32xf32>, vector<8x32xf32> -> vector<8x32xf32>
    %c0_4 = arith.constant 0 : index
    %c0_5 = arith.constant 0 : index
    %4 = vector.load %arg3[%c0_4, %c0_5] : memref<1x32xf32, #tpu.memory_space<vmem>>, vector<1x32xf32>
    %5 = vector.broadcast %4 : vector<1x32xf32> to vector<8x32xf32>
    %6 = arith.addf %3, %5 : vector<8x32xf32>
    %cst_6 = arith.constant 1.000000e+00 : f32
    %7 = vector.broadcast %cst_6 : f32 to vector<1x32xf32>
    %8 = math.absf %6 : vector<8x32xf32>
    %cst_7 = arith.constant dense<0.000000e+00> : vector<1x8xf32>
    %9 = tpu.matmul %7, %8, %cst_7 {dimension_numbers = #tpu.dot_dimension_numbers<[1], [1], [0], [0], [0, 0, 1, 0], [], []>} : vector<1x32xf32>, vector<8x32xf32>, vector<1x8xf32> -> vector<1x8xf32>
    %c0_8 = arith.constant 0 : index
    %c0_9 = arith.constant 0 : index
    %c0_10 = arith.constant 0 : index
    %10 = vector.load %arg23[%c0_8, %c0_9, %c0_10] : memref<1x1x8xf32, #tpu.memory_space<vmem>>, vector<1x1x8xf32>
    %11 = vector.shape_cast %10 : vector<1x1x8xf32> to vector<1x8xf32>
    %12 = vector.shape_cast %9 : vector<1x8xf32> to vector<1x1x8xf32>
    tpu.vector_store %arg23[%c0_8, %c0_9, %c0_10], %12 {strides = array<i32>} : memref<1x1x8xf32, #tpu.memory_space<vmem>>, vector<1x1x8xf32>,
    %cst_11 = arith.constant 0.000000e+00 : f32
    %13 = vector.broadcast %cst_11 : f32 to vector<1x8xf32>
    %14 = arith.cmpf oeq, %9, %13 : vector<1x8xf32>
    %cst_12 = arith.constant -1.000000e+09 : f32
    %cst_13 = arith.constant 0.000000e+00 : f32
    %15 = vector.broadcast %cst_12 : f32 to vector<1x8xf32>
    %16 = vector.broadcast %cst_13 : f32 to vector<1x8xf32>
    %17 = arith.select %14, %15, %16 : vector<1x8xi1>, vector<1x8xf32>
    %c0_14 = arith.constant 0 : index
    %c0_15 = arith.constant 0 : index
    %c0_16 = arith.constant 0 : index
    %18 = vector.load %arg4[%c0_14, %c0_15, %c0_16] : memref<2x32x32xf32, #tpu.memory_space<vmem>>, vector<1x32x32xf32>
    %19 = vector.shape_cast %18 : vector<1x32x32xf32> to vector<32x32xf32>
    %cst_17 = arith.constant dense<0.000000e+00> : vector<8x32xf32>
    %20 = tpu.matmul %6, %19, %cst_17 {dimension_numbers = #tpu.dot_dimension_numbers<[1], [0], [0], [1], [0, 0, 1, 1], [], []>} : vector<8x32xf32>, vector<32x32xf32>, vector<8x32xf32> -> vector<8x32xf32>
    %c0_18 = arith.constant 0 : index
    %c0_19 = arith.constant 0 : index
    %c0_20 = arith.constant 0 : index
    %21 = vector.load %arg5[%c0_18, %c0_19, %c0_20] : memref<2x1x32xf32, #tpu.memory_space<vmem>>, vector<1x1x32xf32>
    %22 = vector.shape_cast %21 : vector<1x1x32xf32> to vector<1x32xf32>
    %23 = vector.broadcast %22 : vector<1x32xf32> to vector<8x32xf32>
    %24 = arith.addf %20, %23 : vector<8x32xf32>
    %c0_21 = arith.constant 0 : index
    %c0_22 = arith.constant 0 : index
    %c0_23 = arith.constant 0 : index
    %25 = vector.load %arg6[%c0_21, %c0_22, %c0_23] : memref<2x32x32xf32, #tpu.memory_space<vmem>>, vector<1x32x32xf32>
    %26 = vector.shape_cast %25 : vector<1x32x32xf32> to vector<32x32xf32>
    %cst_24 = arith.constant dense<0.000000e+00> : vector<8x32xf32>
    %27 = tpu.matmul %6, %26, %cst_24 {dimension_numbers = #tpu.dot_dimension_numbers<[1], [0], [0], [1], [0, 0, 1, 1], [], []>} : vector<8x32xf32>, vector<32x32xf32>, vector<8x32xf32> -> vector<8x32xf32>
    %c0_25 = arith.constant 0 : index
    %c0_26 = arith.constant 0 : index
    %c0_27 = arith.constant 0 : index
    %28 = vector.load %arg7[%c0_25, %c0_26, %c0_27] : memref<2x1x32xf32, #tpu.memory_space<vmem>>, vector<1x1x32xf32>
    %29 = vector.shape_cast %28 : vector<1x1x32xf32> to vector<1x32xf32>
    %30 = vector.broadcast %29 : vector<1x32xf32> to vector<8x32xf32>
    %31 = arith.addf %27, %30 : vector<8x32xf32>
    %c0_28 = arith.constant 0 : index
    %c0_29 = arith.constant 0 : index
    %c0_30 = arith.constant 0 : index
    %32 = vector.load %arg8[%c0_28, %c0_29, %c0_30] : memref<2x32x32xf32, #tpu.memory_space<vmem>>, vector<1x32x32xf32>
    %33 = vector.shape_cast %32 : vector<1x32x32xf32> to vector<32x32xf32>
    %cst_31 = arith.constant dense<0.000000e+00> : vector<8x32xf32>
    %34 = tpu.matmul %6, %33, %cst_31 {dimension_numbers = #tpu.dot_dimension_numbers<[1], [0], [0], [1], [0, 0, 1, 1], [], []>} : vector<8x32xf32>, vector<32x32xf32>, vector<8x32xf32> -> vector<8x32xf32>
    %c0_32 = arith.constant 0 : index
    %c0_33 = arith.constant 0 : index
    %c0_34 = arith.constant 0 : index
    %35 = vector.load %arg9[%c0_32, %c0_33, %c0_34] : memref<2x1x32xf32, #tpu.memory_space<vmem>>, vector<1x1x32xf32>
    %36 = vector.shape_cast %35 : vector<1x1x32xf32> to vector<1x32xf32>
    %37 = vector.broadcast %36 : vector<1x32xf32> to vector<8x32xf32>
    %38 = arith.addf %34, %37 : vector<8x32xf32>
    %c0_35 = arith.constant 0 : index
    %c0_36 = arith.constant 0 : index
    %c0_37 = arith.constant 0 : index
    %39 = vector.load %arg10[%c0_35, %c0_36, %c0_37] : memref<2x32x32xf32, #tpu.memory_space<vmem>>, vector<1x32x32xf32>
    %40 = vector.shape_cast %39 : vector<1x32x32xf32> to vector<32x32xf32>
    %41 = vector.extract_strided_slice %24 {offsets = [0, 0], sizes = [8, 8], strides = [1, 1]} : vector<8x32xf32> to vector<8x8xf32>
    %42 = vector.extract_strided_slice %31 {offsets = [0, 0], sizes = [8, 8], strides = [1, 1]} : vector<8x32xf32> to vector<8x8xf32>
    %43 = vector.extract_strided_slice %38 {offsets = [0, 0], sizes = [8, 8], strides = [1, 1]} : vector<8x32xf32> to vector<8x8xf32>
    %cst_38 = arith.constant dense<0.000000e+00> : vector<8x8xf32>
    %44 = tpu.matmul %41, %42, %cst_38 {dimension_numbers = #tpu.dot_dimension_numbers<[1], [1], [0], [0], [0, 0, 1, 0], [], []>} : vector<8x8xf32>, vector<8x8xf32>, vector<8x8xf32> -> vector<8x8xf32>
    %cst_39 = arith.constant 0.353553385 : f32
    %45 = vector.broadcast %cst_39 : f32 to vector<8x8xf32>
    %46 = arith.mulf %44, %45 : vector<8x8xf32>
    %47 = vector.broadcast %17 : vector<1x8xf32> to vector<8x8xf32>
    %48 = arith.addf %46, %47 : vector<8x8xf32>
    %cst_40 = arith.constant dense<0xFF800000> : vector<8xf32>
    %49 = vector.multi_reduction <maximumf>, %48, %cst_40 [1] : vector<8x8xf32> to vector<8xf32>
    %50 = vector.shape_cast %49 : vector<8xf32> to vector<8x1xf32>
    %51 = vector.broadcast %50 : vector<8x1xf32> to vector<8x8xf32>
    %52 = arith.subf %48, %51 : vector<8x8xf32>
    %53 = math.exp %52 : vector<8x8xf32>
    %cst_41 = arith.constant dense<0.000000e+00> : vector<8xf32>
    %54 = vector.multi_reduction <add>, %53, %cst_41 [1] : vector<8x8xf32> to vector<8xf32>
    %55 = vector.shape_cast %54 : vector<8xf32> to vector<8x1xf32>
    %56 = tpu.reciprocal %55 {approx = true} : vector<8x1xf32> -> vector<8x1xf32>
    %57 = vector.broadcast %56 : vector<8x1xf32> to vector<8x8xf32>
    %58 = arith.mulf %53, %57 : vector<8x8xf32>
    %cst_42 = arith.constant dense<0.000000e+00> : vector<8x8xf32>
    %59 = tpu.matmul %58, %43, %cst_42 {dimension_numbers = #tpu.dot_dimension_numbers<[1], [0], [0], [1], [0, 0, 1, 1], [], []>} : vector<8x8xf32>, vector<8x8xf32>, vector<8x8xf32> -> vector<8x8xf32>
    %60 = vector.extract_strided_slice %40 {offsets = [0, 0], sizes = [8, 32], strides = [1, 1]} : vector<32x32xf32> to vector<8x32xf32>
    %cst_43 = arith.constant dense<0.000000e+00> : vector<8x32xf32>
    %61 = tpu.matmul %59, %60, %cst_43 {dimension_numbers = #tpu.dot_dimension_numbers<[1], [0], [0], [1], [0, 0, 1, 1], [], []>} : vector<8x8xf32>, vector<8x32xf32>, vector<8x32xf32> -> vector<8x32xf32>
    %62 = vector.extract_strided_slice %24 {offsets = [0, 8], sizes = [8, 8], strides = [1, 1]} : vector<8x32xf32> to vector<8x8xf32>
    %63 = vector.extract_strided_slice %31 {offsets = [0, 8], sizes = [8, 8], strides = [1, 1]} : vector<8x32xf32> to vector<8x8xf32>
    %64 = vector.extract_strided_slice %38 {offsets = [0, 8], sizes = [8, 8], strides = [1, 1]} : vector<8x32xf32> to vector<8x8xf32>
    %cst_44 = arith.constant dense<0.000000e+00> : vector<8x8xf32>
    %65 = tpu.matmul %62, %63, %cst_44 {dimension_numbers = #tpu.dot_dimension_numbers<[1], [1], [0], [0], [0, 0, 1, 0], [], []>} : vector<8x8xf32>, vector<8x8xf32>, vector<8x8xf32> -> vector<8x8xf32>
    %cst_45 = arith.constant 0.353553385 : f32
    %66 = vector.broadcast %cst_45 : f32 to vector<8x8xf32>
    %67 = arith.mulf %65, %66 : vector<8x8xf32>
    %68 = vector.broadcast %17 : vector<1x8xf32> to vector<8x8xf32>
    %69 = arith.addf %67, %68 : vector<8x8xf32>
    %cst_46 = arith.constant dense<0xFF800000> : vector<8xf32>
    %70 = vector.multi_reduction <maximumf>, %69, %cst_46 [1] : vector<8x8xf32> to vector<8xf32>
    %71 = vector.shape_cast %70 : vector<8xf32> to vector<8x1xf32>
    %72 = vector.broadcast %71 : vector<8x1xf32> to vector<8x8xf32>
    %73 = arith.subf %69, %72 : vector<8x8xf32>
    %74 = math.exp %73 : vector<8x8xf32>
    %cst_47 = arith.constant dense<0.000000e+00> : vector<8xf32>
    %75 = vector.multi_reduction <add>, %74, %cst_47 [1] : vector<8x8xf32> to vector<8xf32>
    %76 = vector.shape_cast %75 : vector<8xf32> to vector<8x1xf32>
    %77 = tpu.reciprocal %76 {approx = true} : vector<8x1xf32> -> vector<8x1xf32>
    %78 = vector.broadcast %77 : vector<8x1xf32> to vector<8x8xf32>
    %79 = arith.mulf %74, %78 : vector<8x8xf32>
    %cst_48 = arith.constant dense<0.000000e+00> : vector<8x8xf32>
    %80 = tpu.matmul %79, %64, %cst_48 {dimension_numbers = #tpu.dot_dimension_numbers<[1], [0], [0], [1], [0, 0, 1, 1], [], []>} : vector<8x8xf32>, vector<8x8xf32>, vector<8x8xf32> -> vector<8x8xf32>
    %81 = vector.extract_strided_slice %40 {offsets = [8, 0], sizes = [8, 32], strides = [1, 1]} : vector<32x32xf32> to vector<8x32xf32>
    %cst_49 = arith.constant dense<0.000000e+00> : vector<8x32xf32>
    %82 = tpu.matmul %80, %81, %cst_49 {dimension_numbers = #tpu.dot_dimension_numbers<[1], [0], [0], [1], [0, 0, 1, 1], [], []>} : vector<8x8xf32>, vector<8x32xf32>, vector<8x32xf32> -> vector<8x32xf32>
    %83 = arith.addf %61, %82 : vector<8x32xf32>
    %84 = vector.extract_strided_slice %24 {offsets = [0, 16], sizes = [8, 8], strides = [1, 1]} : vector<8x32xf32> to vector<8x8xf32>
    %85 = vector.extract_strided_slice %31 {offsets = [0, 16], sizes = [8, 8], strides = [1, 1]} : vector<8x32xf32> to vector<8x8xf32>
    %86 = vector.extract_strided_slice %38 {offsets = [0, 16], sizes = [8, 8], strides = [1, 1]} : vector<8x32xf32> to vector<8x8xf32>
    %cst_50 = arith.constant dense<0.000000e+00> : vector<8x8xf32>
    %87 = tpu.matmul %84, %85, %cst_50 {dimension_numbers = #tpu.dot_dimension_numbers<[1], [1], [0], [0], [0, 0, 1, 0], [], []>} : vector<8x8xf32>, vector<8x8xf32>, vector<8x8xf32> -> vector<8x8xf32>
    %cst_51 = arith.constant 0.353553385 : f32
    %88 = vector.broadcast %cst_51 : f32 to vector<8x8xf32>
    %89 = arith.mulf %87, %88 : vector<8x8xf32>
    %90 = vector.broadcast %17 : vector<1x8xf32> to vector<8x8xf32>
    %91 = arith.addf %89, %90 : vector<8x8xf32>
    %cst_52 = arith.constant dense<0xFF800000> : vector<8xf32>
    %92 = vector.multi_reduction <maximumf>, %91, %cst_52 [1] : vector<8x8xf32> to vector<8xf32>
    %93 = vector.shape_cast %92 : vector<8xf32> to vector<8x1xf32>
    %94 = vector.broadcast %93 : vector<8x1xf32> to vector<8x8xf32>
    %95 = arith.subf %91, %94 : vector<8x8xf32>
    %96 = math.exp %95 : vector<8x8xf32>
    %cst_53 = arith.constant dense<0.000000e+00> : vector<8xf32>
    %97 = vector.multi_reduction <add>, %96, %cst_53 [1] : vector<8x8xf32> to vector<8xf32>
    %98 = vector.shape_cast %97 : vector<8xf32> to vector<8x1xf32>
    %99 = tpu.reciprocal %98 {approx = true} : vector<8x1xf32> -> vector<8x1xf32>
    %100 = vector.broadcast %99 : vector<8x1xf32> to vector<8x8xf32>
    %101 = arith.mulf %96, %100 : vector<8x8xf32>
    %cst_54 = arith.constant dense<0.000000e+00> : vector<8x8xf32>
    %102 = tpu.matmul %101, %86, %cst_54 {dimension_numbers = #tpu.dot_dimension_numbers<[1], [0], [0], [1], [0, 0, 1, 1], [], []>} : vector<8x8xf32>, vector<8x8xf32>, vector<8x8xf32> -> vector<8x8xf32>
    %103 = vector.extract_strided_slice %40 {offsets = [16, 0], sizes = [8, 32], strides = [1, 1]} : vector<32x32xf32> to vector<8x32xf32>
    %cst_55 = arith.constant dense<0.000000e+00> : vector<8x32xf32>
    %104 = tpu.matmul %102, %103, %cst_55 {dimension_numbers = #tpu.dot_dimension_numbers<[1], [0], [0], [1], [0, 0, 1, 1], [], []>} : vector<8x8xf32>, vector<8x32xf32>, vector<8x32xf32> -> vector<8x32xf32>
    %105 = arith.addf %83, %104 : vector<8x32xf32>
    %106 = vector.extract_strided_slice %24 {offsets = [0, 24], sizes = [8, 8], strides = [1, 1]} : vector<8x32xf32> to vector<8x8xf32>
    %107 = vector.extract_strided_slice %31 {offsets = [0, 24], sizes = [8, 8], strides = [1, 1]} : vector<8x32xf32> to vector<8x8xf32>
    %108 = vector.extract_strided_slice %38 {offsets = [0, 24], sizes = [8, 8], strides = [1, 1]} : vector<8x32xf32> to vector<8x8xf32>
    %cst_56 = arith.constant dense<0.000000e+00> : vector<8x8xf32>
    %109 = tpu.matmul %106, %107, %cst_56 {dimension_numbers = #tpu.dot_dimension_numbers<[1], [1], [0], [0], [0, 0, 1, 0], [], []>} : vector<8x8xf32>, vector<8x8xf32>, vector<8x8xf32> -> vector<8x8xf32>
    %cst_57 = arith.constant 0.353553385 : f32
    %110 = vector.broadcast %cst_57 : f32 to vector<8x8xf32>
    %111 = arith.mulf %109, %110 : vector<8x8xf32>
    %112 = vector.broadcast %17 : vector<1x8xf32> to vector<8x8xf32>
    %113 = arith.addf %111, %112 : vector<8x8xf32>
    %cst_58 = arith.constant dense<0xFF800000> : vector<8xf32>
    %114 = vector.multi_reduction <maximumf>, %113, %cst_58 [1] : vector<8x8xf32> to vector<8xf32>
    %115 = vector.shape_cast %114 : vector<8xf32> to vector<8x1xf32>
    %116 = vector.broadcast %115 : vector<8x1xf32> to vector<8x8xf32>
    %117 = arith.subf %113, %116 : vector<8x8xf32>
    %118 = math.exp %117 : vector<8x8xf32>
    %cst_59 = arith.constant dense<0.000000e+00> : vector<8xf32>
    %119 = vector.multi_reduction <add>, %118, %cst_59 [1] : vector<8x8xf32> to vector<8xf32>
    %120 = vector.shape_cast %119 : vector<8xf32> to vector<8x1xf32>
    %121 = tpu.reciprocal %120 {approx = true} : vector<8x1xf32> -> vector<8x1xf32>
    %122 = vector.broadcast %121 : vector<8x1xf32> to vector<8x8xf32>
    %123 = arith.mulf %118, %122 : vector<8x8xf32>
    %cst_60 = arith.constant dense<0.000000e+00> : vector<8x8xf32>
    %124 = tpu.matmul %123, %108, %cst_60 {dimension_numbers = #tpu.dot_dimension_numbers<[1], [0], [0], [1], [0, 0, 1, 1], [], []>} : vector<8x8xf32>, vector<8x8xf32>, vector<8x8xf32> -> vector<8x8xf32>
    %125 = vector.extract_strided_slice %40 {offsets = [24, 0], sizes = [8, 32], strides = [1, 1]} : vector<32x32xf32> to vector<8x32xf32>
    %cst_61 = arith.constant dense<0.000000e+00> : vector<8x32xf32>
    %126 = tpu.matmul %124, %125, %cst_61 {dimension_numbers = #tpu.dot_dimension_numbers<[1], [0], [0], [1], [0, 0, 1, 1], [], []>} : vector<8x8xf32>, vector<8x32xf32>, vector<8x32xf32> -> vector<8x32xf32>
    %127 = arith.addf %105, %126 : vector<8x32xf32>
    %c0_62 = arith.constant 0 : index
    %c0_63 = arith.constant 0 : index
    %c0_64 = arith.constant 0 : index
    %128 = vector.load %arg11[%c0_62, %c0_63, %c0_64] : memref<2x1x32xf32, #tpu.memory_space<vmem>>, vector<1x1x32xf32>
    %129 = vector.shape_cast %128 : vector<1x1x32xf32> to vector<1x32xf32>
    %130 = vector.broadcast %129 : vector<1x32xf32> to vector<8x32xf32>
    %131 = arith.addf %127, %130 : vector<8x32xf32>
    %132 = arith.addf %131, %6 : vector<8x32xf32>
    %c0_65 = arith.constant 0 : index
    %c0_66 = arith.constant 0 : index
    %c0_67 = arith.constant 0 : index
    %133 = vector.load %arg16[%c0_65, %c0_66, %c0_67] : memref<2x1x32xf32, #tpu.memory_space<vmem>>, vector<1x1x32xf32>
    %134 = vector.shape_cast %133 : vector<1x1x32xf32> to vector<1x32xf32>
    %c0_68 = arith.constant 0 : index
    %c0_69 = arith.constant 0 : index
    %c0_70 = arith.constant 0 : index
    %135 = vector.load %arg17[%c0_68, %c0_69, %c0_70] : memref<2x1x32xf32, #tpu.memory_space<vmem>>, vector<1x1x32xf32>
    %136 = vector.shape_cast %135 : vector<1x1x32xf32> to vector<1x32xf32>
    %cst_71 = arith.constant dense<0.000000e+00> : vector<8xf32>
    %137 = vector.multi_reduction <add>, %132, %cst_71 [1] : vector<8x32xf32> to vector<8xf32>
    %138 = vector.shape_cast %137 : vector<8xf32> to vector<8x1xf32>
    %cst_72 = arith.constant 3.200000e+01 : f32
    %139 = vector.broadcast %cst_72 : f32 to vector<8x1xf32>
    %140 = arith.divf %138, %139 : vector<8x1xf32>
    %141 = vector.broadcast %140 : vector<8x1xf32> to vector<8x32xf32>
    %142 = arith.subf %132, %141 : vector<8x32xf32>
    %143 = arith.mulf %142, %142 : vector<8x32xf32>
    %cst_73 = arith.constant dense<0.000000e+00> : vector<8xf32>
    %144 = vector.multi_reduction <add>, %143, %cst_73 [1] : vector<8x32xf32> to vector<8xf32>
    %145 = vector.shape_cast %144 : vector<8xf32> to vector<8x1xf32>
    %cst_74 = arith.constant 3.200000e+01 : f32
    %146 = vector.broadcast %cst_74 : f32 to vector<8x1xf32>
    %147 = arith.divf %145, %146 : vector<8x1xf32>
    %cst_75 = arith.constant 9.99999974E-6 : f32
    %148 = vector.broadcast %cst_75 : f32 to vector<8x1xf32>
    %149 = arith.addf %147, %148 : vector<8x1xf32>
    %150 = math.rsqrt %149 : vector<8x1xf32>
    %151 = vector.broadcast %150 : vector<8x1xf32> to vector<8x32xf32>
    %152 = arith.mulf %142, %151 : vector<8x32xf32>
    %153 = vector.broadcast %134 : vector<1x32xf32> to vector<8x32xf32>
    %154 = arith.mulf %152, %153 : vector<8x32xf32>
    %155 = vector.broadcast %136 : vector<1x32xf32> to vector<8x32xf32>
    %156 = arith.addf %154, %155 : vector<8x32xf32>
    %c0_76 = arith.constant 0 : index
    %c0_77 = arith.constant 0 : index
    %c0_78 = arith.constant 0 : index
    %157 = vector.load %arg12[%c0_76, %c0_77, %c0_78] : memref<2x32x64xf32, #tpu.memory_space<vmem>>, vector<1x32x64xf32>
    %158 = vector.shape_cast %157 : vector<1x32x64xf32> to vector<32x64xf32>
    %cst_79 = arith.constant dense<0.000000e+00> : vector<8x64xf32>
    %159 = tpu.matmul %156, %158, %cst_79 {dimension_numbers = #tpu.dot_dimension_numbers<[1], [0], [0], [1], [0, 0, 1, 1], [], []>} : vector<8x32xf32>, vector<32x64xf32>, vector<8x64xf32> -> vector<8x64xf32>
    %c0_80 = arith.constant 0 : index
    %c0_81 = arith.constant 0 : index
    %c0_82 = arith.constant 0 : index
    %160 = vector.load %arg13[%c0_80, %c0_81, %c0_82] : memref<2x1x64xf32, #tpu.memory_space<vmem>>, vector<1x1x64xf32>
    %161 = vector.shape_cast %160 : vector<1x1x64xf32> to vector<1x64xf32>
    %162 = vector.broadcast %161 : vector<1x64xf32> to vector<8x64xf32>
    %163 = arith.addf %159, %162 : vector<8x64xf32>
    %cst_83 = arith.constant 0.000000e+00 : f32
    %164 = vector.broadcast %cst_83 : f32 to vector<8x64xf32>
    %165 = arith.maximumf %163, %164 : vector<8x64xf32>
    %c0_84 = arith.constant 0 : index
    %c0_85 = arith.constant 0 : index
    %c0_86 = arith.constant 0 : index
    %166 = vector.load %arg14[%c0_84, %c0_85, %c0_86] : memref<2x64x32xf32, #tpu.memory_space<vmem>>, vector<1x64x32xf32>
    %167 = vector.shape_cast %166 : vector<1x64x32xf32> to vector<64x32xf32>
    %cst_87 = arith.constant dense<0.000000e+00> : vector<8x32xf32>
    %168 = tpu.matmul %165, %167, %cst_87 {dimension_numbers = #tpu.dot_dimension_numbers<[1], [0], [0], [1], [0, 0, 1, 1], [], []>} : vector<8x64xf32>, vector<64x32xf32>, vector<8x32xf32> -> vector<8x32xf32>
    %c0_88 = arith.constant 0 : index
    %c0_89 = arith.constant 0 : index
    %c0_90 = arith.constant 0 : index
    %169 = vector.load %arg15[%c0_88, %c0_89, %c0_90] : memref<2x1x32xf32, #tpu.memory_space<vmem>>, vector<1x1x32xf32>
    %170 = vector.shape_cast %169 : vector<1x1x32xf32> to vector<1x32xf32>
    %171 = vector.broadcast %170 : vector<1x32xf32> to vector<8x32xf32>
    %172 = arith.addf %168, %171 : vector<8x32xf32>
    %173 = arith.addf %172, %156 : vector<8x32xf32>
    %c0_91 = arith.constant 0 : index
    %c0_92 = arith.constant 0 : index
    %c0_93 = arith.constant 0 : index
    %174 = vector.load %arg18[%c0_91, %c0_92, %c0_93] : memref<2x1x32xf32, #tpu.memory_space<vmem>>, vector<1x1x32xf32>
    %175 = vector.shape_cast %174 : vector<1x1x32xf32> to vector<1x32xf32>
    %c0_94 = arith.constant 0 : index
    %c0_95 = arith.constant 0 : index
    %c0_96 = arith.constant 0 : index
    %176 = vector.load %arg19[%c0_94, %c0_95, %c0_96] : memref<2x1x32xf32, #tpu.memory_space<vmem>>, vector<1x1x32xf32>
    %177 = vector.shape_cast %176 : vector<1x1x32xf32> to vector<1x32xf32>
    %cst_97 = arith.constant dense<0.000000e+00> : vector<8xf32>
    %178 = vector.multi_reduction <add>, %173, %cst_97 [1] : vector<8x32xf32> to vector<8xf32>
    %179 = vector.shape_cast %178 : vector<8xf32> to vector<8x1xf32>
    %cst_98 = arith.constant 3.200000e+01 : f32
    %180 = vector.broadcast %cst_98 : f32 to vector<8x1xf32>
    %181 = arith.divf %179, %180 : vector<8x1xf32>
    %182 = vector.broadcast %181 : vector<8x1xf32> to vector<8x32xf32>
    %183 = arith.subf %173, %182 : vector<8x32xf32>
    %184 = arith.mulf %183, %183 : vector<8x32xf32>
    %cst_99 = arith.constant dense<0.000000e+00> : vector<8xf32>
    %185 = vector.multi_reduction <add>, %184, %cst_99 [1] : vector<8x32xf32> to vector<8xf32>
    %186 = vector.shape_cast %185 : vector<8xf32> to vector<8x1xf32>
    %cst_100 = arith.constant 3.200000e+01 : f32
    %187 = vector.broadcast %cst_100 : f32 to vector<8x1xf32>
    %188 = arith.divf %186, %187 : vector<8x1xf32>
    %cst_101 = arith.constant 9.99999974E-6 : f32
    %189 = vector.broadcast %cst_101 : f32 to vector<8x1xf32>
    %190 = arith.addf %188, %189 : vector<8x1xf32>
    %191 = math.rsqrt %190 : vector<8x1xf32>
    %192 = vector.broadcast %191 : vector<8x1xf32> to vector<8x32xf32>
    %193 = arith.mulf %183, %192 : vector<8x32xf32>
    %194 = vector.broadcast %175 : vector<1x32xf32> to vector<8x32xf32>
    %195 = arith.mulf %193, %194 : vector<8x32xf32>
    %196 = vector.broadcast %177 : vector<1x32xf32> to vector<8x32xf32>
    %197 = arith.addf %195, %196 : vector<8x32xf32>
    %c1 = arith.constant 1 : index
    %c0_102 = arith.constant 0 : index
    %c0_103 = arith.constant 0 : index
    %198 = vector.load %arg4[%c1, %c0_102, %c0_103] : memref<2x32x32xf32, #tpu.memory_space<vmem>>, vector<1x32x32xf32>
    %199 = vector.shape_cast %198 : vector<1x32x32xf32> to vector<32x32xf32>
    %cst_104 = arith.constant dense<0.000000e+00> : vector<8x32xf32>
    %200 = tpu.matmul %197, %199, %cst_104 {dimension_numbers = #tpu.dot_dimension_numbers<[1], [0], [0], [1], [0, 0, 1, 1], [], []>} : vector<8x32xf32>, vector<32x32xf32>, vector<8x32xf32> -> vector<8x32xf32>
    %c1_105 = arith.constant 1 : index
    %c0_106 = arith.constant 0 : index
    %c0_107 = arith.constant 0 : index
    %201 = vector.load %arg5[%c1_105, %c0_106, %c0_107] : memref<2x1x32xf32, #tpu.memory_space<vmem>>, vector<1x1x32xf32>
    %202 = vector.shape_cast %201 : vector<1x1x32xf32> to vector<1x32xf32>
    %203 = vector.broadcast %202 : vector<1x32xf32> to vector<8x32xf32>
    %204 = arith.addf %200, %203 : vector<8x32xf32>
    %c1_108 = arith.constant 1 : index
    %c0_109 = arith.constant 0 : index
    %c0_110 = arith.constant 0 : index
    %205 = vector.load %arg6[%c1_108, %c0_109, %c0_110] : memref<2x32x32xf32, #tpu.memory_space<vmem>>, vector<1x32x32xf32>
    %206 = vector.shape_cast %205 : vector<1x32x32xf32> to vector<32x32xf32>
    %cst_111 = arith.constant dense<0.000000e+00> : vector<8x32xf32>
    %207 = tpu.matmul %197, %206, %cst_111 {dimension_numbers = #tpu.dot_dimension_numbers<[1], [0], [0], [1], [0, 0, 1, 1], [], []>} : vector<8x32xf32>, vector<32x32xf32>, vector<8x32xf32> -> vector<8x32xf32>
    %c1_112 = arith.constant 1 : index
    %c0_113 = arith.constant 0 : index
    %c0_114 = arith.constant 0 : index
    %208 = vector.load %arg7[%c1_112, %c0_113, %c0_114] : memref<2x1x32xf32, #tpu.memory_space<vmem>>, vector<1x1x32xf32>
    %209 = vector.shape_cast %208 : vector<1x1x32xf32> to vector<1x32xf32>
    %210 = vector.broadcast %209 : vector<1x32xf32> to vector<8x32xf32>
    %211 = arith.addf %207, %210 : vector<8x32xf32>
    %c1_115 = arith.constant 1 : index
    %c0_116 = arith.constant 0 : index
    %c0_117 = arith.constant 0 : index
    %212 = vector.load %arg8[%c1_115, %c0_116, %c0_117] : memref<2x32x32xf32, #tpu.memory_space<vmem>>, vector<1x32x32xf32>
    %213 = vector.shape_cast %212 : vector<1x32x32xf32> to vector<32x32xf32>
    %cst_118 = arith.constant dense<0.000000e+00> : vector<8x32xf32>
    %214 = tpu.matmul %197, %213, %cst_118 {dimension_numbers = #tpu.dot_dimension_numbers<[1], [0], [0], [1], [0, 0, 1, 1], [], []>} : vector<8x32xf32>, vector<32x32xf32>, vector<8x32xf32> -> vector<8x32xf32>
    %c1_119 = arith.constant 1 : index
    %c0_120 = arith.constant 0 : index
    %c0_121 = arith.constant 0 : index
    %215 = vector.load %arg9[%c1_119, %c0_120, %c0_121] : memref<2x1x32xf32, #tpu.memory_space<vmem>>, vector<1x1x32xf32>
    %216 = vector.shape_cast %215 : vector<1x1x32xf32> to vector<1x32xf32>
    %217 = vector.broadcast %216 : vector<1x32xf32> to vector<8x32xf32>
    %218 = arith.addf %214, %217 : vector<8x32xf32>
    %c1_122 = arith.constant 1 : index
    %c0_123 = arith.constant 0 : index
    %c0_124 = arith.constant 0 : index
    %219 = vector.load %arg10[%c1_122, %c0_123, %c0_124] : memref<2x32x32xf32, #tpu.memory_space<vmem>>, vector<1x32x32xf32>
    %220 = vector.shape_cast %219 : vector<1x32x32xf32> to vector<32x32xf32>
    %221 = vector.extract_strided_slice %204 {offsets = [0, 0], sizes = [8, 8], strides = [1, 1]} : vector<8x32xf32> to vector<8x8xf32>
    %222 = vector.extract_strided_slice %211 {offsets = [0, 0], sizes = [8, 8], strides = [1, 1]} : vector<8x32xf32> to vector<8x8xf32>
    %223 = vector.extract_strided_slice %218 {offsets = [0, 0], sizes = [8, 8], strides = [1, 1]} : vector<8x32xf32> to vector<8x8xf32>
    %cst_125 = arith.constant dense<0.000000e+00> : vector<8x8xf32>
    %224 = tpu.matmul %221, %222, %cst_125 {dimension_numbers = #tpu.dot_dimension_numbers<[1], [1], [0], [0], [0, 0, 1, 0], [], []>} : vector<8x8xf32>, vector<8x8xf32>, vector<8x8xf32> -> vector<8x8xf32>
    %cst_126 = arith.constant 0.353553385 : f32
    %225 = vector.broadcast %cst_126 : f32 to vector<8x8xf32>
    %226 = arith.mulf %224, %225 : vector<8x8xf32>
    %227 = vector.broadcast %17 : vector<1x8xf32> to vector<8x8xf32>
    %228 = arith.addf %226, %227 : vector<8x8xf32>
    %cst_127 = arith.constant dense<0xFF800000> : vector<8xf32>
    %229 = vector.multi_reduction <maximumf>, %228, %cst_127 [1] : vector<8x8xf32> to vector<8xf32>
    %230 = vector.shape_cast %229 : vector<8xf32> to vector<8x1xf32>
    %231 = vector.broadcast %230 : vector<8x1xf32> to vector<8x8xf32>
    %232 = arith.subf %228, %231 : vector<8x8xf32>
    %233 = math.exp %232 : vector<8x8xf32>
    %cst_128 = arith.constant dense<0.000000e+00> : vector<8xf32>
    %234 = vector.multi_reduction <add>, %233, %cst_128 [1] : vector<8x8xf32> to vector<8xf32>
    %235 = vector.shape_cast %234 : vector<8xf32> to vector<8x1xf32>
    %236 = tpu.reciprocal %235 {approx = true} : vector<8x1xf32> -> vector<8x1xf32>
    %237 = vector.broadcast %236 : vector<8x1xf32> to vector<8x8xf32>
    %238 = arith.mulf %233, %237 : vector<8x8xf32>
    %cst_129 = arith.constant dense<0.000000e+00> : vector<8x8xf32>
    %239 = tpu.matmul %238, %223, %cst_129 {dimension_numbers = #tpu.dot_dimension_numbers<[1], [0], [0], [1], [0, 0, 1, 1], [], []>} : vector<8x8xf32>, vector<8x8xf32>, vector<8x8xf32> -> vector<8x8xf32>
    %240 = vector.extract_strided_slice %220 {offsets = [0, 0], sizes = [8, 32], strides = [1, 1]} : vector<32x32xf32> to vector<8x32xf32>
    %cst_130 = arith.constant dense<0.000000e+00> : vector<8x32xf32>
    %241 = tpu.matmul %239, %240, %cst_130 {dimension_numbers = #tpu.dot_dimension_numbers<[1], [0], [0], [1], [0, 0, 1, 1], [], []>} : vector<8x8xf32>, vector<8x32xf32>, vector<8x32xf32> -> vector<8x32xf32>
    %242 = vector.extract_strided_slice %204 {offsets = [0, 8], sizes = [8, 8], strides = [1, 1]} : vector<8x32xf32> to vector<8x8xf32>
    %243 = vector.extract_strided_slice %211 {offsets = [0, 8], sizes = [8, 8], strides = [1, 1]} : vector<8x32xf32> to vector<8x8xf32>
    %244 = vector.extract_strided_slice %218 {offsets = [0, 8], sizes = [8, 8], strides = [1, 1]} : vector<8x32xf32> to vector<8x8xf32>
    %cst_131 = arith.constant dense<0.000000e+00> : vector<8x8xf32>
    %245 = tpu.matmul %242, %243, %cst_131 {dimension_numbers = #tpu.dot_dimension_numbers<[1], [1], [0], [0], [0, 0, 1, 0], [], []>} : vector<8x8xf32>, vector<8x8xf32>, vector<8x8xf32> -> vector<8x8xf32>
    %cst_132 = arith.constant 0.353553385 : f32
    %246 = vector.broadcast %cst_132 : f32 to vector<8x8xf32>
    %247 = arith.mulf %245, %246 : vector<8x8xf32>
    %248 = vector.broadcast %17 : vector<1x8xf32> to vector<8x8xf32>
    %249 = arith.addf %247, %248 : vector<8x8xf32>
    %cst_133 = arith.constant dense<0xFF800000> : vector<8xf32>
    %250 = vector.multi_reduction <maximumf>, %249, %cst_133 [1] : vector<8x8xf32> to vector<8xf32>
    %251 = vector.shape_cast %250 : vector<8xf32> to vector<8x1xf32>
    %252 = vector.broadcast %251 : vector<8x1xf32> to vector<8x8xf32>
    %253 = arith.subf %249, %252 : vector<8x8xf32>
    %254 = math.exp %253 : vector<8x8xf32>
    %cst_134 = arith.constant dense<0.000000e+00> : vector<8xf32>
    %255 = vector.multi_reduction <add>, %254, %cst_134 [1] : vector<8x8xf32> to vector<8xf32>
    %256 = vector.shape_cast %255 : vector<8xf32> to vector<8x1xf32>
    %257 = tpu.reciprocal %256 {approx = true} : vector<8x1xf32> -> vector<8x1xf32>
    %258 = vector.broadcast %257 : vector<8x1xf32> to vector<8x8xf32>
    %259 = arith.mulf %254, %258 : vector<8x8xf32>
    %cst_135 = arith.constant dense<0.000000e+00> : vector<8x8xf32>
    %260 = tpu.matmul %259, %244, %cst_135 {dimension_numbers = #tpu.dot_dimension_numbers<[1], [0], [0], [1], [0, 0, 1, 1], [], []>} : vector<8x8xf32>, vector<8x8xf32>, vector<8x8xf32> -> vector<8x8xf32>
    %261 = vector.extract_strided_slice %220 {offsets = [8, 0], sizes = [8, 32], strides = [1, 1]} : vector<32x32xf32> to vector<8x32xf32>
    %cst_136 = arith.constant dense<0.000000e+00> : vector<8x32xf32>
    %262 = tpu.matmul %260, %261, %cst_136 {dimension_numbers = #tpu.dot_dimension_numbers<[1], [0], [0], [1], [0, 0, 1, 1], [], []>} : vector<8x8xf32>, vector<8x32xf32>, vector<8x32xf32> -> vector<8x32xf32>
    %263 = arith.addf %241, %262 : vector<8x32xf32>
    %264 = vector.extract_strided_slice %204 {offsets = [0, 16], sizes = [8, 8], strides = [1, 1]} : vector<8x32xf32> to vector<8x8xf32>
    %265 = vector.extract_strided_slice %211 {offsets = [0, 16], sizes = [8, 8], strides = [1, 1]} : vector<8x32xf32> to vector<8x8xf32>
    %266 = vector.extract_strided_slice %218 {offsets = [0, 16], sizes = [8, 8], strides = [1, 1]} : vector<8x32xf32> to vector<8x8xf32>
    %cst_137 = arith.constant dense<0.000000e+00> : vector<8x8xf32>
    %267 = tpu.matmul %264, %265, %cst_137 {dimension_numbers = #tpu.dot_dimension_numbers<[1], [1], [0], [0], [0, 0, 1, 0], [], []>} : vector<8x8xf32>, vector<8x8xf32>, vector<8x8xf32> -> vector<8x8xf32>
    %cst_138 = arith.constant 0.353553385 : f32
    %268 = vector.broadcast %cst_138 : f32 to vector<8x8xf32>
    %269 = arith.mulf %267, %268 : vector<8x8xf32>
    %270 = vector.broadcast %17 : vector<1x8xf32> to vector<8x8xf32>
    %271 = arith.addf %269, %270 : vector<8x8xf32>
    %cst_139 = arith.constant dense<0xFF800000> : vector<8xf32>
    %272 = vector.multi_reduction <maximumf>, %271, %cst_139 [1] : vector<8x8xf32> to vector<8xf32>
    %273 = vector.shape_cast %272 : vector<8xf32> to vector<8x1xf32>
    %274 = vector.broadcast %273 : vector<8x1xf32> to vector<8x8xf32>
    %275 = arith.subf %271, %274 : vector<8x8xf32>
    %276 = math.exp %275 : vector<8x8xf32>
    %cst_140 = arith.constant dense<0.000000e+00> : vector<8xf32>
    %277 = vector.multi_reduction <add>, %276, %cst_140 [1] : vector<8x8xf32> to vector<8xf32>
    %278 = vector.shape_cast %277 : vector<8xf32> to vector<8x1xf32>
    %279 = tpu.reciprocal %278 {approx = true} : vector<8x1xf32> -> vector<8x1xf32>
    %280 = vector.broadcast %279 : vector<8x1xf32> to vector<8x8xf32>
    %281 = arith.mulf %276, %280 : vector<8x8xf32>
    %cst_141 = arith.constant dense<0.000000e+00> : vector<8x8xf32>
    %282 = tpu.matmul %281, %266, %cst_141 {dimension_numbers = #tpu.dot_dimension_numbers<[1], [0], [0], [1], [0, 0, 1, 1], [], []>} : vector<8x8xf32>, vector<8x8xf32>, vector<8x8xf32> -> vector<8x8xf32>
    %283 = vector.extract_strided_slice %220 {offsets = [16, 0], sizes = [8, 32], strides = [1, 1]} : vector<32x32xf32> to vector<8x32xf32>
    %cst_142 = arith.constant dense<0.000000e+00> : vector<8x32xf32>
    %284 = tpu.matmul %282, %283, %cst_142 {dimension_numbers = #tpu.dot_dimension_numbers<[1], [0], [0], [1], [0, 0, 1, 1], [], []>} : vector<8x8xf32>, vector<8x32xf32>, vector<8x32xf32> -> vector<8x32xf32>
    %285 = arith.addf %263, %284 : vector<8x32xf32>
    %286 = vector.extract_strided_slice %204 {offsets = [0, 24], sizes = [8, 8], strides = [1, 1]} : vector<8x32xf32> to vector<8x8xf32>
    %287 = vector.extract_strided_slice %211 {offsets = [0, 24], sizes = [8, 8], strides = [1, 1]} : vector<8x32xf32> to vector<8x8xf32>
    %288 = vector.extract_strided_slice %218 {offsets = [0, 24], sizes = [8, 8], strides = [1, 1]} : vector<8x32xf32> to vector<8x8xf32>
    %cst_143 = arith.constant dense<0.000000e+00> : vector<8x8xf32>
    %289 = tpu.matmul %286, %287, %cst_143 {dimension_numbers = #tpu.dot_dimension_numbers<[1], [1], [0], [0], [0, 0, 1, 0], [], []>} : vector<8x8xf32>, vector<8x8xf32>, vector<8x8xf32> -> vector<8x8xf32>
    %cst_144 = arith.constant 0.353553385 : f32
    %290 = vector.broadcast %cst_144 : f32 to vector<8x8xf32>
    %291 = arith.mulf %289, %290 : vector<8x8xf32>
    %292 = vector.broadcast %17 : vector<1x8xf32> to vector<8x8xf32>
    %293 = arith.addf %291, %292 : vector<8x8xf32>
    %cst_145 = arith.constant dense<0xFF800000> : vector<8xf32>
    %294 = vector.multi_reduction <maximumf>, %293, %cst_145 [1] : vector<8x8xf32> to vector<8xf32>
    %295 = vector.shape_cast %294 : vector<8xf32> to vector<8x1xf32>
    %296 = vector.broadcast %295 : vector<8x1xf32> to vector<8x8xf32>
    %297 = arith.subf %293, %296 : vector<8x8xf32>
    %298 = math.exp %297 : vector<8x8xf32>
    %cst_146 = arith.constant dense<0.000000e+00> : vector<8xf32>
    %299 = vector.multi_reduction <add>, %298, %cst_146 [1] : vector<8x8xf32> to vector<8xf32>
    %300 = vector.shape_cast %299 : vector<8xf32> to vector<8x1xf32>
    %301 = tpu.reciprocal %300 {approx = true} : vector<8x1xf32> -> vector<8x1xf32>
    %302 = vector.broadcast %301 : vector<8x1xf32> to vector<8x8xf32>
    %303 = arith.mulf %298, %302 : vector<8x8xf32>
    %cst_147 = arith.constant dense<0.000000e+00> : vector<8x8xf32>
    %304 = tpu.matmul %303, %288, %cst_147 {dimension_numbers = #tpu.dot_dimension_numbers<[1], [0], [0], [1], [0, 0, 1, 1], [], []>} : vector<8x8xf32>, vector<8x8xf32>, vector<8x8xf32> -> vector<8x8xf32>
    %305 = vector.extract_strided_slice %220 {offsets = [24, 0], sizes = [8, 32], strides = [1, 1]} : vector<32x32xf32> to vector<8x32xf32>
    %cst_148 = arith.constant dense<0.000000e+00> : vector<8x32xf32>
    %306 = tpu.matmul %304, %305, %cst_148 {dimension_numbers = #tpu.dot_dimension_numbers<[1], [0], [0], [1], [0, 0, 1, 1], [], []>} : vector<8x8xf32>, vector<8x32xf32>, vector<8x32xf32> -> vector<8x32xf32>
    %307 = arith.addf %285, %306 : vector<8x32xf32>
    %c1_149 = arith.constant 1 : index
    %c0_150 = arith.constant 0 : index
    %c0_151 = arith.constant 0 : index
    %308 = vector.load %arg11[%c1_149, %c0_150, %c0_151] : memref<2x1x32xf32, #tpu.memory_space<vmem>>, vector<1x1x32xf32>
    %309 = vector.shape_cast %308 : vector<1x1x32xf32> to vector<1x32xf32>
    %310 = vector.broadcast %309 : vector<1x32xf32> to vector<8x32xf32>
    %311 = arith.addf %307, %310 : vector<8x32xf32>
    %312 = arith.addf %311, %197 : vector<8x32xf32>
    %c1_152 = arith.constant 1 : index
    %c0_153 = arith.constant 0 : index
    %c0_154 = arith.constant 0 : index
    %313 = vector.load %arg16[%c1_152, %c0_153, %c0_154] : memref<2x1x32xf32, #tpu.memory_space<vmem>>, vector<1x1x32xf32>
    %314 = vector.shape_cast %313 : vector<1x1x32xf32> to vector<1x32xf32>
    %c1_155 = arith.constant 1 : index
    %c0_156 = arith.constant 0 : index
    %c0_157 = arith.constant 0 : index
    %315 = vector.load %arg17[%c1_155, %c0_156, %c0_157] : memref<2x1x32xf32, #tpu.memory_space<vmem>>, vector<1x1x32xf32>
    %316 = vector.shape_cast %315 : vector<1x1x32xf32> to vector<1x32xf32>
    %cst_158 = arith.constant dense<0.000000e+00> : vector<8xf32>
    %317 = vector.multi_reduction <add>, %312, %cst_158 [1] : vector<8x32xf32> to vector<8xf32>
    %318 = vector.shape_cast %317 : vector<8xf32> to vector<8x1xf32>
    %cst_159 = arith.constant 3.200000e+01 : f32
    %319 = vector.broadcast %cst_159 : f32 to vector<8x1xf32>
    %320 = arith.divf %318, %319 : vector<8x1xf32>
    %321 = vector.broadcast %320 : vector<8x1xf32> to vector<8x32xf32>
    %322 = arith.subf %312, %321 : vector<8x32xf32>
    %323 = arith.mulf %322, %322 : vector<8x32xf32>
    %cst_160 = arith.constant dense<0.000000e+00> : vector<8xf32>
    %324 = vector.multi_reduction <add>, %323, %cst_160 [1] : vector<8x32xf32> to vector<8xf32>
    %325 = vector.shape_cast %324 : vector<8xf32> to vector<8x1xf32>
    %cst_161 = arith.constant 3.200000e+01 : f32
    %326 = vector.broadcast %cst_161 : f32 to vector<8x1xf32>
    %327 = arith.divf %325, %326 : vector<8x1xf32>
    %cst_162 = arith.constant 9.99999974E-6 : f32
    %328 = vector.broadcast %cst_162 : f32 to vector<8x1xf32>
    %329 = arith.addf %327, %328 : vector<8x1xf32>
    %330 = math.rsqrt %329 : vector<8x1xf32>
    %331 = vector.broadcast %330 : vector<8x1xf32> to vector<8x32xf32>
    %332 = arith.mulf %322, %331 : vector<8x32xf32>
    %333 = vector.broadcast %314 : vector<1x32xf32> to vector<8x32xf32>
    %334 = arith.mulf %332, %333 : vector<8x32xf32>
    %335 = vector.broadcast %316 : vector<1x32xf32> to vector<8x32xf32>
    %336 = arith.addf %334, %335 : vector<8x32xf32>
    %c1_163 = arith.constant 1 : index
    %c0_164 = arith.constant 0 : index
    %c0_165 = arith.constant 0 : index
    %337 = vector.load %arg12[%c1_163, %c0_164, %c0_165] : memref<2x32x64xf32, #tpu.memory_space<vmem>>, vector<1x32x64xf32>
    %338 = vector.shape_cast %337 : vector<1x32x64xf32> to vector<32x64xf32>
    %cst_166 = arith.constant dense<0.000000e+00> : vector<8x64xf32>
    %339 = tpu.matmul %336, %338, %cst_166 {dimension_numbers = #tpu.dot_dimension_numbers<[1], [0], [0], [1], [0, 0, 1, 1], [], []>} : vector<8x32xf32>, vector<32x64xf32>, vector<8x64xf32> -> vector<8x64xf32>
    %c1_167 = arith.constant 1 : index
    %c0_168 = arith.constant 0 : index
    %c0_169 = arith.constant 0 : index
    %340 = vector.load %arg13[%c1_167, %c0_168, %c0_169] : memref<2x1x64xf32, #tpu.memory_space<vmem>>, vector<1x1x64xf32>
    %341 = vector.shape_cast %340 : vector<1x1x64xf32> to vector<1x64xf32>
    %342 = vector.broadcast %341 : vector<1x64xf32> to vector<8x64xf32>
    %343 = arith.addf %339, %342 : vector<8x64xf32>
    %cst_170 = arith.constant 0.000000e+00 : f32
    %344 = vector.broadcast %cst_170 : f32 to vector<8x64xf32>
    %345 = arith.maximumf %343, %344 : vector<8x64xf32>
    %c1_171 = arith.constant 1 : index
    %c0_172 = arith.constant 0 : index
    %c0_173 = arith.constant 0 : index
    %346 = vector.load %arg14[%c1_171, %c0_172, %c0_173] : memref<2x64x32xf32, #tpu.memory_space<vmem>>, vector<1x64x32xf32>
    %347 = vector.shape_cast %346 : vector<1x64x32xf32> to vector<64x32xf32>
    %cst_174 = arith.constant dense<0.000000e+00> : vector<8x32xf32>
    %348 = tpu.matmul %345, %347, %cst_174 {dimension_numbers = #tpu.dot_dimension_numbers<[1], [0], [0], [1], [0, 0, 1, 1], [], []>} : vector<8x64xf32>, vector<64x32xf32>, vector<8x32xf32> -> vector<8x32xf32>
    %c1_175 = arith.constant 1 : index
    %c0_176 = arith.constant 0 : index
    %c0_177 = arith.constant 0 : index
    %349 = vector.load %arg15[%c1_175, %c0_176, %c0_177] : memref<2x1x32xf32, #tpu.memory_space<vmem>>, vector<1x1x32xf32>
    %350 = vector.shape_cast %349 : vector<1x1x32xf32> to vector<1x32xf32>
    %351 = vector.broadcast %350 : vector<1x32xf32> to vector<8x32xf32>
    %352 = arith.addf %348, %351 : vector<8x32xf32>
    %353 = arith.addf %352, %336 : vector<8x32xf32>
    %c1_178 = arith.constant 1 : index
    %c0_179 = arith.constant 0 : index
    %c0_180 = arith.constant 0 : index
    %354 = vector.load %arg18[%c1_178, %c0_179, %c0_180] : memref<2x1x32xf32, #tpu.memory_space<vmem>>, vector<1x1x32xf32>
    %355 = vector.shape_cast %354 : vector<1x1x32xf32> to vector<1x32xf32>
    %c1_181 = arith.constant 1 : index
    %c0_182 = arith.constant 0 : index
    %c0_183 = arith.constant 0 : index
    %356 = vector.load %arg19[%c1_181, %c0_182, %c0_183] : memref<2x1x32xf32, #tpu.memory_space<vmem>>, vector<1x1x32xf32>
    %357 = vector.shape_cast %356 : vector<1x1x32xf32> to vector<1x32xf32>
    %cst_184 = arith.constant dense<0.000000e+00> : vector<8xf32>
    %358 = vector.multi_reduction <add>, %353, %cst_184 [1] : vector<8x32xf32> to vector<8xf32>
    %359 = vector.shape_cast %358 : vector<8xf32> to vector<8x1xf32>
    %cst_185 = arith.constant 3.200000e+01 : f32
    %360 = vector.broadcast %cst_185 : f32 to vector<8x1xf32>
    %361 = arith.divf %359, %360 : vector<8x1xf32>
    %362 = vector.broadcast %361 : vector<8x1xf32> to vector<8x32xf32>
    %363 = arith.subf %353, %362 : vector<8x32xf32>
    %364 = arith.mulf %363, %363 : vector<8x32xf32>
    %cst_186 = arith.constant dense<0.000000e+00> : vector<8xf32>
    %365 = vector.multi_reduction <add>, %364, %cst_186 [1] : vector<8x32xf32> to vector<8xf32>
    %366 = vector.shape_cast %365 : vector<8xf32> to vector<8x1xf32>
    %cst_187 = arith.constant 3.200000e+01 : f32
    %367 = vector.broadcast %cst_187 : f32 to vector<8x1xf32>
    %368 = arith.divf %366, %367 : vector<8x1xf32>
    %cst_188 = arith.constant 9.99999974E-6 : f32
    %369 = vector.broadcast %cst_188 : f32 to vector<8x1xf32>
    %370 = arith.addf %368, %369 : vector<8x1xf32>
    %371 = math.rsqrt %370 : vector<8x1xf32>
    %372 = vector.broadcast %371 : vector<8x1xf32> to vector<8x32xf32>
    %373 = arith.mulf %363, %372 : vector<8x32xf32>
    %374 = vector.broadcast %355 : vector<1x32xf32> to vector<8x32xf32>
    %375 = arith.mulf %373, %374 : vector<8x32xf32>
    %376 = vector.broadcast %357 : vector<1x32xf32> to vector<8x32xf32>
    %377 = arith.addf %375, %376 : vector<8x32xf32>
    %c0_189 = arith.constant 0 : index
    %c0_190 = arith.constant 0 : index
    %378 = vector.load %arg20[%c0_189, %c0_190] : memref<32x16xf32, #tpu.memory_space<vmem>>, vector<32x16xf32>
    %cst_191 = arith.constant dense<0.000000e+00> : vector<8x16xf32>
    %379 = tpu.matmul %377, %378, %cst_191 {dimension_numbers = #tpu.dot_dimension_numbers<[1], [0], [0], [1], [0, 0, 1, 1], [], []>} : vector<8x32xf32>, vector<32x16xf32>, vector<8x16xf32> -> vector<8x16xf32>
    %c0_192 = arith.constant 0 : index
    %c0_193 = arith.constant 0 : index
    %380 = vector.load %arg21[%c0_192, %c0_193] : memref<1x16xf32, #tpu.memory_space<vmem>>, vector<1x16xf32>
    %381 = vector.broadcast %380 : vector<1x16xf32> to vector<8x16xf32>
    %382 = arith.addf %379, %381 : vector<8x16xf32>
    %c0_194 = arith.constant 0 : index
    %c0_195 = arith.constant 0 : index
    %c0_196 = arith.constant 0 : index
    %383 = vector.load %arg22[%c0_194, %c0_195, %c0_196] : memref<1x8x16xf32, #tpu.memory_space<vmem>>, vector<1x8x16xf32>
    %384 = vector.shape_cast %383 : vector<1x8x16xf32> to vector<8x16xf32>
    %385 = vector.shape_cast %382 : vector<8x16xf32> to vector<1x8x16xf32>
    tpu.vector_store %arg22[%c0_194, %c0_195, %c0_196], %385 {strides = array<i32>} : memref<1x8x16xf32, #tpu.memory_space<vmem>>, vector<1x8x16xf32>,
    return
  }
  func.func @transform_0(%arg0: i32) -> (i32, i32, i32) {
    %c0_i32 = arith.constant 0 : i32
    %c0_i32_0 = arith.constant 0 : i32
    %c0_i32_1 = arith.constant 0 : i32
    return %arg0, %c0_i32, %c0_i32_0 : i32, i32, i32
  }
  func.func @transform_1(%arg0: i32) -> (i32, i32) {
    %c0_i32 = arith.constant 0 : i32
    %c0_i32_0 = arith.constant 0 : i32
    %c0_i32_1 = arith.constant 0 : i32
    return %c0_i32, %c0_i32_0 : i32, i32
  }
  func.func @transform_2(%arg0: i32) -> (i32, i32) {
    %c0_i32 = arith.constant 0 : i32
    %c0_i32_0 = arith.constant 0 : i32
    %c0_i32_1 = arith.constant 0 : i32
    return %c0_i32, %c0_i32_0 : i32, i32
  }
  func.func @transform_3(%arg0: i32) -> (i32, i32, i32) {
    %c0_i32 = arith.constant 0 : i32
    %c0_i32_0 = arith.constant 0 : i32
    %c0_i32_1 = arith.constant 0 : i32
    %c0_i32_2 = arith.constant 0 : i32
    return %c0_i32, %c0_i32_0, %c0_i32_1 : i32, i32, i32
  }
  func.func @transform_4(%arg0: i32) -> (i32, i32, i32) {
    %c0_i32 = arith.constant 0 : i32
    %c0_i32_0 = arith.constant 0 : i32
    %c0_i32_1 = arith.constant 0 : i32
    %c0_i32_2 = arith.constant 0 : i32
    return %c0_i32, %c0_i32_0, %c0_i32_1 : i32, i32, i32
  }
  func.func @transform_5(%arg0: i32) -> (i32, i32, i32) {
    %c0_i32 = arith.constant 0 : i32
    %c0_i32_0 = arith.constant 0 : i32
    %c0_i32_1 = arith.constant 0 : i32
    %c0_i32_2 = arith.constant 0 : i32
    return %c0_i32, %c0_i32_0, %c0_i32_1 : i32, i32, i32
  }
  func.func @transform_6(%arg0: i32) -> (i32, i32, i32) {
    %c0_i32 = arith.constant 0 : i32
    %c0_i32_0 = arith.constant 0 : i32
    %c0_i32_1 = arith.constant 0 : i32
    %c0_i32_2 = arith.constant 0 : i32
    return %c0_i32, %c0_i32_0, %c0_i32_1 : i32, i32, i32
  }
  func.func @transform_7(%arg0: i32) -> (i32, i32, i32) {
    %c0_i32 = arith.constant 0 : i32
    %c0_i32_0 = arith.constant 0 : i32
    %c0_i32_1 = arith.constant 0 : i32
    %c0_i32_2 = arith.constant 0 : i32
    return %c0_i32, %c0_i32_0, %c0_i32_1 : i32, i32, i32
  }
  func.func @transform_8(%arg0: i32) -> (i32, i32, i32) {
    %c0_i32 = arith.constant 0 : i32
    %c0_i32_0 = arith.constant 0 : i32
    %c0_i32_1 = arith.constant 0 : i32
    %c0_i32_2 = arith.constant 0 : i32
    return %c0_i32, %c0_i32_0, %c0_i32_1 : i32, i32, i32
  }
  func.func @transform_9(%arg0: i32) -> (i32, i32, i32) {
    %c0_i32 = arith.constant 0 : i32
    %c0_i32_0 = arith.constant 0 : i32
    %c0_i32_1 = arith.constant 0 : i32
    %c0_i32_2 = arith.constant 0 : i32
    return %c0_i32, %c0_i32_0, %c0_i32_1 : i32, i32, i32
  }
  func.func @transform_10(%arg0: i32) -> (i32, i32, i32) {
    %c0_i32 = arith.constant 0 : i32
    %c0_i32_0 = arith.constant 0 : i32
    %c0_i32_1 = arith.constant 0 : i32
    %c0_i32_2 = arith.constant 0 : i32
    return %c0_i32, %c0_i32_0, %c0_i32_1 : i32, i32, i32
  }
  func.func @transform_11(%arg0: i32) -> (i32, i32, i32) {
    %c0_i32 = arith.constant 0 : i32
    %c0_i32_0 = arith.constant 0 : i32
    %c0_i32_1 = arith.constant 0 : i32
    %c0_i32_2 = arith.constant 0 : i32
    return %c0_i32, %c0_i32_0, %c0_i32_1 : i32, i32, i32
  }
  func.func @transform_12(%arg0: i32) -> (i32, i32, i32) {
    %c0_i32 = arith.constant 0 : i32
    %c0_i32_0 = arith.constant 0 : i32
    %c0_i32_1 = arith.constant 0 : i32
    %c0_i32_2 = arith.constant 0 : i32
    return %c0_i32, %c0_i32_0, %c0_i32_1 : i32, i32, i32
  }
  func.func @transform_13(%arg0: i32) -> (i32, i32, i32) {
    %c0_i32 = arith.constant 0 : i32
    %c0_i32_0 = arith.constant 0 : i32
    %c0_i32_1 = arith.constant 0 : i32
    %c0_i32_2 = arith.constant 0 : i32
    return %c0_i32, %c0_i32_0, %c0_i32_1 : i32, i32, i32
  }
  func.func @transform_14(%arg0: i32) -> (i32, i32, i32) {
    %c0_i32 = arith.constant 0 : i32
    %c0_i32_0 = arith.constant 0 : i32
    %c0_i32_1 = arith.constant 0 : i32
    %c0_i32_2 = arith.constant 0 : i32
    return %c0_i32, %c0_i32_0, %c0_i32_1 : i32, i32, i32
  }
  func.func @transform_15(%arg0: i32) -> (i32, i32, i32) {
    %c0_i32 = arith.constant 0 : i32
    %c0_i32_0 = arith.constant 0 : i32
    %c0_i32_1 = arith.constant 0 : i32
    %c0_i32_2 = arith.constant 0 : i32
    return %c0_i32, %c0_i32_0, %c0_i32_1 : i32, i32, i32
  }
  func.func @transform_16(%arg0: i32) -> (i32, i32, i32) {
    %c0_i32 = arith.constant 0 : i32
    %c0_i32_0 = arith.constant 0 : i32
    %c0_i32_1 = arith.constant 0 : i32
    %c0_i32_2 = arith.constant 0 : i32
    return %c0_i32, %c0_i32_0, %c0_i32_1 : i32, i32, i32
  }
  func.func @transform_17(%arg0: i32) -> (i32, i32, i32) {
    %c0_i32 = arith.constant 0 : i32
    %c0_i32_0 = arith.constant 0 : i32
    %c0_i32_1 = arith.constant 0 : i32
    %c0_i32_2 = arith.constant 0 : i32
    return %c0_i32, %c0_i32_0, %c0_i32_1 : i32, i32, i32
  }
  func.func @transform_18(%arg0: i32) -> (i32, i32, i32) {
    %c0_i32 = arith.constant 0 : i32
    %c0_i32_0 = arith.constant 0 : i32
    %c0_i32_1 = arith.constant 0 : i32
    %c0_i32_2 = arith.constant 0 : i32
    return %c0_i32, %c0_i32_0, %c0_i32_1 : i32, i32, i32
  }
  func.func @transform_19(%arg0: i32) -> (i32, i32) {
    %c0_i32 = arith.constant 0 : i32
    %c0_i32_0 = arith.constant 0 : i32
    %c0_i32_1 = arith.constant 0 : i32
    return %c0_i32, %c0_i32_0 : i32, i32
  }
  func.func @transform_20(%arg0: i32) -> (i32, i32) {
    %c0_i32 = arith.constant 0 : i32
    %c0_i32_0 = arith.constant 0 : i32
    %c0_i32_1 = arith.constant 0 : i32
    return %c0_i32, %c0_i32_0 : i32, i32
  }
  func.func @transform_21(%arg0: i32) -> (i32, i32, i32) {
    %c0_i32 = arith.constant 0 : i32
    %c0_i32_0 = arith.constant 0 : i32
    %c0_i32_1 = arith.constant 0 : i32
    return %arg0, %c0_i32, %c0_i32_0 : i32, i32, i32
  }
  func.func @transform_22(%arg0: i32) -> (i32, i32, i32) {
    %c0_i32 = arith.constant 0 : i32
    %c0_i32_0 = arith.constant 0 : i32
    %c0_i32_1 = arith.constant 0 : i32
    return %arg0, %c0_i32, %c0_i32_0 : i32, i32, i32
  }
}

</mosaic_0001>

<llo_original>
// kernel: image_encoder_forward.1
$region0: #{image_encoder_forward.1}
  #allocation0 [shape = 'u32[]', space=smem, size = 0x4, offset = 0x4, fixed_abs, tag = 'smem constant byte address 0x4 - core index']
  #allocation1 [shape = 'u32[144,128]{1,0:T(1,128)}', space=vmem, size = 0x12000, scoped, tag = 'internal scratch']
  %s0 = inlined_call_operand.hbm [shape: f32[2,8,64], index: 0, kind: input, shape index: {}]
  %s1 = inlined_call_operand.hbm [shape: f32[64,32], index: 1, kind: input, shape index: {}]
  %s2 = inlined_call_operand.vmem [shape: f32[1,32], index: 2, kind: input, shape index: {}]
  %s3 = inlined_call_operand.hbm [shape: f32[2,32,32], index: 3, kind: input, shape index: {}]
  %s4 = inlined_call_operand.vmem [shape: f32[2,1,32], index: 4, kind: input, shape index: {}]
  %s5 = inlined_call_operand.hbm [shape: f32[2,32,32], index: 5, kind: input, shape index: {}]
  %s6 = inlined_call_operand.vmem [shape: f32[2,1,32], index: 6, kind: input, shape index: {}]
  %s7 = inlined_call_operand.hbm [shape: f32[2,32,32], index: 7, kind: input, shape index: {}]
  %s8 = inlined_call_operand.vmem [shape: f32[2,1,32], index: 8, kind: input, shape index: {}]
  %s9 = inlined_call_operand.hbm [shape: f32[2,32,32], index: 9, kind: input, shape index: {}]
  %s10 = inlined_call_operand.vmem [shape: f32[2,1,32], index: 10, kind: input, shape index: {}]
  %s11 = inlined_call_operand.hbm [shape: f32[2,32,64], index: 11, kind: input, shape index: {}]
  %s12 = inlined_call_operand.vmem [shape: f32[2,1,64], index: 12, kind: input, shape index: {}]
  %s13 = inlined_call_operand.hbm [shape: f32[2,64,32], index: 13, kind: input, shape index: {}]
  %s14 = inlined_call_operand.vmem [shape: f32[2,1,32], index: 14, kind: input, shape index: {}]
  %s15 = inlined_call_operand.vmem [shape: f32[2,1,32], index: 15, kind: input, shape index: {}, may-alias: {15,17}]
  %s16 = inlined_call_operand.vmem [shape: f32[2,1,32], index: 16, kind: input, shape index: {}, may-alias: {16,18}]
  %s17 = inlined_call_operand.vmem [shape: f32[2,1,32], index: 17, kind: input, shape index: {}, may-alias: {15,17}]
  %s18 = inlined_call_operand.vmem [shape: f32[2,1,32], index: 18, kind: input, shape index: {}, may-alias: {16,18}]
  %s19 = inlined_call_operand.vmem [shape: f32[32,16], index: 19, kind: input, shape index: {}]
  %s20 = inlined_call_operand.vmem [shape: f32[1,16], index: 20, kind: input, shape index: {}]
  %s21 = inlined_call_operand.vmem [shape: f32[2,8,16], index: 21, kind: output, shape index: {0}]
  %s22 = inlined_call_operand.vmem [shape: f32[2,1,8], index: 22, kind: output, shape index: {1}]
  %23 = xla_tuple %s21, %s22
  %s24 = sld [smem:[#allocation0]]
  $region157: #{image_encoder_forward.1} parent=0
    _
  %s26 = ssub.s32 1, %s24
  %s27 = scalar_select 0, %s26, %s24
  $region1: #{image_encoder_forward.1} parent=0
    #allocation2 [shape = 'u8[8192]{0}', space=vmem, size = 0x2000, scoped, tag = 'input window, operand 0']
    #allocation3 [shape = 's32[2]{0}', space=sflag, size = 0x8, scoped, tag = 'scoped memory for image_encoder_forward.1']
    #allocation4 [shape = 'u8[32768]{0}', space=vmem, size = 0x8000, scoped, tag = 'input window, operand 1, single buffered']
    #allocation5 [shape = 's32[1]{0}', space=sflag, size = 0x4, scoped, tag = 'scoped memory for image_encoder_forward.1']
    #allocation6 [shape = 'u8[32768]{0}', space=vmem, size = 0x8000, scoped, tag = 'input window, operand 3, single buffered']
    #allocation7 [shape = 'u8[32768]{0}', space=vmem, size = 0x8000, scoped, tag = 'input window, operand 5, single buffered']
    #allocation8 [shape = 's32[1]{0}', space=sflag, size = 0x4, scoped, tag = 'scoped memory for image_encoder_forward.1']
    #allocation9 [shape = 'u8[32768]{0}', space=vmem, size = 0x8000, scoped, tag = 'input window, operand 7, single buffered']
    #allocation10 [shape = 'u8[32768]{0}', space=vmem, size = 0x8000, scoped, tag = 'input window, operand 9, single buffered']
    #allocation11 [shape = 's32[1]{0}', space=sflag, size = 0x4, scoped, tag = 'scoped memory for image_encoder_forward.1']
    #allocation12 [shape = 'u8[32768]{0}', space=vmem, size = 0x8000, scoped, tag = 'input window, operand 11, single buffered']
    #allocation13 [shape = 'u8[65536]{0}', space=vmem, size = 0x10000, scoped, tag = 'input window, operand 13, single buffered']
    #allocation14 [shape = 's32[1]{0}', space=sflag, size = 0x4, scoped, tag = 'scoped memory for image_encoder_forward.1']
    %28 = vsyncpa [#allocation3], 0
    %s29 = scalar_lea.sflag [#allocation3], 1
    %30 = vsyncpa %s29, 0
    %31 = vsyncpa [#allocation5], 0
    %32 = vsyncpa [#allocation8], 0
    %33 = vsyncpa [#allocation11], 0
    %34 = vsyncpa [#allocation14], 0
    loop: start=0, step=1, limit=4
    $region2: #{image_encoder_forward.1} parent=1 // loop_pre_header
      _
    $region3: #{image_encoder_forward.1} parent=1 // loop_header
      %s36 = sphi 0, %s40
      %p37 = scmp.ge.s32.totalorder %s36, 4
      %s46 = sphi 0, %s48
      %s49 = sphi 0, %s46
      %s50 = sphi 0, %s49
      %s66 = sphi 0, %s50
      %s70 = sphi 0, %s70
      %s72 = sphi 0, %s70
      %s73 = sphi 0, %s72
      %s87 = sphi 0, %s73
      %s91 = sphi 0, %s91
      %s93 = sphi 0, %s91
      %s94 = sphi 0, %s93
      %s108 = sphi 0, %s94
      %s112 = sphi 0, %s112
      %s114 = sphi 0, %s112
      %s115 = sphi 0, %s114
      %s129 = sphi 0, %s115
      %s133 = sphi 0, %s133
      %s135 = sphi 0, %s133
      %s136 = sphi 0, %s135
      %s150 = sphi 0, %s136
      %s154 = sphi 0, %s154
      %s156 = sphi 0, %s154
      %s157 = sphi 0, %s156
      %s171 = sphi 0, %s157
      %s175 = sphi 0, %s175
      %s177 = sphi 0, %s175
      %s178 = sphi 0, %s177
      %s192 = sphi 0, %s178
      %s196 = sphi 0, %s196
      %s198 = sphi 0, %s196
      %s199 = sphi 0, %s198
      %s213 = sphi 0, %s199
      %s217 = sphi 0, %s217
      %s219 = sphi 0, %s217
      %s220 = sphi 0, %s219
      %s234 = sphi 0, %s220
      %s238 = sphi 0, %s238
      %s240 = sphi 0, %s238
      %s241 = sphi 0, %s240
      %s255 = sphi 0, %s241
      %s259 = sphi 0, %s259
      %s261 = sphi 0, %s259
      %s262 = sphi 0, %s261
      %s276 = sphi 0, %s262
      %s280 = sphi 0, %s280
      %s282 = sphi 0, %s280
      %s283 = sphi 0, %s282
      %s297 = sphi 0, %s283
      %s301 = sphi 0, %s301
      %s303 = sphi 0, %s301
      %s304 = sphi 0, %s303
      %s318 = sphi 0, %s304
      %s322 = sphi 0, %s322
      %s324 = sphi 0, %s322
      %s325 = sphi 0, %s324
      %s339 = sphi 0, %s325
      %s343 = sphi 0, %s343
      %s345 = sphi 0, %s343
      %s346 = sphi 0, %s345
      %s360 = sphi 0, %s346
      %s364 = sphi 0, %s364
      %s366 = sphi 0, %s364
      %s367 = sphi 0, %s366
      %s381 = sphi 0, %s367
      %s385 = sphi 0, %s385
      %s387 = sphi 0, %s385
      %s388 = sphi 0, %s387
      %s402 = sphi 0, %s388
      %s406 = sphi 0, %s406
      %s408 = sphi 0, %s406
      %s409 = sphi 0, %s408
      %s423 = sphi 0, %s409
      %s427 = sphi 0, %s427
      %s429 = sphi 0, %s427
      %s430 = sphi 0, %s429
      %s444 = sphi 0, %s430
      %s448 = sphi 0, %s448
      %s450 = sphi 0, %s448
      %s451 = sphi 0, %s450
      %s465 = sphi 0, %s451
      %s469 = sphi 0, %s469
      %s471 = sphi 0, %s469
      %s472 = sphi 0, %s471
      %s486 = sphi 0, %s472
      %s492 = sphi 0, %s494
      %s495 = sphi 0, %s492
      %s496 = sphi 0, %s495
      %s512 = sphi 0, %s496
      %s518 = sphi 0, %s520
      %s521 = sphi 0, %s518
      %s522 = sphi 0, %s521
      %s538 = sphi 0, %s522
    $region4: #{image_encoder_forward.1} parent=1 // loop_header_branch
      %39 = sbr.rel (%p37) target = $region8
    $region5: #{image_encoder_forward.1} parent=1 // loop_body
      %s41 = ssub.s32 %s36, 1
      %s42 = ssub.s32 %s36, 2
      %s43 = sadd.s32 %s36, 1
      %s44 = ssub.s32 %s36, %s43
      %p45 = scmp.eq.s32.totalorder %s44, 0
      %s47 = sadd.s32 %s46, 1
      %s48 = scalar_select %p45, %s46, %s47
      %p51 = pneg %p45
      %p52 = scmp.eq.s32.totalorder %s36, 1
      %p53 = por %p51, %p52
      %p54 = scmp.ne.s32.totalorder %s46, %s49
      %p55 = scmp.eq.s32.totalorder %s36, 0
      %p56 = por %p54, %p55
      %p57 = scmp.ne.s32.totalorder %s46, %s49
      %p58 = scmp.eq.s32.totalorder %s41, 1
      %p59 = por %p57, %p58
      %p60 = scmp.ne.s32.totalorder %s49, %s50
      %p61 = scmp.eq.s32.totalorder %s41, 0
      %p62 = por %p60, %p61
      %p63 = scmp.ne.s32.totalorder %s49, %s50
      %p64 = scmp.eq.s32.totalorder %s42, 1
      %p65 = por %p63, %p64
      %p67 = scmp.ne.s32.totalorder %s50, %s66
      %p68 = scmp.eq.s32.totalorder %s42, 0
      %p69 = por %p67, %p68
      %s71 = sadd.s32 %s70, 1
      %p74 = scmp.eq.s32.totalorder %s36, 1
      %p75 = scmp.ne.s32.totalorder %s70, %s72
      %p76 = scmp.eq.s32.totalorder %s36, 0
      %p77 = por %p75, %p76
      %p78 = scmp.ne.s32.totalorder %s70, %s72
      %p79 = scmp.eq.s32.totalorder %s41, 1
      %p80 = por %p78, %p79
      %p81 = scmp.ne.s32.totalorder %s72, %s73
      %p82 = scmp.eq.s32.totalorder %s41, 0
      %p83 = por %p81, %p82
      %p84 = scmp.ne.s32.totalorder %s72, %s73
      %p85 = scmp.eq.s32.totalorder %s42, 1
      %p86 = por %p84, %p85
      %p88 = scmp.ne.s32.totalorder %s73, %s87
      %p89 = scmp.eq.s32.totalorder %s42, 0
      %p90 = por %p88, %p89
      %s92 = sadd.s32 %s91, 1
      %p95 = scmp.eq.s32.totalorder %s36, 1
      %p96 = scmp.ne.s32.totalorder %s91, %s93
      %p97 = scmp.eq.s32.totalorder %s36, 0
      %p98 = por %p96, %p97
      %p99 = scmp.ne.s32.totalorder %s91, %s93
      %p100 = scmp.eq.s32.totalorder %s41, 1
      %p101 = por %p99, %p100
      %p102 = scmp.ne.s32.totalorder %s93, %s94
      %p103 = scmp.eq.s32.totalorder %s41, 0
      %p104 = por %p102, %p103
      %p105 = scmp.ne.s32.totalorder %s93, %s94
      %p106 = scmp.eq.s32.totalorder %s42, 1
      %p107 = por %p105, %p106
      %p109 = scmp.ne.s32.totalorder %s94, %s108
      %p110 = scmp.eq.s32.totalorder %s42, 0
      %p111 = por %p109, %p110
      %s113 = sadd.s32 %s112, 1
      %p116 = scmp.eq.s32.totalorder %s36, 1
      %p117 = scmp.ne.s32.totalorder %s112, %s114
      %p118 = scmp.eq.s32.totalorder %s36, 0
      %p119 = por %p117, %p118
      %p120 = scmp.ne.s32.totalorder %s112, %s114
      %p121 = scmp.eq.s32.totalorder %s41, 1
      %p122 = por %p120, %p121
      %p123 = scmp.ne.s32.totalorder %s114, %s115
      %p124 = scmp.eq.s32.totalorder %s41, 0
      %p125 = por %p123, %p124
      %p126 = scmp.ne.s32.totalorder %s114, %s115
      %p127 = scmp.eq.s32.totalorder %s42, 1
      %p128 = por %p126, %p127
      %p130 = scmp.ne.s32.totalorder %s115, %s129
      %p131 = scmp.eq.s32.totalorder %s42, 0
      %p132 = por %p130, %p131
      %s134 = sadd.s32 %s133, 1
      %p137 = scmp.eq.s32.totalorder %s36, 1
      %p138 = scmp.ne.s32.totalorder %s133, %s135
      %p139 = scmp.eq.s32.totalorder %s36, 0
      %p140 = por %p138, %p139
      %p141 = scmp.ne.s32.totalorder %s133, %s135
      %p142 = scmp.eq.s32.totalorder %s41, 1
      %p143 = por %p141, %p142
      %p144 = scmp.ne.s32.totalorder %s135, %s136
      %p145 = scmp.eq.s32.totalorder %s41, 0
      %p146 = por %p144, %p145
      %p147 = scmp.ne.s32.totalorder %s135, %s136
      %p148 = scmp.eq.s32.totalorder %s42, 1
      %p149 = por %p147, %p148
      %p151 = scmp.ne.s32.totalorder %s136, %s150
      %p152 = scmp.eq.s32.totalorder %s42, 0
      %p153 = por %p151, %p152
      %s155 = sadd.s32 %s154, 1
      %p158 = scmp.eq.s32.totalorder %s36, 1
      %p159 = scmp.ne.s32.totalorder %s154, %s156
      %p160 = scmp.eq.s32.totalorder %s36, 0
      %p161 = por %p159, %p160
      %p162 = scmp.ne.s32.totalorder %s154, %s156
      %p163 = scmp.eq.s32.totalorder %s41, 1
      %p164 = por %p162, %p163
      %p165 = scmp.ne.s32.totalorder %s156, %s157
      %p166 = scmp.eq.s32.totalorder %s41, 0
      %p167 = por %p165, %p166
      %p168 = scmp.ne.s32.totalorder %s156, %s157
      %p169 = scmp.eq.s32.totalorder %s42, 1
      %p170 = por %p168, %p169
      %p172 = scmp.ne.s32.totalorder %s157, %s171
      %p173 = scmp.eq.s32.totalorder %s42, 0
      %p174 = por %p172, %p173
      %s176 = sadd.s32 %s175, 1
      %p179 = scmp.eq.s32.totalorder %s36, 1
      %p180 = scmp.ne.s32.totalorder %s175, %s177
      %p181 = scmp.eq.s32.totalorder %s36, 0
      %p182 = por %p180, %p181
      %p183 = scmp.ne.s32.totalorder %s175, %s177
      %p184 = scmp.eq.s32.totalorder %s41, 1
      %p185 = por %p183, %p184
      %p186 = scmp.ne.s32.totalorder %s177, %s178
      %p187 = scmp.eq.s32.totalorder %s41, 0
      %p188 = por %p186, %p187
      %p189 = scmp.ne.s32.totalorder %s177, %s178
      %p190 = scmp.eq.s32.totalorder %s42, 1
      %p191 = por %p189, %p190
      %p193 = scmp.ne.s32.totalorder %s178, %s192
      %p194 = scmp.eq.s32.totalorder %s42, 0
      %p195 = por %p193, %p194
      %s197 = sadd.s32 %s196, 1
      %p200 = scmp.eq.s32.totalorder %s36, 1
      %p201 = scmp.ne.s32.totalorder %s196, %s198
      %p202 = scmp.eq.s32.totalorder %s36, 0
      %p203 = por %p201, %p202
      %p204 = scmp.ne.s32.totalorder %s196, %s198
      %p205 = scmp.eq.s32.totalorder %s41, 1
      %p206 = por %p204, %p205
      %p207 = scmp.ne.s32.totalorder %s198, %s199
      %p208 = scmp.eq.s32.totalorder %s41, 0
      %p209 = por %p207, %p208
      %p210 = scmp.ne.s32.totalorder %s198, %s199
      %p211 = scmp.eq.s32.totalorder %s42, 1
      %p212 = por %p210, %p211
      %p214 = scmp.ne.s32.totalorder %s199, %s213
      %p215 = scmp.eq.s32.totalorder %s42, 0
      %p216 = por %p214, %p215
      %s218 = sadd.s32 %s217, 1
      %p221 = scmp.eq.s32.totalorder %s36, 1
      %p222 = scmp.ne.s32.totalorder %s217, %s219
      %p223 = scmp.eq.s32.totalorder %s36, 0
      %p224 = por %p222, %p223
      %p225 = scmp.ne.s32.totalorder %s217, %s219
      %p226 = scmp.eq.s32.totalorder %s41, 1
      %p227 = por %p225, %p226
      %p228 = scmp.ne.s32.totalorder %s219, %s220
      %p229 = scmp.eq.s32.totalorder %s41, 0
      %p230 = por %p228, %p229
      %p231 = scmp.ne.s32.totalorder %s219, %s220
      %p232 = scmp.eq.s32.totalorder %s42, 1
      %p233 = por %p231, %p232
      %p235 = scmp.ne.s32.totalorder %s220, %s234
      %p236 = scmp.eq.s32.totalorder %s42, 0
      %p237 = por %p235, %p236
      %s239 = sadd.s32 %s238, 1
      %p242 = scmp.eq.s32.totalorder %s36, 1
      %p243 = scmp.ne.s32.totalorder %s238, %s240
      %p244 = scmp.eq.s32.totalorder %s36, 0
      %p245 = por %p243, %p244
      %p246 = scmp.ne.s32.totalorder %s238, %s240
      %p247 = scmp.eq.s32.totalorder %s41, 1
      %p248 = por %p246, %p247
      %p249 = scmp.ne.s32.totalorder %s240, %s241
      %p250 = scmp.eq.s32.totalorder %s41, 0
      %p251 = por %p249, %p250
      %p252 = scmp.ne.s32.totalorder %s240, %s241
      %p253 = scmp.eq.s32.totalorder %s42, 1
      %p254 = por %p252, %p253
      %p256 = scmp.ne.s32.totalorder %s241, %s255
      %p257 = scmp.eq.s32.totalorder %s42, 0
      %p258 = por %p256, %p257
      %s260 = sadd.s32 %s259, 1
      %p263 = scmp.eq.s32.totalorder %s36, 1
      %p264 = scmp.ne.s32.totalorder %s259, %s261
      %p265 = scmp.eq.s32.totalorder %s36, 0
      %p266 = por %p264, %p265
      %p267 = scmp.ne.s32.totalorder %s259, %s261
      %p268 = scmp.eq.s32.totalorder %s41, 1
      %p269 = por %p267, %p268
      %p270 = scmp.ne.s32.totalorder %s261, %s262
      %p271 = scmp.eq.s32.totalorder %s41, 0
      %p272 = por %p270, %p271
      %p273 = scmp.ne.s32.totalorder %s261, %s262
      %p274 = scmp.eq.s32.totalorder %s42, 1
      %p275 = por %p273, %p274
      %p277 = scmp.ne.s32.totalorder %s262, %s276
      %p278 = scmp.eq.s32.totalorder %s42, 0
      %p279 = por %p277, %p278
      %s281 = sadd.s32 %s280, 1
      %p284 = scmp.eq.s32.totalorder %s36, 1
      %p285 = scmp.ne.s32.totalorder %s280, %s282
      %p286 = scmp.eq.s32.totalorder %s36, 0
      %p287 = por %p285, %p286
      %p288 = scmp.ne.s32.totalorder %s280, %s282
      %p289 = scmp.eq.s32.totalorder %s41, 1
      %p290 = por %p288, %p289
      %p291 = scmp.ne.s32.totalorder %s282, %s283
      %p292 = scmp.eq.s32.totalorder %s41, 0
      %p293 = por %p291, %p292
      %p294 = scmp.ne.s32.totalorder %s282, %s283
      %p295 = scmp.eq.s32.totalorder %s42, 1
      %p296 = por %p294, %p295
      %p298 = scmp.ne.s32.totalorder %s283, %s297
      %p299 = scmp.eq.s32.totalorder %s42, 0
      %p300 = por %p298, %p299
      %s302 = sadd.s32 %s301, 1
      %p305 = scmp.eq.s32.totalorder %s36, 1
      %p306 = scmp.ne.s32.totalorder %s301, %s303
      %p307 = scmp.eq.s32.totalorder %s36, 0
      %p308 = por %p306, %p307
      %p309 = scmp.ne.s32.totalorder %s301, %s303
      %p310 = scmp.eq.s32.totalorder %s41, 1
      %p311 = por %p309, %p310
      %p312 = scmp.ne.s32.totalorder %s303, %s304
      %p313 = scmp.eq.s32.totalorder %s41, 0
      %p314 = por %p312, %p313
      %p315 = scmp.ne.s32.totalorder %s303, %s304
      %p316 = scmp.eq.s32.totalorder %s42, 1
      %p317 = por %p315, %p316
      %p319 = scmp.ne.s32.totalorder %s304, %s318
      %p320 = scmp.eq.s32.totalorder %s42, 0
      %p321 = por %p319, %p320
      %s323 = sadd.s32 %s322, 1
      %p326 = scmp.eq.s32.totalorder %s36, 1
      %p327 = scmp.ne.s32.totalorder %s322, %s324
      %p328 = scmp.eq.s32.totalorder %s36, 0
      %p329 = por %p327, %p328
      %p330 = scmp.ne.s32.totalorder %s322, %s324
      %p331 = scmp.eq.s32.totalorder %s41, 1
      %p332 = por %p330, %p331
      %p333 = scmp.ne.s32.totalorder %s324, %s325
      %p334 = scmp.eq.s32.totalorder %s41, 0
      %p335 = por %p333, %p334
      %p336 = scmp.ne.s32.totalorder %s324, %s325
      %p337 = scmp.eq.s32.totalorder %s42, 1
      %p338 = por %p336, %p337
      %p340 = scmp.ne.s32.totalorder %s325, %s339
      %p341 = scmp.eq.s32.totalorder %s42, 0
      %p342 = por %p340, %p341
      %s344 = sadd.s32 %s343, 1
      %p347 = scmp.eq.s32.totalorder %s36, 1
      %p348 = scmp.ne.s32.totalorder %s343, %s345
      %p349 = scmp.eq.s32.totalorder %s36, 0
      %p350 = por %p348, %p349
      %p351 = scmp.ne.s32.totalorder %s343, %s345
      %p352 = scmp.eq.s32.totalorder %s41, 1
      %p353 = por %p351, %p352
      %p354 = scmp.ne.s32.totalorder %s345, %s346
      %p355 = scmp.eq.s32.totalorder %s41, 0
      %p356 = por %p354, %p355
      %p357 = scmp.ne.s32.totalorder %s345, %s346
      %p358 = scmp.eq.s32.totalorder %s42, 1
      %p359 = por %p357, %p358
      %p361 = scmp.ne.s32.totalorder %s346, %s360
      %p362 = scmp.eq.s32.totalorder %s42, 0
      %p363 = por %p361, %p362
      %s365 = sadd.s32 %s364, 1
      %p368 = scmp.eq.s32.totalorder %s36, 1
      %p369 = scmp.ne.s32.totalorder %s364, %s366
      %p370 = scmp.eq.s32.totalorder %s36, 0
      %p371 = por %p369, %p370
      %p372 = scmp.ne.s32.totalorder %s364, %s366
      %p373 = scmp.eq.s32.totalorder %s41, 1
      %p374 = por %p372, %p373
      %p375 = scmp.ne.s32.totalorder %s366, %s367
      %p376 = scmp.eq.s32.totalorder %s41, 0
      %p377 = por %p375, %p376
      %p378 = scmp.ne.s32.totalorder %s366, %s367
      %p379 = scmp.eq.s32.totalorder %s42, 1
      %p380 = por %p378, %p379
      %p382 = scmp.ne.s32.totalorder %s367, %s381
      %p383 = scmp.eq.s32.totalorder %s42, 0
      %p384 = por %p382, %p383
      %s386 = sadd.s32 %s385, 1
      %p389 = scmp.eq.s32.totalorder %s36, 1
      %p390 = scmp.ne.s32.totalorder %s385, %s387
      %p391 = scmp.eq.s32.totalorder %s36, 0
      %p392 = por %p390, %p391
      %p393 = scmp.ne.s32.totalorder %s385, %s387
      %p394 = scmp.eq.s32.totalorder %s41, 1
      %p395 = por %p393, %p394
      %p396 = scmp.ne.s32.totalorder %s387, %s388
      %p397 = scmp.eq.s32.totalorder %s41, 0
      %p398 = por %p396, %p397
      %p399 = scmp.ne.s32.totalorder %s387, %s388
      %p400 = scmp.eq.s32.totalorder %s42, 1
      %p401 = por %p399, %p400
      %p403 = scmp.ne.s32.totalorder %s388, %s402
      %p404 = scmp.eq.s32.totalorder %s42, 0
      %p405 = por %p403, %p404
      %s407 = sadd.s32 %s406, 1
      %p410 = scmp.eq.s32.totalorder %s36, 1
      %p411 = scmp.ne.s32.totalorder %s406, %s408
      %p412 = scmp.eq.s32.totalorder %s36, 0
      %p413 = por %p411, %p412
      %p414 = scmp.ne.s32.totalorder %s406, %s408
      %p415 = scmp.eq.s32.totalorder %s41, 1
      %p416 = por %p414, %p415
      %p417 = scmp.ne.s32.totalorder %s408, %s409
      %p418 = scmp.eq.s32.totalorder %s41, 0
      %p419 = por %p417, %p418
      %p420 = scmp.ne.s32.totalorder %s408, %s409
      %p421 = scmp.eq.s32.totalorder %s42, 1
      %p422 = por %p420, %p421
      %p424 = scmp.ne.s32.totalorder %s409, %s423
      %p425 = scmp.eq.s32.totalorder %s42, 0
      %p426 = por %p424, %p425
      %s428 = sadd.s32 %s427, 1
      %p431 = scmp.eq.s32.totalorder %s36, 1
      %p432 = scmp.ne.s32.totalorder %s427, %s429
      %p433 = scmp.eq.s32.totalorder %s36, 0
      %p434 = por %p432, %p433
      %p435 = scmp.ne.s32.totalorder %s427, %s429
      %p436 = scmp.eq.s32.totalorder %s41, 1
      %p437 = por %p435, %p436
      %p438 = scmp.ne.s32.totalorder %s429, %s430
      %p439 = scmp.eq.s32.totalorder %s41, 0
      %p440 = por %p438, %p439
      %p441 = scmp.ne.s32.totalorder %s429, %s430
      %p442 = scmp.eq.s32.totalorder %s42, 1
      %p443 = por %p441, %p442
      %p445 = scmp.ne.s32.totalorder %s430, %s444
      %p446 = scmp.eq.s32.totalorder %s42, 0
      %p447 = por %p445, %p446
      %s449 = sadd.s32 %s448, 1
      %p452 = scmp.eq.s32.totalorder %s36, 1
      %p453 = scmp.ne.s32.totalorder %s448, %s450
      %p454 = scmp.eq.s32.totalorder %s36, 0
      %p455 = por %p453, %p454
      %p456 = scmp.ne.s32.totalorder %s448, %s450
      %p457 = scmp.eq.s32.totalorder %s41, 1
      %p458 = por %p456, %p457
      %p459 = scmp.ne.s32.totalorder %s450, %s451
      %p460 = scmp.eq.s32.totalorder %s41, 0
      %p461 = por %p459, %p460
      %p462 = scmp.ne.s32.totalorder %s450, %s451
      %p463 = scmp.eq.s32.totalorder %s42, 1
      %p464 = por %p462, %p463
      %p466 = scmp.ne.s32.totalorder %s451, %s465
      %p467 = scmp.eq.s32.totalorder %s42, 0
      %p468 = por %p466, %p467
      %s470 = sadd.s32 %s469, 1
      %p473 = scmp.eq.s32.totalorder %s36, 1
      %p474 = scmp.ne.s32.totalorder %s469, %s471
      %p475 = scmp.eq.s32.totalorder %s36, 0
      %p476 = por %p474, %p475
      %p477 = scmp.ne.s32.totalorder %s469, %s471
      %p478 = scmp.eq.s32.totalorder %s41, 1
      %p479 = por %p477, %p478
      %p480 = scmp.ne.s32.totalorder %s471, %s472
      %p481 = scmp.eq.s32.totalorder %s41, 0
      %p482 = por %p480, %p481
      %p483 = scmp.ne.s32.totalorder %s471, %s472
      %p484 = scmp.eq.s32.totalorder %s42, 1
      %p485 = por %p483, %p484
      %p487 = scmp.ne.s32.totalorder %s472, %s486
      %p488 = scmp.eq.s32.totalorder %s42, 0
      %p489 = por %p487, %p488
      %s490 = ssub.s32 %s36, %s43
      %p491 = scmp.eq.s32.totalorder %s490, 0
      %s493 = sadd.s32 %s492, 1
      %s494 = scalar_select %p491, %s492, %s493
      %p497 = pneg %p491
      %p498 = scmp.eq.s32.totalorder %s36, 1
      %p499 = por %p497, %p498
      %p500 = scmp.ne.s32.totalorder %s492, %s495
      %p501 = scmp.eq.s32.totalorder %s36, 0
      %p502 = por %p500, %p501
      %p503 = scmp.ne.s32.totalorder %s492, %s495
      %p504 = scmp.eq.s32.totalorder %s41, 1
      %p505 = por %p503, %p504
      %p506 = scmp.ne.s32.totalorder %s495, %s496
      %p507 = scmp.eq.s32.totalorder %s41, 0
      %p508 = por %p506, %p507
      %p509 = scmp.ne.s32.totalorder %s495, %s496
      %p510 = scmp.eq.s32.totalorder %s42, 1
      %p511 = por %p509, %p510
      %p513 = scmp.ne.s32.totalorder %s496, %s512
      %p514 = scmp.eq.s32.totalorder %s42, 0
      %p515 = por %p513, %p514
      %s516 = ssub.s32 %s36, %s43
      %p517 = scmp.eq.s32.totalorder %s516, 0
      %s519 = sadd.s32 %s518, 1
      %s520 = scalar_select %p517, %s518, %s519
      %p523 = pneg %p517
      %p524 = scmp.eq.s32.totalorder %s36, 1
      %p525 = por %p523, %p524
      %p526 = scmp.ne.s32.totalorder %s518, %s521
      %p527 = scmp.eq.s32.totalorder %s36, 0
      %p528 = por %p526, %p527
      %p529 = scmp.ne.s32.totalorder %s518, %s521
      %p530 = scmp.eq.s32.totalorder %s41, 1
      %p531 = por %p529, %p530
      %p532 = scmp.ne.s32.totalorder %s521, %s522
      %p533 = scmp.eq.s32.totalorder %s41, 0
      %p534 = por %p532, %p533
      %p535 = scmp.ne.s32.totalorder %s521, %s522
      %p536 = scmp.eq.s32.totalorder %s42, 1
      %p537 = por %p535, %p536
      %p539 = scmp.ne.s32.totalorder %s522, %s538
      %p540 = scmp.eq.s32.totalorder %s42, 0
      %p541 = por %p539, %p540
      %p542 = scmp.le.s32.totalorder 1, %s36
      %p543 = scmp.lt.s32.totalorder %s36, 3
      %p544 = pnand %p542, %p543
      %p545 = pneg %p544
      // Predicated region
      $region9: #{image_encoder_forward.1} parent=5 // pred_check
        _
      $region10: #{image_encoder_forward.1} parent=5 // pred_check_branch
        %547 = sbr.rel (%p544) target = $region12
      $region11: #{image_encoder_forward.1} parent=5 // pred_region
        %s548 = ssub.s32 %s36, 1
        // Predicated region
        $region13: #{image_encoder_forward.1} parent=11 // pred_check
          %p549 = pneg %p83
        $region14: #{image_encoder_forward.1} parent=11 // pred_check_branch
          %551 = sbr.rel (%p549) target = $region16
        $region15: #{image_encoder_forward.1} parent=11 // pred_region
          %s553 = ssub.s32 1024, 1024
          %554 = vsyncadd [#allocation5], %s553
          %s555 = sshll.u32 [#allocation4], 4
          %s556 = int_to_ptr.vmem [resolvable:$true] %s555
          %561 = dma.hbm_to_vmem [thread:$0]  %s1, 1024, %s556, [#allocation5], 128, 128, 8
        $region16: #{image_encoder_forward.1} parent=11 // pred_fallthru
          _
        // Predicated region
        $region17: #{image_encoder_forward.1} parent=11 // pred_check
          %p562 = pneg %p104
        $region18: #{image_encoder_forward.1} parent=11 // pred_check_branch
          %564 = sbr.rel (%p562) target = $region20
        $region19: #{image_encoder_forward.1} parent=11 // pred_region
          _
        $region20: #{image_encoder_forward.1} parent=11 // pred_fallthru
          _
        // Predicated region
        $region21: #{image_encoder_forward.1} parent=11 // pred_check
          %p565 = pneg %p125
        $region22: #{image_encoder_forward.1} parent=11 // pred_check_branch
          %567 = sbr.rel (%p565) target = $region24
        $region23: #{image_encoder_forward.1} parent=11 // pred_region
          %s569 = ssub.s32 1024, 1024
          %570 = vsyncadd [#allocation5], %s569
          %s571 = sshll.u32 [#allocation6], 4
          %s572 = int_to_ptr.vmem [resolvable:$true] %s571
          %577 = dma.hbm_to_vmem [thread:$0]  %s3, 1024, %s572, [#allocation5], 128, 128, 8
        $region24: #{image_encoder_forward.1} parent=11 // pred_fallthru
          _
        // Predicated region
        $region25: #{image_encoder_forward.1} parent=11 // pred_check
          %p578 = pneg %p146
        $region26: #{image_encoder_forward.1} parent=11 // pred_check_branch
          %580 = sbr.rel (%p578) target = $region28
        $region27: #{image_encoder_forward.1} parent=11 // pred_region
          _
        $region28: #{image_encoder_forward.1} parent=11 // pred_fallthru
          _
        // Predicated region
        $region29: #{image_encoder_forward.1} parent=11 // pred_check
          %p581 = pneg %p167
        $region30: #{image_encoder_forward.1} parent=11 // pred_check_branch
          %583 = sbr.rel (%p581) target = $region32
        $region31: #{image_encoder_forward.1} parent=11 // pred_region
          %s585 = ssub.s32 1024, 1024
          %586 = vsyncadd [#allocation8], %s585
          %s587 = sshll.u32 [#allocation7], 4
          %s588 = int_to_ptr.vmem [resolvable:$true] %s587
          %593 = dma.hbm_to_vmem [thread:$0]  %s5, 1024, %s588, [#allocation8], 128, 128, 8
        $region32: #{image_encoder_forward.1} parent=11 // pred_fallthru
          _
        // Predicated region
        $region33: #{image_encoder_forward.1} parent=11 // pred_check
          %p594 = pneg %p188
        $region34: #{image_encoder_forward.1} parent=11 // pred_check_branch
          %596 = sbr.rel (%p594) target = $region36
        $region35: #{image_encoder_forward.1} parent=11 // pred_region
          _
        $region36: #{image_encoder_forward.1} parent=11 // pred_fallthru
          _
        // Predicated region
        $region37: #{image_encoder_forward.1} parent=11 // pred_check
          %p597 = pneg %p209
        $region38: #{image_encoder_forward.1} parent=11 // pred_check_branch
          %599 = sbr.rel (%p597) target = $region40
        $region39: #{image_encoder_forward.1} parent=11 // pred_region
          %s601 = ssub.s32 1024, 1024
          %602 = vsyncadd [#allocation8], %s601
          %s603 = sshll.u32 [#allocation9], 4
          %s604 = int_to_ptr.vmem [resolvable:$true] %s603
          %609 = dma.hbm_to_vmem [thread:$0]  %s7, 1024, %s604, [#allocation8], 128, 128, 8
        $region40: #{image_encoder_forward.1} parent=11 // pred_fallthru
          _
        // Predicated region
        $region41: #{image_encoder_forward.1} parent=11 // pred_check
          %p610 = pneg %p230
        $region42: #{image_encoder_forward.1} parent=11 // pred_check_branch
          %612 = sbr.rel (%p610) target = $region44
        $region43: #{image_encoder_forward.1} parent=11 // pred_region
          _
        $region44: #{image_encoder_forward.1} parent=11 // pred_fallthru
          _
        // Predicated region
        $region45: #{image_encoder_forward.1} parent=11 // pred_check
          %p613 = pneg %p251
        $region46: #{image_encoder_forward.1} parent=11 // pred_check_branch
          %615 = sbr.rel (%p613) target = $region48
        $region47: #{image_encoder_forward.1} parent=11 // pred_region
          %s617 = ssub.s32 1024, 1024
          %618 = vsyncadd [#allocation11], %s617
          %s619 = sshll.u32 [#allocation10], 4
          %s620 = int_to_ptr.vmem [resolvable:$true] %s619
          %625 = dma.hbm_to_vmem [thread:$0]  %s9, 1024, %s620, [#allocation11], 128, 128, 8
        $region48: #{image_encoder_forward.1} parent=11 // pred_fallthru
          _
        // Predicated region
        $region49: #{image_encoder_forward.1} parent=11 // pred_check
          %p626 = pneg %p272
        $region50: #{image_encoder_forward.1} parent=11 // pred_check_branch
          %628 = sbr.rel (%p626) target = $region52
        $region51: #{image_encoder_forward.1} parent=11 // pred_region
          _
        $region52: #{image_encoder_forward.1} parent=11 // pred_fallthru
          _
        // Predicated region
        $region53: #{image_encoder_forward.1} parent=11 // pred_check
          %p629 = pneg %p293
        $region54: #{image_encoder_forward.1} parent=11 // pred_check_branch
          %631 = sbr.rel (%p629) target = $region56
        $region55: #{image_encoder_forward.1} parent=11 // pred_region
          %s633 = ssub.s32 1024, 1024
          %634 = vsyncadd [#allocation11], %s633
          %s635 = sshll.u32 [#allocation12], 4
          %s636 = int_to_ptr.vmem [resolvable:$true] %s635
          %641 = dma.hbm_to_vmem [thread:$0]  %s11, 1024, %s636, [#allocation11], 128, 128, 8
        $region56: #{image_encoder_forward.1} parent=11 // pred_fallthru
          _
        // Predicated region
        $region57: #{image_encoder_forward.1} parent=11 // pred_check
          %p642 = pneg %p314
        $region58: #{image_encoder_forward.1} parent=11 // pred_check_branch
          %644 = sbr.rel (%p642) target = $region60
        $region59: #{image_encoder_forward.1} parent=11 // pred_region
          _
        $region60: #{image_encoder_forward.1} parent=11 // pred_fallthru
          _
        // Predicated region
        $region61: #{image_encoder_forward.1} parent=11 // pred_check
          %p645 = pneg %p335
        $region62: #{image_encoder_forward.1} parent=11 // pred_check_branch
          %647 = sbr.rel (%p645) target = $region64
        $region63: #{image_encoder_forward.1} parent=11 // pred_region
          %s649 = ssub.s32 2048, 2048
          %650 = vsyncadd [#allocation14], %s649
          %s651 = sshll.u32 [#allocation13], 4
          %s652 = int_to_ptr.vmem [resolvable:$true] %s651
          %657 = dma.hbm_to_vmem [thread:$0]  %s13, 2048, %s652, [#allocation14], 128, 128, 8
        $region64: #{image_encoder_forward.1} parent=11 // pred_fallthru
          _
        // Predicated region
        $region65: #{image_encoder_forward.1} parent=11 // pred_check
          %p658 = pneg %p356
        $region66: #{image_encoder_forward.1} parent=11 // pred_check_branch
          %660 = sbr.rel (%p658) target = $region68
        $region67: #{image_encoder_forward.1} parent=11 // pred_region
          _
        $region68: #{image_encoder_forward.1} parent=11 // pred_fallthru
          _
        // Predicated region
        $region69: #{image_encoder_forward.1} parent=11 // pred_check
          %p661 = pneg %p377
        $region70: #{image_encoder_forward.1} parent=11 // pred_check_branch
          %663 = sbr.rel (%p661) target = $region72
        $region71: #{image_encoder_forward.1} parent=11 // pred_region
          _
        $region72: #{image_encoder_forward.1} parent=11 // pred_fallthru
          _
        // Predicated region
        $region73: #{image_encoder_forward.1} parent=11 // pred_check
          %p664 = pneg %p398
        $region74: #{image_encoder_forward.1} parent=11 // pred_check_branch
          %666 = sbr.rel (%p664) target = $region76
        $region75: #{image_encoder_forward.1} parent=11 // pred_region
          _
        $region76: #{image_encoder_forward.1} parent=11 // pred_fallthru
          _
        // Predicated region
        $region77: #{image_encoder_forward.1} parent=11 // pred_check
          %p667 = pneg %p419
        $region78: #{image_encoder_forward.1} parent=11 // pred_check_branch
          %669 = sbr.rel (%p667) target = $region80
        $region79: #{image_encoder_forward.1} parent=11 // pred_region
          _
        $region80: #{image_encoder_forward.1} parent=11 // pred_fallthru
          _
        // Predicated region
        $region81: #{image_encoder_forward.1} parent=11 // pred_check
          %p670 = pneg %p440
        $region82: #{image_encoder_forward.1} parent=11 // pred_check_branch
          %672 = sbr.rel (%p670) target = $region84
        $region83: #{image_encoder_forward.1} parent=11 // pred_region
          _
        $region84: #{image_encoder_forward.1} parent=11 // pred_fallthru
          _
        // Predicated region
        $region85: #{image_encoder_forward.1} parent=11 // pred_check
          %p673 = pneg %p461
        $region86: #{image_encoder_forward.1} parent=11 // pred_check_branch
          %675 = sbr.rel (%p673) target = $region88
        $region87: #{image_encoder_forward.1} parent=11 // pred_region
          _
        $region88: #{image_encoder_forward.1} parent=11 // pred_fallthru
          _
        // Predicated region
        $region89: #{image_encoder_forward.1} parent=11 // pred_check
          %p676 = pneg %p482
        $region90: #{image_encoder_forward.1} parent=11 // pred_check_branch
          %678 = sbr.rel (%p676) target = $region92
        $region91: #{image_encoder_forward.1} parent=11 // pred_region
          _
        $region92: #{image_encoder_forward.1} parent=11 // pred_fallthru
          _
      $region12: #{image_encoder_forward.1} parent=5 // pred_fallthru
        _
      %p679 = scmp.lt.s32.totalorder %s36, 2
      // Predicated region
      $region93: #{image_encoder_forward.1} parent=5 // pred_check
        %p680 = pneg %p679
      $region94: #{image_encoder_forward.1} parent=5 // pred_check_branch
        %682 = sbr.rel (%p680) target = $region96
      $region95: #{image_encoder_forward.1} parent=5 // pred_region
        // Predicated region
        $region97: #{image_encoder_forward.1} parent=95 // pred_check
          %p683 = pneg %p56
        $region98: #{image_encoder_forward.1} parent=95 // pred_check_branch
          %685 = sbr.rel (%p683) target = $region100
        $region99: #{image_encoder_forward.1} parent=95 // pred_region
          %s686 = sand.u32 %s46, 1
          %s687 = scalar_lea.sflag [#allocation3], %s686
          %s688 = sand.u32 %s46, 1
          %s689 = smul.addr %s688, 8
          %s690 = scalar_lea.vmem [#allocation2], %s689
          %s692 = ssub.s32 128, 128
          %693 = vsyncadd %s687, %s692
          %s694 = smul.addr %s36, 128
          %s695 = scalar_lea.hbm %s0, %s694
          %s697 = sshll.u32 %s690, 4
          %s698 = int_to_ptr.vmem [resolvable:$true] %s697
          %700 = dma.hbm_to_vmem [thread:$0]  %s695, 128, %s698, %s687
        $region100: #{image_encoder_forward.1} parent=95 // pred_fallthru
          _
      $region96: #{image_encoder_forward.1} parent=5 // pred_fallthru
        _
      %p701 = scmp.le.s32.totalorder 1, %s36
      %p702 = scmp.lt.s32.totalorder %s36, 3
      %p703 = pnand %p701, %p702
      %p704 = pneg %p703
      // Predicated region
      $region101: #{image_encoder_forward.1} parent=5 // pred_check
        _
      $region102: #{image_encoder_forward.1} parent=5 // pred_check_branch
        %706 = sbr.rel (%p703) target = $region104
      $region103: #{image_encoder_forward.1} parent=5 // pred_region
        %s707 = ssub.s32 %s36, 1
        %s708 = sand.u32 %s49, 1
        %s709 = scalar_lea.sflag [#allocation3], %s708
        %s710 = sand.u32 %s49, 1
        %s711 = smul.addr %s710, 8
        %s712 = scalar_lea.vmem [#allocation2], %s711
        // Predicated region
        $region105: #{image_encoder_forward.1} parent=103 // pred_check
          %p713 = pneg %p62
        $region106: #{image_encoder_forward.1} parent=103 // pred_check_branch
          %715 = sbr.rel (%p713) target = $region108
        $region107: #{image_encoder_forward.1} parent=103 // pred_region
          %716 = dma.done %s709, 128
        $region108: #{image_encoder_forward.1} parent=103 // pred_fallthru
          _
        // Predicated region
        $region109: #{image_encoder_forward.1} parent=103 // pred_check
          %p717 = pneg %p83
        $region110: #{image_encoder_forward.1} parent=103 // pred_check_branch
          %719 = sbr.rel (%p717) target = $region112
        $region111: #{image_encoder_forward.1} parent=103 // pred_region
          %720 = dma.done [#allocation5], 1024
        $region112: #{image_encoder_forward.1} parent=103 // pred_fallthru
          _
        // Predicated region
        $region113: #{image_encoder_forward.1} parent=103 // pred_check
          %p721 = pneg %p125
        $region114: #{image_encoder_forward.1} parent=103 // pred_check_branch
          %723 = sbr.rel (%p721) target = $region116
        $region115: #{image_encoder_forward.1} parent=103 // pred_region
          %724 = dma.done [#allocation5], 1024
        $region116: #{image_encoder_forward.1} parent=103 // pred_fallthru
          _
        // Predicated region
        $region117: #{image_encoder_forward.1} parent=103 // pred_check
          %p725 = pneg %p167
        $region118: #{image_encoder_forward.1} parent=103 // pred_check_branch
          %727 = sbr.rel (%p725) target = $region120
        $region119: #{image_encoder_forward.1} parent=103 // pred_region
          %728 = dma.done [#allocation8], 1024
        $region120: #{image_encoder_forward.1} parent=103 // pred_fallthru
          _
        // Predicated region
        $region121: #{image_encoder_forward.1} parent=103 // pred_check
          %p729 = pneg %p209
        $region122: #{image_encoder_forward.1} parent=103 // pred_check_branch
          %731 = sbr.rel (%p729) target = $region124
        $region123: #{image_encoder_forward.1} parent=103 // pred_region
          %732 = dma.done [#allocation8], 1024
        $region124: #{image_encoder_forward.1} parent=103 // pred_fallthru
          _
        // Predicated region
        $region125: #{image_encoder_forward.1} parent=103 // pred_check
          %p733 = pneg %p251
        $region126: #{image_encoder_forward.1} parent=103 // pred_check_branch
          %735 = sbr.rel (%p733) target = $region128
        $region127: #{image_encoder_forward.1} parent=103 // pred_region
          %736 = dma.done [#allocation11], 1024
        $region128: #{image_encoder_forward.1} parent=103 // pred_fallthru
          _
        // Predicated region
        $region129: #{image_encoder_forward.1} parent=103 // pred_check
          %p737 = pneg %p293
        $region130: #{image_encoder_forward.1} parent=103 // pred_check_branch
          %739 = sbr.rel (%p737) target = $region132
        $region131: #{image_encoder_forward.1} parent=103 // pred_region
          %740 = dma.done [#allocation11], 1024
        $region132: #{image_encoder_forward.1} parent=103 // pred_fallthru
          _
        // Predicated region
        $region133: #{image_encoder_forward.1} parent=103 // pred_check
          %p741 = pneg %p335
        $region134: #{image_encoder_forward.1} parent=103 // pred_check_branch
          %743 = sbr.rel (%p741) target = $region136
        $region135: #{image_encoder_forward.1} parent=103 // pred_region
          %744 = dma.done [#allocation14], 2048
        $region136: #{image_encoder_forward.1} parent=103 // pred_fallthru
          _
        %s745 = sand.u32 %s49, 1
        %s746 = scalar_lea.sflag [#allocation3], %s745
        %s747 = sand.u32 %s49, 1
        %s748 = smul.addr %s747, 8
        %s749 = scalar_lea.vmem [#allocation2], %s748
        %p750 = pneg %p62
        %p751 = pneg %p59
        %p752 = pneg %p83
        %p753 = pneg %p80
        %p754 = pneg %p104
        %p755 = pneg %p101
        %p756 = pneg %p125
        %p757 = pneg %p122
        %p758 = pneg %p146
        %p759 = pneg %p143
        %p760 = pneg %p167
        %p761 = pneg %p164
        %p762 = pneg %p188
        %p763 = pneg %p185
        %p764 = pneg %p209
        %p765 = pneg %p206
        %p766 = pneg %p230
        %p767 = pneg %p227
        %p768 = pneg %p251
        %p769 = pneg %p248
        %p770 = pneg %p272
        %p771 = pneg %p269
        %p772 = pneg %p293
        %p773 = pneg %p290
        %p774 = pneg %p314
        %p775 = pneg %p311
        %p776 = pneg %p335
        %p777 = pneg %p332
        %p778 = pneg %p356
        %p779 = pneg %p353
        %p780 = pneg %p377
        %p781 = pneg %p374
        %p782 = pneg %p398
        %p783 = pneg %p395
        %p784 = pneg %p419
        %p785 = pneg %p416
        %p786 = pneg %p440
        %p787 = pneg %p437
        %p788 = pneg %p461
        %p789 = pneg %p458
        %p790 = pneg %p482
        %p791 = pneg %p479
        %p792 = pneg %p508
        %p793 = pneg %p505
        %p794 = scmp.lt.s32.totalorder %s41, 1
        %s795 = scalar_select %p794, %s41, 1
        %s796 = smul.addr %s795, 8
        %s797 = scalar_lea.vmem %s21, %s796
        %p798 = pneg %p534
        %p799 = pneg %p531
        %p800 = scmp.lt.s32.totalorder %s41, 1
        %s801 = scalar_select %p800, %s41, 1
        %s802 = scalar_lea.vmem %s22, %s801
        %p803 = scmp.lt.s32.totalorder %s41, 1
        %s804 = scalar_select %p803, %s41, 1
        %s805 = smul.addr %s804, 8
        %s806 = scalar_lea.vmem %s21, %s805
        %p807 = scmp.lt.s32.totalorder %s41, 1
        %s808 = scalar_select %p807, %s41, 1
        %s809 = scalar_lea.vmem %s22, %s808
        %v810 = vld [vmem:[%s712] sm:$0xff]
        %v811 = vld [vmem:[#allocation4] sm:$0xff]
        %v812 = vld [vmem:[#allocation4 + $0x8] sm:$0xff]
        %v813 = vld [vmem:[#allocation4 + $0x10] sm:$0xff]
        %v814 = vld [vmem:[#allocation4 + $0x18] sm:$0xff]
        %v815 = vld [vmem:[#allocation4 + $0x20] sm:$0xff]
        %v816 = vld [vmem:[#allocation4 + $0x28] sm:$0xff]
        %v817 = vld [vmem:[#allocation4 + $0x30] sm:$0xff]
        %v818 = vld [vmem:[#allocation4 + $0x38] sm:$0xff]
        %v819 = vld [vmem:[%s2] sm:$0x1]
        %v821 = vlaneseq
        %v822 = vshrl.u32 %v821, 7
        %v823 = vsub.s32 0, %v822
        %v824 = vrot.slane %v819, %v823
        %vm826 = vcmask 523264
        %v828 = vsel %vm826, %v810, 0
        %830 = vmatprep.subr.mxu0 0.0
        %831 = vmatpush1.msra.mxu0 %v811
        %832 = vmatprep.subr.mxu0 0.0
        %833 = vmatpush1.msra.mxu0 %v812
        %834 = vmatprep.subr.mxu0 0.0
        %835 = vmatpush1.msra.mxu0 %v813
        %836 = vmatprep.subr.mxu0 0.0
        %837 = vmatpush1.msra.mxu0 %v814
        %838 = vmatprep.subr.mxu0 0.0
        %839 = vmatpush1.msra.mxu0 %v815
        %840 = vmatprep.subr.mxu0 0.0
        %841 = vmatpush1.msra.mxu0 %v816
        %842 = vmatprep.subr.mxu0 0.0
        %843 = vmatpush1.msra.mxu0 %v817
        %844 = vmatprep.subr.mxu0 0.0
        %845 = vmatpush1.msra.mxu0 %v818
        %846 = vmatprep.subr.mxu0 0.0
        %847 = vmatpush1.msra.mxu0 0.0
        %848 = vmatprep.subr.mxu0 0.0
        %849 = vmatpush1.msra.mxu0 0.0
        %850 = vmatprep.subr.mxu0 0.0
        %851 = vmatpush1.msra.mxu0 0.0
        %852 = vmatprep.subr.mxu0 0.0
        %853 = vmatpush1.msra.mxu0 0.0
        %854 = vmatprep.subr.mxu0 0.0
        %855 = vmatpush1.msra.mxu0 0.0
        %856 = vmatprep.subr.mxu0 0.0
        %857 = vmatpush1.msra.mxu0 0.0
        %858 = vmatprep.subr.mxu0 0.0
        %859 = vmatpush1.msra.mxu0 0.0
        %860 = vmatprep.subr.mxu0 0.0
        %861 = vmatpush1.msra.mxu0 0.0
        %862 = vmatprep.subr.mxu0 0.0
        %863 = vmatpush1.msra.mxu0 0.0
        %864 = vmatprep.subr.mxu0 0.0
        %865 = vmatpush1.msra.mxu0 0.0
        %866 = vmatprep.subr.mxu0 0.0
        %867 = vmatpush1.msra.mxu0 0.0
        %868 = vmatprep.subr.mxu0 0.0
        %869 = vmatpush1.msra.mxu0 0.0
        %870 = vmatprep.subr.mxu0 0.0
        %871 = vmatpush1.msra.mxu0 0.0
        %872 = vmatprep.subr.mxu0 0.0
        %873 = vmatpush1.msra.mxu0 0.0
        %874 = vmatprep.subr.mxu0 0.0
        %875 = vmatpush1.msra.mxu0 0.0
        %876 = vmatprep.subr.mxu0 0.0
        %877 = vmatpush1.msra.mxu0 0.0
        %878 = vmatprep.subr.mxu0 0.0
        %879 = vmatpush1.msra.mxu0 0.0
        %880 = vmatprep.subr.mxu0 0.0
        %881 = vmatpush1.msra.mxu0 0.0
        %882 = vmatprep.subr.mxu0 0.0
        %883 = vmatpush1.msra.mxu0 0.0
        %884 = vmatprep.subr.mxu0 0.0
        %885 = vmatpush1.msra.mxu0 0.0
        %886 = vmatprep.subr.mxu0 0.0
        %887 = vmatpush1.msra.mxu0 0.0
        %888 = vmatprep.subr.mxu0 0.0
        %889 = vmatpush1.msra.mxu0 0.0
        %890 = vmatprep.subr.mxu0 0.0
        %891 = vmatpush1.msra.mxu0 0.0
        %892 = vmatprep.subr.mxu0 0.0
        %893 = vmatpush1.msra.mxu0 0.0
        %894 = vmatprep.mubr.f32.mxu0 0.0
        %895 = vmatmul.mubr.f32.gmra.mrb[0].mxu0 %v828
        %v896 = vpop.f32.mrb[0].mxu0
        %v897 = vadd.f32 %v824, %v896
        %v898 = vpop.f32.mrb[0].mxu0
        %899 = vdwg.mxu0
        %v900 = vand.u32 2147483647, %v897
        %vm901 = vcmask 261120
        %v903 = vsel %vm901, 1.0, 0
        %v906 = vsel %vm901, %v900, 0
        %908 = vmatprep.subr.mxu0 0.0
        %909 = vmatpush1.xpose.msra.mxu0 %v906
        %910 = vmatprep.subr.mxu0 0.0
        %911 = vmatpush1.xpose.msra.mxu0 0.0
        %912 = vmatprep.subr.mxu0 0.0
        %913 = vmatpush1.xpose.msra.mxu0 0.0
        %914 = vmatprep.subr.mxu0 0.0
        %915 = vmatpush1.xpose.msra.mxu0 0.0
        %916 = vmatprep.subr.mxu0 0.0
        %917 = vmatpush1.xpose.msra.mxu0 0.0
        %918 = vmatprep.subr.mxu0 0.0
        %919 = vmatpush1.xpose.msra.mxu0 0.0
        %920 = vmatprep.subr.mxu0 0.0
        %921 = vmatpush1.xpose.msra.mxu0 0.0
        %922 = vmatprep.subr.mxu0 0.0
        %923 = vmatpush1.xpose.msra.mxu0 0.0
        %924 = vmatprep.subr.mxu0 0.0
        %925 = vmatpush1.xpose.msra.mxu0 0.0
        %926 = vmatprep.subr.mxu0 0.0
        %927 = vmatpush1.xpose.msra.mxu0 0.0
        %928 = vmatprep.subr.mxu0 0.0
        %929 = vmatpush1.xpose.msra.mxu0 0.0
        %930 = vmatprep.subr.mxu0 0.0
        %931 = vmatpush1.xpose.msra.mxu0 0.0
        %932 = vmatprep.subr.mxu0 0.0
        %933 = vmatpush1.xpose.msra.mxu0 0.0
        %934 = vmatprep.subr.mxu0 0.0
        %935 = vmatpush1.xpose.msra.mxu0 0.0
        %936 = vmatprep.subr.mxu0 0.0
        %937 = vmatpush1.xpose.msra.mxu0 0.0
        %938 = vmatprep.subr.mxu0 0.0
        %939 = vmatpush1.xpose.msra.mxu0 0.0
        %940 = vmatprep.subr.mxu0 0.0
        %941 = vmatpush1.xpose.msra.mxu0 0.0
        %942 = vmatprep.subr.mxu0 0.0
        %943 = vmatpush1.xpose.msra.mxu0 0.0
        %944 = vmatprep.subr.mxu0 0.0
        %945 = vmatpush1.xpose.msra.mxu0 0.0
        %946 = vmatprep.subr.mxu0 0.0
        %947 = vmatpush1.xpose.msra.mxu0 0.0
        %948 = vmatprep.subr.mxu0 0.0
        %949 = vmatpush1.xpose.msra.mxu0 0.0
        %950 = vmatprep.subr.mxu0 0.0
        %951 = vmatpush1.xpose.msra.mxu0 0.0
        %952 = vmatprep.subr.mxu0 0.0
        %953 = vmatpush1.xpose.msra.mxu0 0.0
        %954 = vmatprep.subr.mxu0 0.0
        %955 = vmatpush1.xpose.msra.mxu0 0.0
        %956 = vmatprep.subr.mxu0 0.0
        %957 = vmatpush1.xpose.msra.mxu0 0.0
        %958 = vmatprep.subr.mxu0 0.0
        %959 = vmatpush1.xpose.msra.mxu0 0.0
        %960 = vmatprep.subr.mxu0 0.0
        %961 = vmatpush1.xpose.msra.mxu0 0.0
        %962 = vmatprep.subr.mxu0 0.0
        %963 = vmatpush1.xpose.msra.mxu0 0.0
        %964 = vmatprep.subr.mxu0 0.0
        %965 = vmatpush1.xpose.msra.mxu0 0.0
        %966 = vmatprep.subr.mxu0 0.0
        %967 = vmatpush1.xpose.msra.mxu0 0.0
        %968 = vmatprep.subr.mxu0 0.0
        %969 = vmatpush1.xpose.msra.mxu0 0.0
        %970 = vmatprep.subr.mxu0 0.0
        %971 = vmatpush1.xpose.msra.mxu0 0.0
        %972 = vmatprep.mubr.f32.mxu0 0.0
        %973 = vmatmul.mubr.f32.gmra.mrb[0].mxu0 %v903
        %v974 = vpop.f32.mrb[0].mxu0
        %v975 = vadd.f32 0.0, %v974
        %v976 = vpop.f32.mrb[0].mxu0
        %977 = vdwg.mxu0
        %vm978 = vcmask 57344
        %979 = vst.msk [vmem:[%s809] sm:$0x1] %vm978, %v975
        %vm980 = vcmp.eq.f32.partialorder %v975, 0.0
        %v981 = vsel %vm980, -1e+09, 0.0
        %v982 = vld [vmem:[#allocation6] sm:$0xff]
        %v983 = vld [vmem:[#allocation6 + $0x8] sm:$0xff]
        %v984 = vld [vmem:[#allocation6 + $0x10] sm:$0xff]
        %v985 = vld [vmem:[#allocation6 + $0x18] sm:$0xff]
        %v986 = vld [vmem:[%s4] sm:$0x1]
        %v988 = vlaneseq
        %v989 = vshrl.u32 %v988, 7
        %v990 = vsub.s32 0, %v989
        %v991 = vrot.slane %v986, %v990
        %v994 = vsel %vm901, %v897, 0
        %996 = vmatprep.subr.mxu0 0.0
        %997 = vmatpush1.msra.mxu0 %v982
        %998 = vmatprep.subr.mxu0 0.0
        %999 = vmatpush1.msra.mxu0 %v983
        %1000 = vmatprep.subr.mxu0 0.0
        %1001 = vmatpush1.msra.mxu0 %v984
        %1002 = vmatprep.subr.mxu0 0.0
        %1003 = vmatpush1.msra.mxu0 %v985
        %1004 = vmatprep.subr.mxu0 0.0
        %1005 = vmatpush1.msra.mxu0 0.0
        %1006 = vmatprep.subr.mxu0 0.0
        %1007 = vmatpush1.msra.mxu0 0.0
        %1008 = vmatprep.subr.mxu0 0.0
        %1009 = vmatpush1.msra.mxu0 0.0
        %1010 = vmatprep.subr.mxu0 0.0
        %1011 = vmatpush1.msra.mxu0 0.0
        %1012 = vmatprep.subr.mxu0 0.0
        %1013 = vmatpush1.msra.mxu0 0.0
        %1014 = vmatprep.subr.mxu0 0.0
        %1015 = vmatpush1.msra.mxu0 0.0
        %1016 = vmatprep.subr.mxu0 0.0
        %1017 = vmatpush1.msra.mxu0 0.0
        %1018 = vmatprep.subr.mxu0 0.0
        %1019 = vmatpush1.msra.mxu0 0.0
        %1020 = vmatprep.subr.mxu0 0.0
        %1021 = vmatpush1.msra.mxu0 0.0
        %1022 = vmatprep.subr.mxu0 0.0
        %1023 = vmatpush1.msra.mxu0 0.0
        %1024 = vmatprep.subr.mxu0 0.0
        %1025 = vmatpush1.msra.mxu0 0.0
        %1026 = vmatprep.subr.mxu0 0.0
        %1027 = vmatpush1.msra.mxu0 0.0
        %1028 = vmatprep.subr.mxu0 0.0
        %1029 = vmatpush1.msra.mxu0 0.0
        %1030 = vmatprep.subr.mxu0 0.0
        %1031 = vmatpush1.msra.mxu0 0.0
        %1032 = vmatprep.subr.mxu0 0.0
        %1033 = vmatpush1.msra.mxu0 0.0
        %1034 = vmatprep.subr.mxu0 0.0
        %1035 = vmatpush1.msra.mxu0 0.0
        %1036 = vmatprep.subr.mxu0 0.0
        %1037 = vmatpush1.msra.mxu0 0.0
        %1038 = vmatprep.subr.mxu0 0.0
        %1039 = vmatpush1.msra.mxu0 0.0
        %1040 = vmatprep.subr.mxu0 0.0
        %1041 = vmatpush1.msra.mxu0 0.0
        %1042 = vmatprep.subr.mxu0 0.0
        %1043 = vmatpush1.msra.mxu0 0.0
        %1044 = vmatprep.subr.mxu0 0.0
        %1045 = vmatpush1.msra.mxu0 0.0
        %1046 = vmatprep.subr.mxu0 0.0
        %1047 = vmatpush1.msra.mxu0 0.0
        %1048 = vmatprep.subr.mxu0 0.0
        %1049 = vmatpush1.msra.mxu0 0.0
        %1050 = vmatprep.subr.mxu0 0.0
        %1051 = vmatpush1.msra.mxu0 0.0
        %1052 = vmatprep.subr.mxu0 0.0
        %1053 = vmatpush1.msra.mxu0 0.0
        %1054 = vmatprep.subr.mxu0 0.0
        %1055 = vmatpush1.msra.mxu0 0.0
        %1056 = vmatprep.subr.mxu0 0.0
        %1057 = vmatpush1.msra.mxu0 0.0
        %1058 = vmatprep.subr.mxu0 0.0
        %1059 = vmatpush1.msra.mxu0 0.0
        %1060 = vmatprep.mubr.f32.mxu0 0.0
        %1061 = vmatmul.mubr.f32.gmra.mrb[0].mxu0 %v994
        %v1062 = vpop.f32.mrb[0].mxu0
        %v1063 = vadd.f32 %v991, %v1062
        %v1064 = vpop.f32.mrb[0].mxu0
        %1065 = vdwg.mxu0
        %v1066 = vld [vmem:[#allocation7] sm:$0xff]
        %v1067 = vld [vmem:[#allocation7 + $0x8] sm:$0xff]
        %v1068 = vld [vmem:[#allocation7 + $0x10] sm:$0xff]
        %v1069 = vld [vmem:[#allocation7 + $0x18] sm:$0xff]
        %v1070 = vld [vmem:[%s6] sm:$0x1]
        %v1072 = vlaneseq
        %v1073 = vshrl.u32 %v1072, 7
        %v1074 = vsub.s32 0, %v1073
        %v1075 = vrot.slane %v1070, %v1074
        %1077 = vmatprep.subr.mxu0 0.0
        %1078 = vmatpush1.msra.mxu0 %v1066
        %1079 = vmatprep.subr.mxu0 0.0
        %1080 = vmatpush1.msra.mxu0 %v1067
        %1081 = vmatprep.subr.mxu0 0.0
        %1082 = vmatpush1.msra.mxu0 %v1068
        %1083 = vmatprep.subr.mxu0 0.0
        %1084 = vmatpush1.msra.mxu0 %v1069
        %1085 = vmatprep.subr.mxu0 0.0
        %1086 = vmatpush1.msra.mxu0 0.0
        %1087 = vmatprep.subr.mxu0 0.0
        %1088 = vmatpush1.msra.mxu0 0.0
        %1089 = vmatprep.subr.mxu0 0.0
        %1090 = vmatpush1.msra.mxu0 0.0
        %1091 = vmatprep.subr.mxu0 0.0
        %1092 = vmatpush1.msra.mxu0 0.0
        %1093 = vmatprep.subr.mxu0 0.0
        %1094 = vmatpush1.msra.mxu0 0.0
        %1095 = vmatprep.subr.mxu0 0.0
        %1096 = vmatpush1.msra.mxu0 0.0
        %1097 = vmatprep.subr.mxu0 0.0
        %1098 = vmatpush1.msra.mxu0 0.0
        %1099 = vmatprep.subr.mxu0 0.0
        %1100 = vmatpush1.msra.mxu0 0.0
        %1101 = vmatprep.subr.mxu0 0.0
        %1102 = vmatpush1.msra.mxu0 0.0
        %1103 = vmatprep.subr.mxu0 0.0
        %1104 = vmatpush1.msra.mxu0 0.0
        %1105 = vmatprep.subr.mxu0 0.0
        %1106 = vmatpush1.msra.mxu0 0.0
        %1107 = vmatprep.subr.mxu0 0.0
        %1108 = vmatpush1.msra.mxu0 0.0
        %1109 = vmatprep.subr.mxu0 0.0
        %1110 = vmatpush1.msra.mxu0 0.0
        %1111 = vmatprep.subr.mxu0 0.0
        %1112 = vmatpush1.msra.mxu0 0.0
        %1113 = vmatprep.subr.mxu0 0.0
        %1114 = vmatpush1.msra.mxu0 0.0
        %1115 = vmatprep.subr.mxu0 0.0
        %1116 = vmatpush1.msra.mxu0 0.0
        %1117 = vmatprep.subr.mxu0 0.0
        %1118 = vmatpush1.msra.mxu0 0.0
        %1119 = vmatprep.subr.mxu0 0.0
        %1120 = vmatpush1.msra.mxu0 0.0
        %1121 = vmatprep.subr.mxu0 0.0
        %1122 = vmatpush1.msra.mxu0 0.0
        %1123 = vmatprep.subr.mxu0 0.0
        %1124 = vmatpush1.msra.mxu0 0.0
        %1125 = vmatprep.subr.mxu0 0.0
        %1126 = vmatpush1.msra.mxu0 0.0
        %1127 = vmatprep.subr.mxu0 0.0
        %1128 = vmatpush1.msra.mxu0 0.0
        %1129 = vmatprep.subr.mxu0 0.0
        %1130 = vmatpush1.msra.mxu0 0.0
        %1131 = vmatprep.subr.mxu0 0.0
        %1132 = vmatpush1.msra.mxu0 0.0
        %1133 = vmatprep.subr.mxu0 0.0
        %1134 = vmatpush1.msra.mxu0 0.0
        %1135 = vmatprep.subr.mxu0 0.0
        %1136 = vmatpush1.msra.mxu0 0.0
        %1137 = vmatprep.subr.mxu0 0.0
        %1138 = vmatpush1.msra.mxu0 0.0
        %1139 = vmatprep.subr.mxu0 0.0
        %1140 = vmatpush1.msra.mxu0 0.0
        %1141 = vmatprep.mubr.f32.mxu0 0.0
        %1142 = vmatmul.mubr.f32.gmra.mrb[0].mxu0 %v994
        %v1143 = vpop.f32.mrb[0].mxu0
        %v1144 = vadd.f32 %v1075, %v1143
        %v1145 = vpop.f32.mrb[0].mxu0
        %1146 = vdwg.mxu0
        %v1147 = vld [vmem:[#allocation9] sm:$0xff]
        %v1148 = vld [vmem:[#allocation9 + $0x8] sm:$0xff]
        %v1149 = vld [vmem:[#allocation9 + $0x10] sm:$0xff]
        %v1150 = vld [vmem:[#allocation9 + $0x18] sm:$0xff]
        %v1151 = vld [vmem:[%s8] sm:$0x1]
        %v1153 = vlaneseq
        %v1154 = vshrl.u32 %v1153, 7
        %v1155 = vsub.s32 0, %v1154
        %v1156 = vrot.slane %v1151, %v1155
        %1158 = vmatprep.subr.mxu0 0.0
        %1159 = vmatpush1.msra.mxu0 %v1147
        %1160 = vmatprep.subr.mxu0 0.0
        %1161 = vmatpush1.msra.mxu0 %v1148
        %1162 = vmatprep.subr.mxu0 0.0
        %1163 = vmatpush1.msra.mxu0 %v1149
        %1164 = vmatprep.subr.mxu0 0.0
        %1165 = vmatpush1.msra.mxu0 %v1150
        %1166 = vmatprep.subr.mxu0 0.0
        %1167 = vmatpush1.msra.mxu0 0.0
        %1168 = vmatprep.subr.mxu0 0.0
        %1169 = vmatpush1.msra.mxu0 0.0
        %1170 = vmatprep.subr.mxu0 0.0
        %1171 = vmatpush1.msra.mxu0 0.0
        %1172 = vmatprep.subr.mxu0 0.0
        %1173 = vmatpush1.msra.mxu0 0.0
        %1174 = vmatprep.subr.mxu0 0.0
        %1175 = vmatpush1.msra.mxu0 0.0
        %1176 = vmatprep.subr.mxu0 0.0
        %1177 = vmatpush1.msra.mxu0 0.0
        %1178 = vmatprep.subr.mxu0 0.0
        %1179 = vmatpush1.msra.mxu0 0.0
        %1180 = vmatprep.subr.mxu0 0.0
        %1181 = vmatpush1.msra.mxu0 0.0
        %1182 = vmatprep.subr.mxu0 0.0
        %1183 = vmatpush1.msra.mxu0 0.0
        %1184 = vmatprep.subr.mxu0 0.0
        %1185 = vmatpush1.msra.mxu0 0.0
        %1186 = vmatprep.subr.mxu0 0.0
        %1187 = vmatpush1.msra.mxu0 0.0
        %1188 = vmatprep.subr.mxu0 0.0
        %1189 = vmatpush1.msra.mxu0 0.0
        %1190 = vmatprep.subr.mxu0 0.0
        %1191 = vmatpush1.msra.mxu0 0.0
        %1192 = vmatprep.subr.mxu0 0.0
        %1193 = vmatpush1.msra.mxu0 0.0
        %1194 = vmatprep.subr.mxu0 0.0
        %1195 = vmatpush1.msra.mxu0 0.0
        %1196 = vmatprep.subr.mxu0 0.0
        %1197 = vmatpush1.msra.mxu0 0.0
        %1198 = vmatprep.subr.mxu0 0.0
        %1199 = vmatpush1.msra.mxu0 0.0
        %1200 = vmatprep.subr.mxu0 0.0
        %1201 = vmatpush1.msra.mxu0 0.0
        %1202 = vmatprep.subr.mxu0 0.0
        %1203 = vmatpush1.msra.mxu0 0.0
        %1204 = vmatprep.subr.mxu0 0.0
        %1205 = vmatpush1.msra.mxu0 0.0
        %1206 = vmatprep.subr.mxu0 0.0
        %1207 = vmatpush1.msra.mxu0 0.0
        %1208 = vmatprep.subr.mxu0 0.0
        %1209 = vmatpush1.msra.mxu0 0.0
        %1210 = vmatprep.subr.mxu0 0.0
        %1211 = vmatpush1.msra.mxu0 0.0
        %1212 = vmatprep.subr.mxu0 0.0
        %1213 = vmatpush1.msra.mxu0 0.0
        %1214 = vmatprep.subr.mxu0 0.0
        %1215 = vmatpush1.msra.mxu0 0.0
        %1216 = vmatprep.subr.mxu0 0.0
        %1217 = vmatpush1.msra.mxu0 0.0
        %1218 = vmatprep.subr.mxu0 0.0
        %1219 = vmatpush1.msra.mxu0 0.0
        %1220 = vmatprep.subr.mxu0 0.0
        %1221 = vmatpush1.msra.mxu0 0.0
        %1222 = vmatprep.mubr.f32.mxu0 0.0
        %1223 = vmatmul.mubr.f32.gmra.mrb[0].mxu0 %v994
        %v1224 = vpop.f32.mrb[0].mxu0
        %v1225 = vadd.f32 %v1156, %v1224
        %v1226 = vpop.f32.mrb[0].mxu0
        %1227 = vdwg.mxu0
        %v1228 = vld [vmem:[#allocation10] sm:$0xff]
        %v1229 = vld [vmem:[#allocation10 + $0x8] sm:$0xff]
        %v1230 = vld [vmem:[#allocation10 + $0x10] sm:$0xff]
        %v1231 = vld [vmem:[#allocation10 + $0x18] sm:$0xff]
        %vm1232 = vcmask 64512
        %v1234 = vsel %vm1232, %v1063, 0
        %v1237 = vsel %vm1232, %v1144, 0
        %1239 = vmatprep.subr.mxu0 0.0
        %1240 = vmatpush1.xpose.msra.mxu0 %v1237
        %1241 = vmatprep.subr.mxu0 0.0
        %1242 = vmatpush1.xpose.msra.mxu0 0.0
        %1243 = vmatprep.subr.mxu0 0.0
        %1244 = vmatpush1.xpose.msra.mxu0 0.0
        %1245 = vmatprep.subr.mxu0 0.0
        %1246 = vmatpush1.xpose.msra.mxu0 0.0
        %1247 = vmatprep.subr.mxu0 0.0
        %1248 = vmatpush1.xpose.msra.mxu0 0.0
        %1249 = vmatprep.subr.mxu0 0.0
        %1250 = vmatpush1.xpose.msra.mxu0 0.0
        %1251 = vmatprep.subr.mxu0 0.0
        %1252 = vmatpush1.xpose.msra.mxu0 0.0
        %1253 = vmatprep.subr.mxu0 0.0
        %1254 = vmatpush1.xpose.msra.mxu0 0.0
        %1255 = vmatprep.subr.mxu0 0.0
        %1256 = vmatpush1.xpose.msra.mxu0 0.0
        %1257 = vmatprep.subr.mxu0 0.0
        %1258 = vmatpush1.xpose.msra.mxu0 0.0
        %1259 = vmatprep.subr.mxu0 0.0
        %1260 = vmatpush1.xpose.msra.mxu0 0.0
        %1261 = vmatprep.subr.mxu0 0.0
        %1262 = vmatpush1.xpose.msra.mxu0 0.0
        %1263 = vmatprep.subr.mxu0 0.0
        %1264 = vmatpush1.xpose.msra.mxu0 0.0
        %1265 = vmatprep.subr.mxu0 0.0
        %1266 = vmatpush1.xpose.msra.mxu0 0.0
        %1267 = vmatprep.subr.mxu0 0.0
        %1268 = vmatpush1.xpose.msra.mxu0 0.0
        %1269 = vmatprep.subr.mxu0 0.0
        %1270 = vmatpush1.xpose.msra.mxu0 0.0
        %1271 = vmatprep.subr.mxu0 0.0
        %1272 = vmatpush1.xpose.msra.mxu0 0.0
        %1273 = vmatprep.subr.mxu0 0.0
        %1274 = vmatpush1.xpose.msra.mxu0 0.0
        %1275 = vmatprep.subr.mxu0 0.0
        %1276 = vmatpush1.xpose.msra.mxu0 0.0
        %1277 = vmatprep.subr.mxu0 0.0
        %1278 = vmatpush1.xpose.msra.mxu0 0.0
        %1279 = vmatprep.subr.mxu0 0.0
        %1280 = vmatpush1.xpose.msra.mxu0 0.0
        %1281 = vmatprep.subr.mxu0 0.0
        %1282 = vmatpush1.xpose.msra.mxu0 0.0
        %1283 = vmatprep.subr.mxu0 0.0
        %1284 = vmatpush1.xpose.msra.mxu0 0.0
        %1285 = vmatprep.subr.mxu0 0.0
        %1286 = vmatpush1.xpose.msra.mxu0 0.0
        %1287 = vmatprep.subr.mxu0 0.0
        %1288 = vmatpush1.xpose.msra.mxu0 0.0
        %1289 = vmatprep.subr.mxu0 0.0
        %1290 = vmatpush1.xpose.msra.mxu0 0.0
        %1291 = vmatprep.subr.mxu0 0.0
        %1292 = vmatpush1.xpose.msra.mxu0 0.0
        %1293 = vmatprep.subr.mxu0 0.0
        %1294 = vmatpush1.xpose.msra.mxu0 0.0
        %1295 = vmatprep.subr.mxu0 0.0
        %1296 = vmatpush1.xpose.msra.mxu0 0.0
        %1297 = vmatprep.subr.mxu0 0.0
        %1298 = vmatpush1.xpose.msra.mxu0 0.0
        %1299 = vmatprep.subr.mxu0 0.0
        %1300 = vmatpush1.xpose.msra.mxu0 0.0
        %1301 = vmatprep.subr.mxu0 0.0
        %1302 = vmatpush1.xpose.msra.mxu0 0.0
        %1303 = vmatprep.mubr.f32.mxu0 0.0
        %1304 = vmatmul.mubr.f32.gmra.mrb[0].mxu0 %v1234
        %v1305 = vpop.f32.mrb[0].mxu0
        %v1306 = vadd.f32 0.0, %v1305
        %v1307 = vpop.f32.mrb[0].mxu0
        %1308 = vdwg.mxu0
        %v1309 = vmul.f32 %v1306, 0.35355338
        %v1310 = vlaneseq
        %v1311 = vshrl.u32 %v1310, 7
        %v1312 = vsub.s32 0, %v1311
        %v1313 = vrot.slane %v981, %v1312
        %v1314 = vadd.f32 %v1309, %v1313
        %v1315 = vsel %vm1232, %v1314, -inf
        %1316 = vmax.xlane.f32.xlu0 %v1315
        %v1317 = vpop.xlane.xlu0 %1316
        %v1318 = vsub.f32 %v1314, %v1317
        %v1319 = vmul.f32 %v1318, 1.442695
        %v1320 = vpow.pop %v1319
        %v1321 = vsel %vm1232, %v1320, 0.0
        %1322 = vadd.xlane.f32.xlu0 %v1321
        %v1323 = vpop.xlane.xlu0 %1322
        %v1324 = vrcp.pop %v1323
        %v1325 = vmul.f32 %v1320, %v1324
        %v1327 = vsel %vm1232, %v1325, 0
        %1329 = vmatprep.subr.mxu0 0.0
        %1330 = vmatpush1.msra.mxu0 %v1225
        %1331 = vmatprep.subr.mxu0 0.0
        %1332 = vmatpush1.msra.mxu0 0.0
        %1333 = vmatprep.subr.mxu0 0.0
        %1334 = vmatpush1.msra.mxu0 0.0
        %1335 = vmatprep.subr.mxu0 0.0
        %1336 = vmatpush1.msra.mxu0 0.0
        %1337 = vmatprep.subr.mxu0 0.0
        %1338 = vmatpush1.msra.mxu0 0.0
        %1339 = vmatprep.subr.mxu0 0.0
        %1340 = vmatpush1.msra.mxu0 0.0
        %1341 = vmatprep.subr.mxu0 0.0
        %1342 = vmatpush1.msra.mxu0 0.0
        %1343 = vmatprep.subr.mxu0 0.0
        %1344 = vmatpush1.msra.mxu0 0.0
        %1345 = vmatprep.subr.mxu0 0.0
        %1346 = vmatpush1.msra.mxu0 0.0
        %1347 = vmatprep.subr.mxu0 0.0
        %1348 = vmatpush1.msra.mxu0 0.0
        %1349 = vmatprep.subr.mxu0 0.0
        %1350 = vmatpush1.msra.mxu0 0.0
        %1351 = vmatprep.subr.mxu0 0.0
        %1352 = vmatpush1.msra.mxu0 0.0
        %1353 = vmatprep.subr.mxu0 0.0
        %1354 = vmatpush1.msra.mxu0 0.0
        %1355 = vmatprep.subr.mxu0 0.0
        %1356 = vmatpush1.msra.mxu0 0.0
        %1357 = vmatprep.subr.mxu0 0.0
        %1358 = vmatpush1.msra.mxu0 0.0
        %1359 = vmatprep.subr.mxu0 0.0
        %1360 = vmatpush1.msra.mxu0 0.0
        %1361 = vmatprep.subr.mxu0 0.0
        %1362 = vmatpush1.msra.mxu0 0.0
        %1363 = vmatprep.subr.mxu0 0.0
        %1364 = vmatpush1.msra.mxu0 0.0
        %1365 = vmatprep.subr.mxu0 0.0
        %1366 = vmatpush1.msra.mxu0 0.0
        %1367 = vmatprep.subr.mxu0 0.0
        %1368 = vmatpush1.msra.mxu0 0.0
        %1369 = vmatprep.subr.mxu0 0.0
        %1370 = vmatpush1.msra.mxu0 0.0
        %1371 = vmatprep.subr.mxu0 0.0
        %1372 = vmatpush1.msra.mxu0 0.0
        %1373 = vmatprep.subr.mxu0 0.0
        %1374 = vmatpush1.msra.mxu0 0.0
        %1375 = vmatprep.subr.mxu0 0.0
        %1376 = vmatpush1.msra.mxu0 0.0
        %1377 = vmatprep.subr.mxu0 0.0
        %1378 = vmatpush1.msra.mxu0 0.0
        %1379 = vmatprep.subr.mxu0 0.0
        %1380 = vmatpush1.msra.mxu0 0.0
        %1381 = vmatprep.subr.mxu0 0.0
        %1382 = vmatpush1.msra.mxu0 0.0
        %1383 = vmatprep.subr.mxu0 0.0
        %1384 = vmatpush1.msra.mxu0 0.0
        %1385 = vmatprep.subr.mxu0 0.0
        %1386 = vmatpush1.msra.mxu0 0.0
        %1387 = vmatprep.subr.mxu0 0.0
        %1388 = vmatpush1.msra.mxu0 0.0
        %1389 = vmatprep.subr.mxu0 0.0
        %1390 = vmatpush1.msra.mxu0 0.0
        %1391 = vmatprep.subr.mxu0 0.0
        %1392 = vmatpush1.msra.mxu0 0.0
        %1393 = vmatprep.mubr.f32.mxu0 0.0
        %1394 = vmatmul.mubr.f32.gmra.mrb[0].mxu0 %v1327
        %v1395 = vpop.f32.mrb[0].mxu0
        %v1396 = vadd.f32 0.0, %v1395
        %v1397 = vpop.f32.mrb[0].mxu0
        %1398 = vdwg.mxu0
        %1399 = vrot.lane.b32.xlu0 %v1063, 120
        %v1400 = vpop.permute.xlu0 %1399
        %1401 = vrot.lane.b32.xlu0 %v1144, 120
        %v1402 = vpop.permute.xlu0 %1401
        %v1403 = vsel %vm1232, %v1400, 0
        %v1405 = vsel %vm1232, %v1402, 0
        %1407 = vmatprep.subr.mxu0 0.0
        %1408 = vmatpush1.xpose.msra.mxu0 %v1405
        %1409 = vmatprep.subr.mxu0 0.0
        %1410 = vmatpush1.xpose.msra.mxu0 0.0
        %1411 = vmatprep.subr.mxu0 0.0
        %1412 = vmatpush1.xpose.msra.mxu0 0.0
        %1413 = vmatprep.subr.mxu0 0.0
        %1414 = vmatpush1.xpose.msra.mxu0 0.0
        %1415 = vmatprep.subr.mxu0 0.0
        %1416 = vmatpush1.xpose.msra.mxu0 0.0
        %1417 = vmatprep.subr.mxu0 0.0
        %1418 = vmatpush1.xpose.msra.mxu0 0.0
        %1419 = vmatprep.subr.mxu0 0.0
        %1420 = vmatpush1.xpose.msra.mxu0 0.0
        %1421 = vmatprep.subr.mxu0 0.0
        %1422 = vmatpush1.xpose.msra.mxu0 0.0
        %1423 = vmatprep.subr.mxu0 0.0
        %1424 = vmatpush1.xpose.msra.mxu0 0.0
        %1425 = vmatprep.subr.mxu0 0.0
        %1426 = vmatpush1.xpose.msra.mxu0 0.0
        %1427 = vmatprep.subr.mxu0 0.0
        %1428 = vmatpush1.xpose.msra.mxu0 0.0
        %1429 = vmatprep.subr.mxu0 0.0
        %1430 = vmatpush1.xpose.msra.mxu0 0.0
        %1431 = vmatprep.subr.mxu0 0.0
        %1432 = vmatpush1.xpose.msra.mxu0 0.0
        %1433 = vmatprep.subr.mxu0 0.0
        %1434 = vmatpush1.xpose.msra.mxu0 0.0
        %1435 = vmatprep.subr.mxu0 0.0
        %1436 = vmatpush1.xpose.msra.mxu0 0.0
        %1437 = vmatprep.subr.mxu0 0.0
        %1438 = vmatpush1.xpose.msra.mxu0 0.0
        %1439 = vmatprep.subr.mxu0 0.0
        %1440 = vmatpush1.xpose.msra.mxu0 0.0
        %1441 = vmatprep.subr.mxu0 0.0
        %1442 = vmatpush1.xpose.msra.mxu0 0.0
        %1443 = vmatprep.subr.mxu0 0.0
        %1444 = vmatpush1.xpose.msra.mxu0 0.0
        %1445 = vmatprep.subr.mxu0 0.0
        %1446 = vmatpush1.xpose.msra.mxu0 0.0
        %1447 = vmatprep.subr.mxu0 0.0
        %1448 = vmatpush1.xpose.msra.mxu0 0.0
        %1449 = vmatprep.subr.mxu0 0.0
        %1450 = vmatpush1.xpose.msra.mxu0 0.0
        %1451 = vmatprep.subr.mxu0 0.0
        %1452 = vmatpush1.xpose.msra.mxu0 0.0
        %1453 = vmatprep.subr.mxu0 0.0
        %1454 = vmatpush1.xpose.msra.mxu0 0.0
        %1455 = vmatprep.subr.mxu0 0.0
        %1456 = vmatpush1.xpose.msra.mxu0 0.0
        %1457 = vmatprep.subr.mxu0 0.0
        %1458 = vmatpush1.xpose.msra.mxu0 0.0
        %1459 = vmatprep.subr.mxu0 0.0
        %1460 = vmatpush1.xpose.msra.mxu0 0.0
        %1461 = vmatprep.subr.mxu0 0.0
        %1462 = vmatpush1.xpose.msra.mxu0 0.0
        %1463 = vmatprep.subr.mxu0 0.0
        %1464 = vmatpush1.xpose.msra.mxu0 0.0
        %1465 = vmatprep.subr.mxu0 0.0
        %1466 = vmatpush1.xpose.msra.mxu0 0.0
        %1467 = vmatprep.subr.mxu0 0.0
        %1468 = vmatpush1.xpose.msra.mxu0 0.0
        %1469 = vmatprep.subr.mxu0 0.0
        %1470 = vmatpush1.xpose.msra.mxu0 0.0
        %1471 = vmatprep.mubr.f32.mxu0 0.0
        %1472 = vmatmul.mubr.f32.gmra.mrb[0].mxu0 %v1403
        %v1473 = vpop.f32.mrb[0].mxu0
        %v1474 = vadd.f32 0.0, %v1473
        %v1475 = vpop.f32.mrb[0].mxu0
        %1476 = vdwg.mxu0
        %v1477 = vmul.f32 %v1474, 0.35355338
        %v1478 = vadd.f32 %v1477, %v1313
        %v1479 = vsel %vm1232, %v1478, -inf
        %1480 = vmax.xlane.f32.xlu0 %v1479
        %v1481 = vpop.xlane.xlu0 %1480
        %v1482 = vsub.f32 %v1478, %v1481
        %v1483 = vmul.f32 %v1482, 1.442695
        %v1484 = vpow.pop %v1483
        %v1485 = vsel %vm1232, %v1484, 0.0
        %1486 = vadd.xlane.f32.xlu0 %v1485
        %v1487 = vpop.xlane.xlu0 %1486
        %v1488 = vrcp.pop %v1487
        %v1489 = vmul.f32 %v1484, %v1488
        %1491 = vrot.lane.b32.xlu0 %v1225, 120
        %v1492 = vpop.permute.xlu0 %1491
        %v1495 = vsel %vm1232, %v1489, 0
        %1497 = vmatprep.subr.mxu0 0.0
        %1498 = vmatpush1.msra.mxu0 %v1492
        %1499 = vmatprep.subr.mxu0 0.0
        %1500 = vmatpush1.msra.mxu0 0.0
        %1501 = vmatprep.subr.mxu0 0.0
        %1502 = vmatpush1.msra.mxu0 0.0
        %1503 = vmatprep.subr.mxu0 0.0
        %1504 = vmatpush1.msra.mxu0 0.0
        %1505 = vmatprep.subr.mxu0 0.0
        %1506 = vmatpush1.msra.mxu0 0.0
        %1507 = vmatprep.subr.mxu0 0.0
        %1508 = vmatpush1.msra.mxu0 0.0
        %1509 = vmatprep.subr.mxu0 0.0
        %1510 = vmatpush1.msra.mxu0 0.0
        %1511 = vmatprep.subr.mxu0 0.0
        %1512 = vmatpush1.msra.mxu0 0.0
        %1513 = vmatprep.subr.mxu0 0.0
        %1514 = vmatpush1.msra.mxu0 0.0
        %1515 = vmatprep.subr.mxu0 0.0
        %1516 = vmatpush1.msra.mxu0 0.0
        %1517 = vmatprep.subr.mxu0 0.0
        %1518 = vmatpush1.msra.mxu0 0.0
        %1519 = vmatprep.subr.mxu0 0.0
        %1520 = vmatpush1.msra.mxu0 0.0
        %1521 = vmatprep.subr.mxu0 0.0
        %1522 = vmatpush1.msra.mxu0 0.0
        %1523 = vmatprep.subr.mxu0 0.0
        %1524 = vmatpush1.msra.mxu0 0.0
        %1525 = vmatprep.subr.mxu0 0.0
        %1526 = vmatpush1.msra.mxu0 0.0
        %1527 = vmatprep.subr.mxu0 0.0
        %1528 = vmatpush1.msra.mxu0 0.0
        %1529 = vmatprep.subr.mxu0 0.0
        %1530 = vmatpush1.msra.mxu0 0.0
        %1531 = vmatprep.subr.mxu0 0.0
        %1532 = vmatpush1.msra.mxu0 0.0
        %1533 = vmatprep.subr.mxu0 0.0
        %1534 = vmatpush1.msra.mxu0 0.0
        %1535 = vmatprep.subr.mxu0 0.0
        %1536 = vmatpush1.msra.mxu0 0.0
        %1537 = vmatprep.subr.mxu0 0.0
        %1538 = vmatpush1.msra.mxu0 0.0
        %1539 = vmatprep.subr.mxu0 0.0
        %1540 = vmatpush1.msra.mxu0 0.0
        %1541 = vmatprep.subr.mxu0 0.0
        %1542 = vmatpush1.msra.mxu0 0.0
        %1543 = vmatprep.subr.mxu0 0.0
        %1544 = vmatpush1.msra.mxu0 0.0
        %1545 = vmatprep.subr.mxu0 0.0
        %1546 = vmatpush1.msra.mxu0 0.0
        %1547 = vmatprep.subr.mxu0 0.0
        %1548 = vmatpush1.msra.mxu0 0.0
        %1549 = vmatprep.subr.mxu0 0.0
        %1550 = vmatpush1.msra.mxu0 0.0
        %1551 = vmatprep.subr.mxu0 0.0
        %1552 = vmatpush1.msra.mxu0 0.0
        %1553 = vmatprep.subr.mxu0 0.0
        %1554 = vmatpush1.msra.mxu0 0.0
        %1555 = vmatprep.subr.mxu0 0.0
        %1556 = vmatpush1.msra.mxu0 0.0
        %1557 = vmatprep.subr.mxu0 0.0
        %1558 = vmatpush1.msra.mxu0 0.0
        %1559 = vmatprep.subr.mxu0 0.0
        %1560 = vmatpush1.msra.mxu0 0.0
        %1561 = vmatprep.mubr.f32.mxu0 0.0
        %1562 = vmatmul.mubr.f32.gmra.mrb[0].mxu0 %v1495
        %v1563 = vpop.f32.mrb[0].mxu0
        %v1564 = vadd.f32 0.0, %v1563
        %v1565 = vpop.f32.mrb[0].mxu0
        %1566 = vdwg.mxu0
        %v1568 = vsel %vm1232, %v1564, 0
        %1570 = vmatprep.subr.mxu0 0.0
        %1571 = vmatpush1.msra.mxu0 %v1229
        %1572 = vmatprep.subr.mxu0 0.0
        %1573 = vmatpush1.msra.mxu0 0.0
        %1574 = vmatprep.subr.mxu0 0.0
        %1575 = vmatpush1.msra.mxu0 0.0
        %1576 = vmatprep.subr.mxu0 0.0
        %1577 = vmatpush1.msra.mxu0 0.0
        %1578 = vmatprep.subr.mxu0 0.0
        %1579 = vmatpush1.msra.mxu0 0.0
        %1580 = vmatprep.subr.mxu0 0.0
        %1581 = vmatpush1.msra.mxu0 0.0
        %1582 = vmatprep.subr.mxu0 0.0
        %1583 = vmatpush1.msra.mxu0 0.0
        %1584 = vmatprep.subr.mxu0 0.0
        %1585 = vmatpush1.msra.mxu0 0.0
        %1586 = vmatprep.subr.mxu0 0.0
        %1587 = vmatpush1.msra.mxu0 0.0
        %1588 = vmatprep.subr.mxu0 0.0
        %1589 = vmatpush1.msra.mxu0 0.0
        %1590 = vmatprep.subr.mxu0 0.0
        %1591 = vmatpush1.msra.mxu0 0.0
        %1592 = vmatprep.subr.mxu0 0.0
        %1593 = vmatpush1.msra.mxu0 0.0
        %1594 = vmatprep.subr.mxu0 0.0
        %1595 = vmatpush1.msra.mxu0 0.0
        %1596 = vmatprep.subr.mxu0 0.0
        %1597 = vmatpush1.msra.mxu0 0.0
        %1598 = vmatprep.subr.mxu0 0.0
        %1599 = vmatpush1.msra.mxu0 0.0
        %1600 = vmatprep.subr.mxu0 0.0
        %1601 = vmatpush1.msra.mxu0 0.0
        %1602 = vmatprep.subr.mxu0 0.0
        %1603 = vmatpush1.msra.mxu0 0.0
        %1604 = vmatprep.subr.mxu0 0.0
        %1605 = vmatpush1.msra.mxu0 0.0
        %1606 = vmatprep.subr.mxu0 0.0
        %1607 = vmatpush1.msra.mxu0 0.0
        %1608 = vmatprep.subr.mxu0 0.0
        %1609 = vmatpush1.msra.mxu0 0.0
        %1610 = vmatprep.subr.mxu0 0.0
        %1611 = vmatpush1.msra.mxu0 0.0
        %1612 = vmatprep.subr.mxu0 0.0
        %1613 = vmatpush1.msra.mxu0 0.0
        %1614 = vmatprep.subr.mxu0 0.0
        %1615 = vmatpush1.msra.mxu0 0.0
        %1616 = vmatprep.subr.mxu0 0.0
        %1617 = vmatpush1.msra.mxu0 0.0
        %1618 = vmatprep.subr.mxu0 0.0
        %1619 = vmatpush1.msra.mxu0 0.0
        %1620 = vmatprep.subr.mxu0 0.0
        %1621 = vmatpush1.msra.mxu0 0.0
        %1622 = vmatprep.subr.mxu0 0.0
        %1623 = vmatpush1.msra.mxu0 0.0
        %1624 = vmatprep.subr.mxu0 0.0
        %1625 = vmatpush1.msra.mxu0 0.0
        %1626 = vmatprep.subr.mxu0 0.0
        %1627 = vmatpush1.msra.mxu0 0.0
        %1628 = vmatprep.subr.mxu0 0.0
        %1629 = vmatpush1.msra.mxu0 0.0
        %1630 = vmatprep.subr.mxu0 0.0
        %1631 = vmatpush1.msra.mxu0 0.0
        %1632 = vmatprep.subr.mxu0 0.0
        %1633 = vmatpush1.msra.mxu0 0.0
        %1634 = vmatprep.mubr.f32.mxu0 0.0
        %1635 = vmatmul.mubr.f32.gmra.mrb[0].mxu0 %v1568
        %v1636 = vpop.f32.mrb[0].mxu0
        %v1637 = vadd.f32 0.0, %v1636
        %v1638 = vpop.f32.mrb[0].mxu0
        %1639 = vdwg.mxu0
        %v1641 = vsel %vm1232, %v1396, 0
        %1643 = vmatprep.subr.mxu0 0.0
        %1644 = vmatpush1.msra.mxu0 %v1228
        %1645 = vmatprep.subr.mxu0 0.0
        %1646 = vmatpush1.msra.mxu0 0.0
        %1647 = vmatprep.subr.mxu0 0.0
        %1648 = vmatpush1.msra.mxu0 0.0
        %1649 = vmatprep.subr.mxu0 0.0
        %1650 = vmatpush1.msra.mxu0 0.0
        %1651 = vmatprep.subr.mxu0 0.0
        %1652 = vmatpush1.msra.mxu0 0.0
        %1653 = vmatprep.subr.mxu0 0.0
        %1654 = vmatpush1.msra.mxu0 0.0
        %1655 = vmatprep.subr.mxu0 0.0
        %1656 = vmatpush1.msra.mxu0 0.0
        %1657 = vmatprep.subr.mxu0 0.0
        %1658 = vmatpush1.msra.mxu0 0.0
        %1659 = vmatprep.subr.mxu0 0.0
        %1660 = vmatpush1.msra.mxu0 0.0
        %1661 = vmatprep.subr.mxu0 0.0
        %1662 = vmatpush1.msra.mxu0 0.0
        %1663 = vmatprep.subr.mxu0 0.0
        %1664 = vmatpush1.msra.mxu0 0.0
        %1665 = vmatprep.subr.mxu0 0.0
        %1666 = vmatpush1.msra.mxu0 0.0
        %1667 = vmatprep.subr.mxu0 0.0
        %1668 = vmatpush1.msra.mxu0 0.0
        %1669 = vmatprep.subr.mxu0 0.0
        %1670 = vmatpush1.msra.mxu0 0.0
        %1671 = vmatprep.subr.mxu0 0.0
        %1672 = vmatpush1.msra.mxu0 0.0
        %1673 = vmatprep.subr.mxu0 0.0
        %1674 = vmatpush1.msra.mxu0 0.0
        %1675 = vmatprep.subr.mxu0 0.0
        %1676 = vmatpush1.msra.mxu0 0.0
        %1677 = vmatprep.subr.mxu0 0.0
        %1678 = vmatpush1.msra.mxu0 0.0
        %1679 = vmatprep.subr.mxu0 0.0
        %1680 = vmatpush1.msra.mxu0 0.0
        %1681 = vmatprep.subr.mxu0 0.0
        %1682 = vmatpush1.msra.mxu0 0.0
        %1683 = vmatprep.subr.mxu0 0.0
        %1684 = vmatpush1.msra.mxu0 0.0
        %1685 = vmatprep.subr.mxu0 0.0
        %1686 = vmatpush1.msra.mxu0 0.0
        %1687 = vmatprep.subr.mxu0 0.0
        %1688 = vmatpush1.msra.mxu0 0.0
        %1689 = vmatprep.subr.mxu0 0.0
        %1690 = vmatpush1.msra.mxu0 0.0
        %1691 = vmatprep.subr.mxu0 0.0
        %1692 = vmatpush1.msra.mxu0 0.0
        %1693 = vmatprep.subr.mxu0 0.0
        %1694 = vmatpush1.msra.mxu0 0.0
        %1695 = vmatprep.subr.mxu0 0.0
        %1696 = vmatpush1.msra.mxu0 0.0
        %1697 = vmatprep.subr.mxu0 0.0
        %1698 = vmatpush1.msra.mxu0 0.0
        %1699 = vmatprep.subr.mxu0 0.0
        %1700 = vmatpush1.msra.mxu0 0.0
        %1701 = vmatprep.subr.mxu0 0.0
        %1702 = vmatpush1.msra.mxu0 0.0
        %1703 = vmatprep.subr.mxu0 0.0
        %1704 = vmatpush1.msra.mxu0 0.0
        %1705 = vmatprep.subr.mxu0 0.0
        %1706 = vmatpush1.msra.mxu0 0.0
        %1707 = vmatprep.mubr.f32.mxu0 0.0
        %1708 = vmatmul.mubr.f32.gmra.mrb[0].mxu0 %v1641
        %v1709 = vpop.f32.mrb[0].mxu0
        %v1710 = vadd.f32 %v1637, %v1709
        %v1711 = vpop.f32.mrb[0].mxu0
        %1712 = vdwg.mxu0
        %1713 = vrot.lane.b32.xlu0 %v1063, 112
        %v1714 = vpop.permute.xlu0 %1713
        %1715 = vrot.lane.b32.xlu0 %v1144, 112
        %v1716 = vpop.permute.xlu0 %1715
        %v1717 = vsel %vm1232, %v1714, 0
        %v1719 = vsel %vm1232, %v1716, 0
        %1721 = vmatprep.subr.mxu0 0.0
        %1722 = vmatpush1.xpose.msra.mxu0 %v1719
        %1723 = vmatprep.subr.mxu0 0.0
        %1724 = vmatpush1.xpose.msra.mxu0 0.0
        %1725 = vmatprep.subr.mxu0 0.0
        %1726 = vmatpush1.xpose.msra.mxu0 0.0
        %1727 = vmatprep.subr.mxu0 0.0
        %1728 = vmatpush1.xpose.msra.mxu0 0.0
        %1729 = vmatprep.subr.mxu0 0.0
        %1730 = vmatpush1.xpose.msra.mxu0 0.0
        %1731 = vmatprep.subr.mxu0 0.0
        %1732 = vmatpush1.xpose.msra.mxu0 0.0
        %1733 = vmatprep.subr.mxu0 0.0
        %1734 = vmatpush1.xpose.msra.mxu0 0.0
        %1735 = vmatprep.subr.mxu0 0.0
        %1736 = vmatpush1.xpose.msra.mxu0 0.0
        %1737 = vmatprep.subr.mxu0 0.0
        %1738 = vmatpush1.xpose.msra.mxu0 0.0
        %1739 = vmatprep.subr.mxu0 0.0
        %1740 = vmatpush1.xpose.msra.mxu0 0.0
        %1741 = vmatprep.subr.mxu0 0.0
        %1742 = vmatpush1.xpose.msra.mxu0 0.0
        %1743 = vmatprep.subr.mxu0 0.0
        %1744 = vmatpush1.xpose.msra.mxu0 0.0
        %1745 = vmatprep.subr.mxu0 0.0
        %1746 = vmatpush1.xpose.msra.mxu0 0.0
        %1747 = vmatprep.subr.mxu0 0.0
        %1748 = vmatpush1.xpose.msra.mxu0 0.0
        %1749 = vmatprep.subr.mxu0 0.0
        %1750 = vmatpush1.xpose.msra.mxu0 0.0
        %1751 = vmatprep.subr.mxu0 0.0
        %1752 = vmatpush1.xpose.msra.mxu0 0.0
        %1753 = vmatprep.subr.mxu0 0.0
        %1754 = vmatpush1.xpose.msra.mxu0 0.0
        %1755 = vmatprep.subr.mxu0 0.0
        %1756 = vmatpush1.xpose.msra.mxu0 0.0
        %1757 = vmatprep.subr.mxu0 0.0
        %1758 = vmatpush1.xpose.msra.mxu0 0.0
        %1759 = vmatprep.subr.mxu0 0.0
        %1760 = vmatpush1.xpose.msra.mxu0 0.0
        %1761 = vmatprep.subr.mxu0 0.0
        %1762 = vmatpush1.xpose.msra.mxu0 0.0
        %1763 = vmatprep.subr.mxu0 0.0
        %1764 = vmatpush1.xpose.msra.mxu0 0.0
        %1765 = vmatprep.subr.mxu0 0.0
        %1766 = vmatpush1.xpose.msra.mxu0 0.0
        %1767 = vmatprep.subr.mxu0 0.0
        %1768 = vmatpush1.xpose.msra.mxu0 0.0
        %1769 = vmatprep.subr.mxu0 0.0
        %1770 = vmatpush1.xpose.msra.mxu0 0.0
        %1771 = vmatprep.subr.mxu0 0.0
        %1772 = vmatpush1.xpose.msra.mxu0 0.0
        %1773 = vmatprep.subr.mxu0 0.0
        %1774 = vmatpush1.xpose.msra.mxu0 0.0
        %1775 = vmatprep.subr.mxu0 0.0
        %1776 = vmatpush1.xpose.msra.mxu0 0.0
        %1777 = vmatprep.subr.mxu0 0.0
        %1778 = vmatpush1.xpose.msra.mxu0 0.0
        %1779 = vmatprep.subr.mxu0 0.0
        %1780 = vmatpush1.xpose.msra.mxu0 0.0
        %1781 = vmatprep.subr.mxu0 0.0
        %1782 = vmatpush1.xpose.msra.mxu0 0.0
        %1783 = vmatprep.subr.mxu0 0.0
        %1784 = vmatpush1.xpose.msra.mxu0 0.0
        %1785 = vmatprep.mubr.f32.mxu0 0.0
        %1786 = vmatmul.mubr.f32.gmra.mrb[0].mxu0 %v1717
        %v1787 = vpop.f32.mrb[0].mxu0
        %v1788 = vadd.f32 0.0, %v1787
        %v1789 = vpop.f32.mrb[0].mxu0
        %1790 = vdwg.mxu0
        %v1791 = vmul.f32 %v1788, 0.35355338
        %v1792 = vadd.f32 %v1791, %v1313
        %v1793 = vsel %vm1232, %v1792, -inf
        %1794 = vmax.xlane.f32.xlu0 %v1793
        %v1795 = vpop.xlane.xlu0 %1794
        %v1796 = vsub.f32 %v1792, %v1795
        %v1797 = vmul.f32 %v1796, 1.442695
        %v1798 = vpow.pop %v1797
        %v1799 = vsel %vm1232, %v1798, 0.0
        %1800 = vadd.xlane.f32.xlu0 %v1799
        %v1801 = vpop.xlane.xlu0 %1800
        %v1802 = vrcp.pop %v1801
        %v1803 = vmul.f32 %v1798, %v1802
        %1804 = vrot.lane.b32.xlu0 %v1225, 112
        %v1805 = vpop.permute.xlu0 %1804
        %v1808 = vsel %vm1232, %v1803, 0
        %1810 = vmatprep.subr.mxu0 0.0
        %1811 = vmatpush1.msra.mxu0 %v1805
        %1812 = vmatprep.subr.mxu0 0.0
        %1813 = vmatpush1.msra.mxu0 0.0
        %1814 = vmatprep.subr.mxu0 0.0
        %1815 = vmatpush1.msra.mxu0 0.0
        %1816 = vmatprep.subr.mxu0 0.0
        %1817 = vmatpush1.msra.mxu0 0.0
        %1818 = vmatprep.subr.mxu0 0.0
        %1819 = vmatpush1.msra.mxu0 0.0
        %1820 = vmatprep.subr.mxu0 0.0
        %1821 = vmatpush1.msra.mxu0 0.0
        %1822 = vmatprep.subr.mxu0 0.0
        %1823 = vmatpush1.msra.mxu0 0.0
        %1824 = vmatprep.subr.mxu0 0.0
        %1825 = vmatpush1.msra.mxu0 0.0
        %1826 = vmatprep.subr.mxu0 0.0
        %1827 = vmatpush1.msra.mxu0 0.0
        %1828 = vmatprep.subr.mxu0 0.0
        %1829 = vmatpush1.msra.mxu0 0.0
        %1830 = vmatprep.subr.mxu0 0.0
        %1831 = vmatpush1.msra.mxu0 0.0
        %1832 = vmatprep.subr.mxu0 0.0
        %1833 = vmatpush1.msra.mxu0 0.0
        %1834 = vmatprep.subr.mxu0 0.0
        %1835 = vmatpush1.msra.mxu0 0.0
        %1836 = vmatprep.subr.mxu0 0.0
        %1837 = vmatpush1.msra.mxu0 0.0
        %1838 = vmatprep.subr.mxu0 0.0
        %1839 = vmatpush1.msra.mxu0 0.0
        %1840 = vmatprep.subr.mxu0 0.0
        %1841 = vmatpush1.msra.mxu0 0.0
        %1842 = vmatprep.subr.mxu0 0.0
        %1843 = vmatpush1.msra.mxu0 0.0
        %1844 = vmatprep.subr.mxu0 0.0
        %1845 = vmatpush1.msra.mxu0 0.0
        %1846 = vmatprep.subr.mxu0 0.0
        %1847 = vmatpush1.msra.mxu0 0.0
        %1848 = vmatprep.subr.mxu0 0.0
        %1849 = vmatpush1.msra.mxu0 0.0
        %1850 = vmatprep.subr.mxu0 0.0
        %1851 = vmatpush1.msra.mxu0 0.0
        %1852 = vmatprep.subr.mxu0 0.0
        %1853 = vmatpush1.msra.mxu0 0.0
        %1854 = vmatprep.subr.mxu0 0.0
        %1855 = vmatpush1.msra.mxu0 0.0
        %1856 = vmatprep.subr.mxu0 0.0
        %1857 = vmatpush1.msra.mxu0 0.0
        %1858 = vmatprep.subr.mxu0 0.0
        %1859 = vmatpush1.msra.mxu0 0.0
        %1860 = vmatprep.subr.mxu0 0.0
        %1861 = vmatpush1.msra.mxu0 0.0
        %1862 = vmatprep.subr.mxu0 0.0
        %1863 = vmatpush1.msra.mxu0 0.0
        %1864 = vmatprep.subr.mxu0 0.0
        %1865 = vmatpush1.msra.mxu0 0.0
        %1866 = vmatprep.subr.mxu0 0.0
        %1867 = vmatpush1.msra.mxu0 0.0
        %1868 = vmatprep.subr.mxu0 0.0
        %1869 = vmatpush1.msra.mxu0 0.0
        %1870 = vmatprep.subr.mxu0 0.0
        %1871 = vmatpush1.msra.mxu0 0.0
        %1872 = vmatprep.subr.mxu0 0.0
        %1873 = vmatpush1.msra.mxu0 0.0
        %1874 = vmatprep.mubr.f32.mxu0 0.0
        %1875 = vmatmul.mubr.f32.gmra.mrb[0].mxu0 %v1808
        %v1876 = vpop.f32.mrb[0].mxu0
        %v1877 = vadd.f32 0.0, %v1876
        %v1878 = vpop.f32.mrb[0].mxu0
        %1879 = vdwg.mxu0
        %v1881 = vsel %vm1232, %v1877, 0
        %1883 = vmatprep.subr.mxu0 0.0
        %1884 = vmatpush1.msra.mxu0 %v1230
        %1885 = vmatprep.subr.mxu0 0.0
        %1886 = vmatpush1.msra.mxu0 0.0
        %1887 = vmatprep.subr.mxu0 0.0
        %1888 = vmatpush1.msra.mxu0 0.0
        %1889 = vmatprep.subr.mxu0 0.0
        %1890 = vmatpush1.msra.mxu0 0.0
        %1891 = vmatprep.subr.mxu0 0.0
        %1892 = vmatpush1.msra.mxu0 0.0
        %1893 = vmatprep.subr.mxu0 0.0
        %1894 = vmatpush1.msra.mxu0 0.0
        %1895 = vmatprep.subr.mxu0 0.0
        %1896 = vmatpush1.msra.mxu0 0.0
        %1897 = vmatprep.subr.mxu0 0.0
        %1898 = vmatpush1.msra.mxu0 0.0
        %1899 = vmatprep.subr.mxu0 0.0
        %1900 = vmatpush1.msra.mxu0 0.0
        %1901 = vmatprep.subr.mxu0 0.0
        %1902 = vmatpush1.msra.mxu0 0.0
        %1903 = vmatprep.subr.mxu0 0.0
        %1904 = vmatpush1.msra.mxu0 0.0
        %1905 = vmatprep.subr.mxu0 0.0
        %1906 = vmatpush1.msra.mxu0 0.0
        %1907 = vmatprep.subr.mxu0 0.0
        %1908 = vmatpush1.msra.mxu0 0.0
        %1909 = vmatprep.subr.mxu0 0.0
        %1910 = vmatpush1.msra.mxu0 0.0
        %1911 = vmatprep.subr.mxu0 0.0
        %1912 = vmatpush1.msra.mxu0 0.0
        %1913 = vmatprep.subr.mxu0 0.0
        %1914 = vmatpush1.msra.mxu0 0.0
        %1915 = vmatprep.subr.mxu0 0.0
        %1916 = vmatpush1.msra.mxu0 0.0
        %1917 = vmatprep.subr.mxu0 0.0
        %1918 = vmatpush1.msra.mxu0 0.0
        %1919 = vmatprep.subr.mxu0 0.0
        %1920 = vmatpush1.msra.mxu0 0.0
        %1921 = vmatprep.subr.mxu0 0.0
        %1922 = vmatpush1.msra.mxu0 0.0
        %1923 = vmatprep.subr.mxu0 0.0
        %1924 = vmatpush1.msra.mxu0 0.0
        %1925 = vmatprep.subr.mxu0 0.0
        %1926 = vmatpush1.msra.mxu0 0.0
        %1927 = vmatprep.subr.mxu0 0.0
        %1928 = vmatpush1.msra.mxu0 0.0
        %1929 = vmatprep.subr.mxu0 0.0
        %1930 = vmatpush1.msra.mxu0 0.0
        %1931 = vmatprep.subr.mxu0 0.0
        %1932 = vmatpush1.msra.mxu0 0.0
        %1933 = vmatprep.subr.mxu0 0.0
        %1934 = vmatpush1.msra.mxu0 0.0
        %1935 = vmatprep.subr.mxu0 0.0
        %1936 = vmatpush1.msra.mxu0 0.0
        %1937 = vmatprep.subr.mxu0 0.0
        %1938 = vmatpush1.msra.mxu0 0.0
        %1939 = vmatprep.subr.mxu0 0.0
        %1940 = vmatpush1.msra.mxu0 0.0
        %1941 = vmatprep.subr.mxu0 0.0
        %1942 = vmatpush1.msra.mxu0 0.0
        %1943 = vmatprep.subr.mxu0 0.0
        %1944 = vmatpush1.msra.mxu0 0.0
        %1945 = vmatprep.subr.mxu0 0.0
        %1946 = vmatpush1.msra.mxu0 0.0
        %1947 = vmatprep.mubr.f32.mxu0 0.0
        %1948 = vmatmul.mubr.f32.gmra.mrb[0].mxu0 %v1881
        %v1949 = vpop.f32.mrb[0].mxu0
        %v1950 = vadd.f32 0.0, %v1949
        %v1951 = vpop.f32.mrb[0].mxu0
        %1952 = vdwg.mxu0
        %v1953 = vadd.f32 %v1710, %v1950
        %1954 = vrot.lane.b32.xlu0 %v1063, 104
        %v1955 = vpop.permute.xlu0 %1954
        %1956 = vrot.lane.b32.xlu0 %v1144, 104
        %v1957 = vpop.permute.xlu0 %1956
        %v1958 = vsel %vm1232, %v1955, 0
        %v1960 = vsel %vm1232, %v1957, 0
        %1962 = vmatprep.subr.mxu0 0.0
        %1963 = vmatpush1.xpose.msra.mxu0 %v1960
        %1964 = vmatprep.subr.mxu0 0.0
        %1965 = vmatpush1.xpose.msra.mxu0 0.0
        %1966 = vmatprep.subr.mxu0 0.0
        %1967 = vmatpush1.xpose.msra.mxu0 0.0
        %1968 = vmatprep.subr.mxu0 0.0
        %1969 = vmatpush1.xpose.msra.mxu0 0.0
        %1970 = vmatprep.subr.mxu0 0.0
        %1971 = vmatpush1.xpose.msra.mxu0 0.0
        %1972 = vmatprep.subr.mxu0 0.0
        %1973 = vmatpush1.xpose.msra.mxu0 0.0
        %1974 = vmatprep.subr.mxu0 0.0
        %1975 = vmatpush1.xpose.msra.mxu0 0.0
        %1976 = vmatprep.subr.mxu0 0.0
        %1977 = vmatpush1.xpose.msra.mxu0 0.0
        %1978 = vmatprep.subr.mxu0 0.0
        %1979 = vmatpush1.xpose.msra.mxu0 0.0
        %1980 = vmatprep.subr.mxu0 0.0
        %1981 = vmatpush1.xpose.msra.mxu0 0.0
        %1982 = vmatprep.subr.mxu0 0.0
        %1983 = vmatpush1.xpose.msra.mxu0 0.0
        %1984 = vmatprep.subr.mxu0 0.0
        %1985 = vmatpush1.xpose.msra.mxu0 0.0
        %1986 = vmatprep.subr.mxu0 0.0
        %1987 = vmatpush1.xpose.msra.mxu0 0.0
        %1988 = vmatprep.subr.mxu0 0.0
        %1989 = vmatpush1.xpose.msra.mxu0 0.0
        %1990 = vmatprep.subr.mxu0 0.0
        %1991 = vmatpush1.xpose.msra.mxu0 0.0
        %1992 = vmatprep.subr.mxu0 0.0
        %1993 = vmatpush1.xpose.msra.mxu0 0.0
        %1994 = vmatprep.subr.mxu0 0.0
        %1995 = vmatpush1.xpose.msra.mxu0 0.0
        %1996 = vmatprep.subr.mxu0 0.0
        %1997 = vmatpush1.xpose.msra.mxu0 0.0
        %1998 = vmatprep.subr.mxu0 0.0
        %1999 = vmatpush1.xpose.msra.mxu0 0.0
        %2000 = vmatprep.subr.mxu0 0.0
        %2001 = vmatpush1.xpose.msra.mxu0 0.0
        %2002 = vmatprep.subr.mxu0 0.0
        %2003 = vmatpush1.xpose.msra.mxu0 0.0
        %2004 = vmatprep.subr.mxu0 0.0
        %2005 = vmatpush1.xpose.msra.mxu0 0.0
        %2006 = vmatprep.subr.mxu0 0.0
        %2007 = vmatpush1.xpose.msra.mxu0 0.0
        %2008 = vmatprep.subr.mxu0 0.0
        %2009 = vmatpush1.xpose.msra.mxu0 0.0
        %2010 = vmatprep.subr.mxu0 0.0
        %2011 = vmatpush1.xpose.msra.mxu0 0.0
        %2012 = vmatprep.subr.mxu0 0.0
        %2013 = vmatpush1.xpose.msra.mxu0 0.0
        %2014 = vmatprep.subr.mxu0 0.0
        %2015 = vmatpush1.xpose.msra.mxu0 0.0
        %2016 = vmatprep.subr.mxu0 0.0
        %2017 = vmatpush1.xpose.msra.mxu0 0.0
        %2018 = vmatprep.subr.mxu0 0.0
        %2019 = vmatpush1.xpose.msra.mxu0 0.0
        %2020 = vmatprep.subr.mxu0 0.0
        %2021 = vmatpush1.xpose.msra.mxu0 0.0
        %2022 = vmatprep.subr.mxu0 0.0
        %2023 = vmatpush1.xpose.msra.mxu0 0.0
        %2024 = vmatprep.subr.mxu0 0.0
        %2025 = vmatpush1.xpose.msra.mxu0 0.0
        %2026 = vmatprep.mubr.f32.mxu0 0.0
        %2027 = vmatmul.mubr.f32.gmra.mrb[0].mxu0 %v1958
        %v2028 = vpop.f32.mrb[0].mxu0
        %v2029 = vadd.f32 0.0, %v2028
        %v2030 = vpop.f32.mrb[0].mxu0
        %2031 = vdwg.mxu0
        %v2032 = vmul.f32 %v2029, 0.35355338
        %v2033 = vadd.f32 %v2032, %v1313
        %v2034 = vsel %vm1232, %v2033, -inf
        %2035 = vmax.xlane.f32.xlu0 %v2034
        %v2036 = vpop.xlane.xlu0 %2035
        %v2037 = vsub.f32 %v2033, %v2036
        %v2038 = vmul.f32 %v2037, 1.442695
        %v2039 = vpow.pop %v2038
        %v2040 = vsel %vm1232, %v2039, 0.0
        %2041 = vadd.xlane.f32.xlu0 %v2040
        %v2042 = vpop.xlane.xlu0 %2041
        %v2043 = vrcp.pop %v2042
        %v2044 = vmul.f32 %v2039, %v2043
        %2045 = vrot.lane.b32.xlu0 %v1225, 104
        %v2046 = vpop.permute.xlu0 %2045
        %v2049 = vsel %vm1232, %v2044, 0
        %2051 = vmatprep.subr.mxu0 0.0
        %2052 = vmatpush1.msra.mxu0 %v2046
        %2053 = vmatprep.subr.mxu0 0.0
        %2054 = vmatpush1.msra.mxu0 0.0
        %2055 = vmatprep.subr.mxu0 0.0
        %2056 = vmatpush1.msra.mxu0 0.0
        %2057 = vmatprep.subr.mxu0 0.0
        %2058 = vmatpush1.msra.mxu0 0.0
        %2059 = vmatprep.subr.mxu0 0.0
        %2060 = vmatpush1.msra.mxu0 0.0
        %2061 = vmatprep.subr.mxu0 0.0
        %2062 = vmatpush1.msra.mxu0 0.0
        %2063 = vmatprep.subr.mxu0 0.0
        %2064 = vmatpush1.msra.mxu0 0.0
        %2065 = vmatprep.subr.mxu0 0.0
        %2066 = vmatpush1.msra.mxu0 0.0
        %2067 = vmatprep.subr.mxu0 0.0
        %2068 = vmatpush1.msra.mxu0 0.0
        %2069 = vmatprep.subr.mxu0 0.0
        %2070 = vmatpush1.msra.mxu0 0.0
        %2071 = vmatprep.subr.mxu0 0.0
        %2072 = vmatpush1.msra.mxu0 0.0
        %2073 = vmatprep.subr.mxu0 0.0
        %2074 = vmatpush1.msra.mxu0 0.0
        %2075 = vmatprep.subr.mxu0 0.0
        %2076 = vmatpush1.msra.mxu0 0.0
        %2077 = vmatprep.subr.mxu0 0.0
        %2078 = vmatpush1.msra.mxu0 0.0
        %2079 = vmatprep.subr.mxu0 0.0
        %2080 = vmatpush1.msra.mxu0 0.0
        %2081 = vmatprep.subr.mxu0 0.0
        %2082 = vmatpush1.msra.mxu0 0.0
        %2083 = vmatprep.subr.mxu0 0.0
        %2084 = vmatpush1.msra.mxu0 0.0
        %2085 = vmatprep.subr.mxu0 0.0
        %2086 = vmatpush1.msra.mxu0 0.0
        %2087 = vmatprep.subr.mxu0 0.0
        %2088 = vmatpush1.msra.mxu0 0.0
        %2089 = vmatprep.subr.mxu0 0.0
        %2090 = vmatpush1.msra.mxu0 0.0
        %2091 = vmatprep.subr.mxu0 0.0
        %2092 = vmatpush1.msra.mxu0 0.0
        %2093 = vmatprep.subr.mxu0 0.0
        %2094 = vmatpush1.msra.mxu0 0.0
        %2095 = vmatprep.subr.mxu0 0.0
        %2096 = vmatpush1.msra.mxu0 0.0
        %2097 = vmatprep.subr.mxu0 0.0
        %2098 = vmatpush1.msra.mxu0 0.0
        %2099 = vmatprep.subr.mxu0 0.0
        %2100 = vmatpush1.msra.mxu0 0.0
        %2101 = vmatprep.subr.mxu0 0.0
        %2102 = vmatpush1.msra.mxu0 0.0
        %2103 = vmatprep.subr.mxu0 0.0
        %2104 = vmatpush1.msra.mxu0 0.0
        %2105 = vmatprep.subr.mxu0 0.0
        %2106 = vmatpush1.msra.mxu0 0.0
        %2107 = vmatprep.subr.mxu0 0.0
        %2108 = vmatpush1.msra.mxu0 0.0
        %2109 = vmatprep.subr.mxu0 0.0
        %2110 = vmatpush1.msra.mxu0 0.0
        %2111 = vmatprep.subr.mxu0 0.0
        %2112 = vmatpush1.msra.mxu0 0.0
        %2113 = vmatprep.subr.mxu0 0.0
        %2114 = vmatpush1.msra.mxu0 0.0
        %2115 = vmatprep.mubr.f32.mxu0 0.0
        %2116 = vmatmul.mubr.f32.gmra.mrb[0].mxu0 %v2049
        %v2117 = vpop.f32.mrb[0].mxu0
        %v2118 = vadd.f32 0.0, %v2117
        %v2119 = vpop.f32.mrb[0].mxu0
        %2120 = vdwg.mxu0
        %v2122 = vsel %vm1232, %v2118, 0
        %2124 = vmatprep.subr.mxu0 0.0
        %2125 = vmatpush1.msra.mxu0 %v1231
        %2126 = vmatprep.subr.mxu0 0.0
        %2127 = vmatpush1.msra.mxu0 0.0
        %2128 = vmatprep.subr.mxu0 0.0
        %2129 = vmatpush1.msra.mxu0 0.0
        %2130 = vmatprep.subr.mxu0 0.0
        %2131 = vmatpush1.msra.mxu0 0.0
        %2132 = vmatprep.subr.mxu0 0.0
        %2133 = vmatpush1.msra.mxu0 0.0
        %2134 = vmatprep.subr.mxu0 0.0
        %2135 = vmatpush1.msra.mxu0 0.0
        %2136 = vmatprep.subr.mxu0 0.0
        %2137 = vmatpush1.msra.mxu0 0.0
        %2138 = vmatprep.subr.mxu0 0.0
        %2139 = vmatpush1.msra.mxu0 0.0
        %2140 = vmatprep.subr.mxu0 0.0
        %2141 = vmatpush1.msra.mxu0 0.0
        %2142 = vmatprep.subr.mxu0 0.0
        %2143 = vmatpush1.msra.mxu0 0.0
        %2144 = vmatprep.subr.mxu0 0.0
        %2145 = vmatpush1.msra.mxu0 0.0
        %2146 = vmatprep.subr.mxu0 0.0
        %2147 = vmatpush1.msra.mxu0 0.0
        %2148 = vmatprep.subr.mxu0 0.0
        %2149 = vmatpush1.msra.mxu0 0.0
        %2150 = vmatprep.subr.mxu0 0.0
        %2151 = vmatpush1.msra.mxu0 0.0
        %2152 = vmatprep.subr.mxu0 0.0
        %2153 = vmatpush1.msra.mxu0 0.0
        %2154 = vmatprep.subr.mxu0 0.0
        %2155 = vmatpush1.msra.mxu0 0.0
        %2156 = vmatprep.subr.mxu0 0.0
        %2157 = vmatpush1.msra.mxu0 0.0
        %2158 = vmatprep.subr.mxu0 0.0
        %2159 = vmatpush1.msra.mxu0 0.0
        %2160 = vmatprep.subr.mxu0 0.0
        %2161 = vmatpush1.msra.mxu0 0.0
        %2162 = vmatprep.subr.mxu0 0.0
        %2163 = vmatpush1.msra.mxu0 0.0
        %2164 = vmatprep.subr.mxu0 0.0
        %2165 = vmatpush1.msra.mxu0 0.0
        %2166 = vmatprep.subr.mxu0 0.0
        %2167 = vmatpush1.msra.mxu0 0.0
        %2168 = vmatprep.subr.mxu0 0.0
        %2169 = vmatpush1.msra.mxu0 0.0
        %2170 = vmatprep.subr.mxu0 0.0
        %2171 = vmatpush1.msra.mxu0 0.0
        %2172 = vmatprep.subr.mxu0 0.0
        %2173 = vmatpush1.msra.mxu0 0.0
        %2174 = vmatprep.subr.mxu0 0.0
        %2175 = vmatpush1.msra.mxu0 0.0
        %2176 = vmatprep.subr.mxu0 0.0
        %2177 = vmatpush1.msra.mxu0 0.0
        %2178 = vmatprep.subr.mxu0 0.0
        %2179 = vmatpush1.msra.mxu0 0.0
        %2180 = vmatprep.subr.mxu0 0.0
        %2181 = vmatpush1.msra.mxu0 0.0
        %2182 = vmatprep.subr.mxu0 0.0
        %2183 = vmatpush1.msra.mxu0 0.0
        %2184 = vmatprep.subr.mxu0 0.0
        %2185 = vmatpush1.msra.mxu0 0.0
        %2186 = vmatprep.subr.mxu0 0.0
        %2187 = vmatpush1.msra.mxu0 0.0
        %2188 = vmatprep.mubr.f32.mxu0 0.0
        %2189 = vmatmul.mubr.f32.gmra.mrb[0].mxu0 %v2122
        %v2190 = vpop.f32.mrb[0].mxu0
        %v2191 = vadd.f32 0.0, %v2190
        %v2192 = vpop.f32.mrb[0].mxu0
        %2193 = vdwg.mxu0
        %v2194 = vadd.f32 %v1953, %v2191
        %v2195 = vld [vmem:[%s10] sm:$0x1]
        %v2197 = vlaneseq
        %v2198 = vshrl.u32 %v2197, 7
        %v2199 = vsub.s32 0, %v2198
        %v2200 = vrot.slane %v2195, %v2199
        %v2202 = vadd.f32 %v2194, %v2200
        %v2203 = vadd.f32 %v2202, %v897
        %v2204 = vld [vmem:[%s15] sm:$0x1]
        %v2205 = vld [vmem:[%s16] sm:$0x1]
        %v2206 = vsel %vm901, %v2203, 0.0
        %2207 = vadd.xlane.f32.xlu0 %v2206
        %v2208 = vpop.xlane.xlu0 %2207
        %v2209 = vrcp.pop 32.0
        %v2210 = vmul.f32 %v2208, %v2209
        %v2211 = vsub.f32 %v2203, %v2210
        %v2212 = vmul.f32 %v2211, %v2211
        %v2213 = vsel %vm901, %v2212, 0.0
        %2214 = vadd.xlane.f32.xlu0 %v2213
        %v2215 = vpop.xlane.xlu0 %2214
        %v2216 = vmul.f32 %v2215, %v2209
        %v2217 = vadd.f32 %v2216, 1e-05
        %v2218 = vrsqrt.pop %v2217
        %v2219 = vmul.f32 %v2211, %v2218
        %v2221 = vlaneseq
        %v2222 = vshrl.u32 %v2221, 7
        %v2223 = vsub.s32 0, %v2222
        %v2224 = vrot.slane %v2204, %v2223
        %v2226 = vmul.f32 %v2219, %v2224
        %v2228 = vlaneseq
        %v2229 = vshrl.u32 %v2228, 7
        %v2230 = vsub.s32 0, %v2229
        %v2231 = vrot.slane %v2205, %v2230
        %v2233 = vadd.f32 %v2226, %v2231
        %v2234 = vld [vmem:[#allocation12] sm:$0xff]
        %v2235 = vld [vmem:[#allocation12 + $0x8] sm:$0xff]
        %v2236 = vld [vmem:[#allocation12 + $0x10] sm:$0xff]
        %v2237 = vld [vmem:[#allocation12 + $0x18] sm:$0xff]
        %v2238 = vld [vmem:[%s12] sm:$0x1]
        %v2240 = vlaneseq
        %v2241 = vshrl.u32 %v2240, 7
        %v2242 = vsub.s32 0, %v2241
        %v2243 = vrot.slane %v2238, %v2242
        %v2246 = vsel %vm901, %v2233, 0
        %2248 = vmatprep.subr.mxu0 0.0
        %2249 = vmatpush1.msra.mxu0 %v2234
        %2250 = vmatprep.subr.mxu0 0.0
        %2251 = vmatpush1.msra.mxu0 %v2235
        %2252 = vmatprep.subr.mxu0 0.0
        %2253 = vmatpush1.msra.mxu0 %v2236
        %2254 = vmatprep.subr.mxu0 0.0
        %2255 = vmatpush1.msra.mxu0 %v2237
        %2256 = vmatprep.subr.mxu0 0.0
        %2257 = vmatpush1.msra.mxu0 0.0
        %2258 = vmatprep.subr.mxu0 0.0
        %2259 = vmatpush1.msra.mxu0 0.0
        %2260 = vmatprep.subr.mxu0 0.0
        %2261 = vmatpush1.msra.mxu0 0.0
        %2262 = vmatprep.subr.mxu0 0.0
        %2263 = vmatpush1.msra.mxu0 0.0
        %2264 = vmatprep.subr.mxu0 0.0
        %2265 = vmatpush1.msra.mxu0 0.0
        %2266 = vmatprep.subr.mxu0 0.0
        %2267 = vmatpush1.msra.mxu0 0.0
        %2268 = vmatprep.subr.mxu0 0.0
        %2269 = vmatpush1.msra.mxu0 0.0
        %2270 = vmatprep.subr.mxu0 0.0
        %2271 = vmatpush1.msra.mxu0 0.0
        %2272 = vmatprep.subr.mxu0 0.0
        %2273 = vmatpush1.msra.mxu0 0.0
        %2274 = vmatprep.subr.mxu0 0.0
        %2275 = vmatpush1.msra.mxu0 0.0
        %2276 = vmatprep.subr.mxu0 0.0
        %2277 = vmatpush1.msra.mxu0 0.0
        %2278 = vmatprep.subr.mxu0 0.0
        %2279 = vmatpush1.msra.mxu0 0.0
        %2280 = vmatprep.subr.mxu0 0.0
        %2281 = vmatpush1.msra.mxu0 0.0
        %2282 = vmatprep.subr.mxu0 0.0
        %2283 = vmatpush1.msra.mxu0 0.0
        %2284 = vmatprep.subr.mxu0 0.0
        %2285 = vmatpush1.msra.mxu0 0.0
        %2286 = vmatprep.subr.mxu0 0.0
        %2287 = vmatpush1.msra.mxu0 0.0
        %2288 = vmatprep.subr.mxu0 0.0
        %2289 = vmatpush1.msra.mxu0 0.0
        %2290 = vmatprep.subr.mxu0 0.0
        %2291 = vmatpush1.msra.mxu0 0.0
        %2292 = vmatprep.subr.mxu0 0.0
        %2293 = vmatpush1.msra.mxu0 0.0
        %2294 = vmatprep.subr.mxu0 0.0
        %2295 = vmatpush1.msra.mxu0 0.0
        %2296 = vmatprep.subr.mxu0 0.0
        %2297 = vmatpush1.msra.mxu0 0.0
        %2298 = vmatprep.subr.mxu0 0.0
        %2299 = vmatpush1.msra.mxu0 0.0
        %2300 = vmatprep.subr.mxu0 0.0
        %2301 = vmatpush1.msra.mxu0 0.0
        %2302 = vmatprep.subr.mxu0 0.0
        %2303 = vmatpush1.msra.mxu0 0.0
        %2304 = vmatprep.subr.mxu0 0.0
        %2305 = vmatpush1.msra.mxu0 0.0
        %2306 = vmatprep.subr.mxu0 0.0
        %2307 = vmatpush1.msra.mxu0 0.0
        %2308 = vmatprep.subr.mxu0 0.0
        %2309 = vmatpush1.msra.mxu0 0.0
        %2310 = vmatprep.subr.mxu0 0.0
        %2311 = vmatpush1.msra.mxu0 0.0
        %2312 = vmatprep.mubr.f32.mxu0 0.0
        %2313 = vmatmul.mubr.f32.gmra.mrb[0].mxu0 %v2246
        %v2314 = vpop.f32.mrb[0].mxu0
        %v2315 = vadd.f32 %v2243, %v2314
        %v2316 = vpop.f32.mrb[0].mxu0
        %2317 = vdwg.mxu0
        %v2318 = vmax.f32 %v2315, 0.0
        %v2319 = vld [vmem:[#allocation13] sm:$0xff]
        %v2320 = vld [vmem:[#allocation13 + $0x8] sm:$0xff]
        %v2321 = vld [vmem:[#allocation13 + $0x10] sm:$0xff]
        %v2322 = vld [vmem:[#allocation13 + $0x18] sm:$0xff]
        %v2323 = vld [vmem:[#allocation13 + $0x20] sm:$0xff]
        %v2324 = vld [vmem:[#allocation13 + $0x28] sm:$0xff]
        %v2325 = vld [vmem:[#allocation13 + $0x30] sm:$0xff]
        %v2326 = vld [vmem:[#allocation13 + $0x38] sm:$0xff]
        %v2327 = vld [vmem:[%s14] sm:$0x1]
        %v2329 = vlaneseq
        %v2330 = vshrl.u32 %v2329, 7
        %v2331 = vsub.s32 0, %v2330
        %v2332 = vrot.slane %v2327, %v2331
        %v2335 = vsel %vm826, %v2318, 0
        %2337 = vmatprep.subr.mxu0 0.0
        %2338 = vmatpush1.msra.mxu0 %v2319
        %2339 = vmatprep.subr.mxu0 0.0
        %2340 = vmatpush1.msra.mxu0 %v2320
        %2341 = vmatprep.subr.mxu0 0.0
        %2342 = vmatpush1.msra.mxu0 %v2321
        %2343 = vmatprep.subr.mxu0 0.0
        %2344 = vmatpush1.msra.mxu0 %v2322
        %2345 = vmatprep.subr.mxu0 0.0
        %2346 = vmatpush1.msra.mxu0 %v2323
        %2347 = vmatprep.subr.mxu0 0.0
        %2348 = vmatpush1.msra.mxu0 %v2324
        %2349 = vmatprep.subr.mxu0 0.0
        %2350 = vmatpush1.msra.mxu0 %v2325
        %2351 = vmatprep.subr.mxu0 0.0
        %2352 = vmatpush1.msra.mxu0 %v2326
        %2353 = vmatprep.subr.mxu0 0.0
        %2354 = vmatpush1.msra.mxu0 0.0
        %2355 = vmatprep.subr.mxu0 0.0
        %2356 = vmatpush1.msra.mxu0 0.0
        %2357 = vmatprep.subr.mxu0 0.0
        %2358 = vmatpush1.msra.mxu0 0.0
        %2359 = vmatprep.subr.mxu0 0.0
        %2360 = vmatpush1.msra.mxu0 0.0
        %2361 = vmatprep.subr.mxu0 0.0
        %2362 = vmatpush1.msra.mxu0 0.0
        %2363 = vmatprep.subr.mxu0 0.0
        %2364 = vmatpush1.msra.mxu0 0.0
        %2365 = vmatprep.subr.mxu0 0.0
        %2366 = vmatpush1.msra.mxu0 0.0
        %2367 = vmatprep.subr.mxu0 0.0
        %2368 = vmatpush1.msra.mxu0 0.0
        %2369 = vmatprep.subr.mxu0 0.0
        %2370 = vmatpush1.msra.mxu0 0.0
        %2371 = vmatprep.subr.mxu0 0.0
        %2372 = vmatpush1.msra.mxu0 0.0
        %2373 = vmatprep.subr.mxu0 0.0
        %2374 = vmatpush1.msra.mxu0 0.0
        %2375 = vmatprep.subr.mxu0 0.0
        %2376 = vmatpush1.msra.mxu0 0.0
        %2377 = vmatprep.subr.mxu0 0.0
        %2378 = vmatpush1.msra.mxu0 0.0
        %2379 = vmatprep.subr.mxu0 0.0
        %2380 = vmatpush1.msra.mxu0 0.0
        %2381 = vmatprep.subr.mxu0 0.0
        %2382 = vmatpush1.msra.mxu0 0.0
        %2383 = vmatprep.subr.mxu0 0.0
        %2384 = vmatpush1.msra.mxu0 0.0
        %2385 = vmatprep.subr.mxu0 0.0
        %2386 = vmatpush1.msra.mxu0 0.0
        %2387 = vmatprep.subr.mxu0 0.0
        %2388 = vmatpush1.msra.mxu0 0.0
        %2389 = vmatprep.subr.mxu0 0.0
        %2390 = vmatpush1.msra.mxu0 0.0
        %2391 = vmatprep.subr.mxu0 0.0
        %2392 = vmatpush1.msra.mxu0 0.0
        %2393 = vmatprep.subr.mxu0 0.0
        %2394 = vmatpush1.msra.mxu0 0.0
        %2395 = vmatprep.subr.mxu0 0.0
        %2396 = vmatpush1.msra.mxu0 0.0
        %2397 = vmatprep.subr.mxu0 0.0
        %2398 = vmatpush1.msra.mxu0 0.0
        %2399 = vmatprep.subr.mxu0 0.0
        %2400 = vmatpush1.msra.mxu0 0.0
        %2401 = vmatprep.mubr.f32.mxu0 0.0
        %2402 = vmatmul.mubr.f32.gmra.mrb[0].mxu0 %v2335
        %v2403 = vpop.f32.mrb[0].mxu0
        %v2404 = vadd.f32 %v2332, %v2403
        %v2405 = vpop.f32.mrb[0].mxu0
        %2406 = vdwg.mxu0
        %v2407 = vadd.f32 %v2404, %v2233
        %v2408 = vld [vmem:[%s17] sm:$0x1]
        %v2409 = vld [vmem:[%s18] sm:$0x1]
        %v2410 = vsel %vm901, %v2407, 0.0
        %2411 = vadd.xlane.f32.xlu0 %v2410
        %v2412 = vpop.xlane.xlu0 %2411
        %v2413 = vmul.f32 %v2412, %v2209
        %v2414 = vsub.f32 %v2407, %v2413
        %v2415 = vmul.f32 %v2414, %v2414
        %v2416 = vsel %vm901, %v2415, 0.0
        %2417 = vadd.xlane.f32.xlu0 %v2416
        %v2418 = vpop.xlane.xlu0 %2417
        %v2419 = vmul.f32 %v2418, %v2209
        %v2420 = vadd.f32 %v2419, 1e-05
        %v2421 = vrsqrt.pop %v2420
        %v2422 = vmul.f32 %v2414, %v2421
        %v2424 = vlaneseq
        %v2425 = vshrl.u32 %v2424, 7
        %v2426 = vsub.s32 0, %v2425
        %v2427 = vrot.slane %v2408, %v2426
        %v2429 = vmul.f32 %v2422, %v2427
        %v2431 = vlaneseq
        %v2432 = vshrl.u32 %v2431, 7
        %v2433 = vsub.s32 0, %v2432
        %v2434 = vrot.slane %v2409, %v2433
        %v2436 = vadd.f32 %v2429, %v2434
        %s2437 = scalar_lea.vmem [#allocation6], 32
        %v2438 = vld [vmem:[%s2437] sm:$0xff]
        %v2439 = vld [vmem:[%s2437 + $0x8] sm:$0xff]
        %v2440 = vld [vmem:[%s2437 + $0x10] sm:$0xff]
        %v2441 = vld [vmem:[%s2437 + $0x18] sm:$0xff]
        %s2442 = scalar_lea.vmem %s4, 1
        %v2443 = vld [vmem:[%s2442] sm:$0x1]
        %v2445 = vlaneseq
        %v2446 = vshrl.u32 %v2445, 7
        %v2447 = vsub.s32 0, %v2446
        %v2448 = vrot.slane %v2443, %v2447
        %v2451 = vsel %vm901, %v2436, 0
        %2453 = vmatprep.subr.mxu0 0.0
        %2454 = vmatpush1.msra.mxu0 %v2438
        %2455 = vmatprep.subr.mxu0 0.0
        %2456 = vmatpush1.msra.mxu0 %v2439
        %2457 = vmatprep.subr.mxu0 0.0
        %2458 = vmatpush1.msra.mxu0 %v2440
        %2459 = vmatprep.subr.mxu0 0.0
        %2460 = vmatpush1.msra.mxu0 %v2441
        %2461 = vmatprep.subr.mxu0 0.0
        %2462 = vmatpush1.msra.mxu0 0.0
        %2463 = vmatprep.subr.mxu0 0.0
        %2464 = vmatpush1.msra.mxu0 0.0
        %2465 = vmatprep.subr.mxu0 0.0
        %2466 = vmatpush1.msra.mxu0 0.0
        %2467 = vmatprep.subr.mxu0 0.0
        %2468 = vmatpush1.msra.mxu0 0.0
        %2469 = vmatprep.subr.mxu0 0.0
        %2470 = vmatpush1.msra.mxu0 0.0
        %2471 = vmatprep.subr.mxu0 0.0
        %2472 = vmatpush1.msra.mxu0 0.0
        %2473 = vmatprep.subr.mxu0 0.0
        %2474 = vmatpush1.msra.mxu0 0.0
        %2475 = vmatprep.subr.mxu0 0.0
        %2476 = vmatpush1.msra.mxu0 0.0
        %2477 = vmatprep.subr.mxu0 0.0
        %2478 = vmatpush1.msra.mxu0 0.0
        %2479 = vmatprep.subr.mxu0 0.0
        %2480 = vmatpush1.msra.mxu0 0.0
        %2481 = vmatprep.subr.mxu0 0.0
        %2482 = vmatpush1.msra.mxu0 0.0
        %2483 = vmatprep.subr.mxu0 0.0
        %2484 = vmatpush1.msra.mxu0 0.0
        %2485 = vmatprep.subr.mxu0 0.0
        %2486 = vmatpush1.msra.mxu0 0.0
        %2487 = vmatprep.subr.mxu0 0.0
        %2488 = vmatpush1.msra.mxu0 0.0
        %2489 = vmatprep.subr.mxu0 0.0
        %2490 = vmatpush1.msra.mxu0 0.0
        %2491 = vmatprep.subr.mxu0 0.0
        %2492 = vmatpush1.msra.mxu0 0.0
        %2493 = vmatprep.subr.mxu0 0.0
        %2494 = vmatpush1.msra.mxu0 0.0
        %2495 = vmatprep.subr.mxu0 0.0
        %2496 = vmatpush1.msra.mxu0 0.0
        %2497 = vmatprep.subr.mxu0 0.0
        %2498 = vmatpush1.msra.mxu0 0.0
        %2499 = vmatprep.subr.mxu0 0.0
        %2500 = vmatpush1.msra.mxu0 0.0
        %2501 = vmatprep.subr.mxu0 0.0
        %2502 = vmatpush1.msra.mxu0 0.0
        %2503 = vmatprep.subr.mxu0 0.0
        %2504 = vmatpush1.msra.mxu0 0.0
        %2505 = vmatprep.subr.mxu0 0.0
        %2506 = vmatpush1.msra.mxu0 0.0
        %2507 = vmatprep.subr.mxu0 0.0
        %2508 = vmatpush1.msra.mxu0 0.0
        %2509 = vmatprep.subr.mxu0 0.0
        %2510 = vmatpush1.msra.mxu0 0.0
        %2511 = vmatprep.subr.mxu0 0.0
        %2512 = vmatpush1.msra.mxu0 0.0
        %2513 = vmatprep.subr.mxu0 0.0
        %2514 = vmatpush1.msra.mxu0 0.0
        %2515 = vmatprep.subr.mxu0 0.0
        %2516 = vmatpush1.msra.mxu0 0.0
        %2517 = vmatprep.mubr.f32.mxu0 0.0
        %2518 = vmatmul.mubr.f32.gmra.mrb[0].mxu0 %v2451
        %v2519 = vpop.f32.mrb[0].mxu0
        %v2520 = vadd.f32 %v2448, %v2519
        %v2521 = vpop.f32.mrb[0].mxu0
        %2522 = vdwg.mxu0
        %s2523 = scalar_lea.vmem [#allocation7], 32
        %v2524 = vld [vmem:[%s2523] sm:$0xff]
        %v2525 = vld [vmem:[%s2523 + $0x8] sm:$0xff]
        %v2526 = vld [vmem:[%s2523 + $0x10] sm:$0xff]
        %v2527 = vld [vmem:[%s2523 + $0x18] sm:$0xff]
        %s2528 = scalar_lea.vmem %s6, 1
        %v2529 = vld [vmem:[%s2528] sm:$0x1]
        %v2531 = vlaneseq
        %v2532 = vshrl.u32 %v2531, 7
        %v2533 = vsub.s32 0, %v2532
        %v2534 = vrot.slane %v2529, %v2533
        %2536 = vmatprep.subr.mxu0 0.0
        %2537 = vmatpush1.msra.mxu0 %v2524
        %2538 = vmatprep.subr.mxu0 0.0
        %2539 = vmatpush1.msra.mxu0 %v2525
        %2540 = vmatprep.subr.mxu0 0.0
        %2541 = vmatpush1.msra.mxu0 %v2526
        %2542 = vmatprep.subr.mxu0 0.0
        %2543 = vmatpush1.msra.mxu0 %v2527
        %2544 = vmatprep.subr.mxu0 0.0
        %2545 = vmatpush1.msra.mxu0 0.0
        %2546 = vmatprep.subr.mxu0 0.0
        %2547 = vmatpush1.msra.mxu0 0.0
        %2548 = vmatprep.subr.mxu0 0.0
        %2549 = vmatpush1.msra.mxu0 0.0
        %2550 = vmatprep.subr.mxu0 0.0
        %2551 = vmatpush1.msra.mxu0 0.0
        %2552 = vmatprep.subr.mxu0 0.0
        %2553 = vmatpush1.msra.mxu0 0.0
        %2554 = vmatprep.subr.mxu0 0.0
        %2555 = vmatpush1.msra.mxu0 0.0
        %2556 = vmatprep.subr.mxu0 0.0
        %2557 = vmatpush1.msra.mxu0 0.0
        %2558 = vmatprep.subr.mxu0 0.0
        %2559 = vmatpush1.msra.mxu0 0.0
        %2560 = vmatprep.subr.mxu0 0.0
        %2561 = vmatpush1.msra.mxu0 0.0
        %2562 = vmatprep.subr.mxu0 0.0
        %2563 = vmatpush1.msra.mxu0 0.0
        %2564 = vmatprep.subr.mxu0 0.0
        %2565 = vmatpush1.msra.mxu0 0.0
        %2566 = vmatprep.subr.mxu0 0.0
        %2567 = vmatpush1.msra.mxu0 0.0
        %2568 = vmatprep.subr.mxu0 0.0
        %2569 = vmatpush1.msra.mxu0 0.0
        %2570 = vmatprep.subr.mxu0 0.0
        %2571 = vmatpush1.msra.mxu0 0.0
        %2572 = vmatprep.subr.mxu0 0.0
        %2573 = vmatpush1.msra.mxu0 0.0
        %2574 = vmatprep.subr.mxu0 0.0
        %2575 = vmatpush1.msra.mxu0 0.0
        %2576 = vmatprep.subr.mxu0 0.0
        %2577 = vmatpush1.msra.mxu0 0.0
        %2578 = vmatprep.subr.mxu0 0.0
        %2579 = vmatpush1.msra.mxu0 0.0
        %2580 = vmatprep.subr.mxu0 0.0
        %2581 = vmatpush1.msra.mxu0 0.0
        %2582 = vmatprep.subr.mxu0 0.0
        %2583 = vmatpush1.msra.mxu0 0.0
        %2584 = vmatprep.subr.mxu0 0.0
        %2585 = vmatpush1.msra.mxu0 0.0
        %2586 = vmatprep.subr.mxu0 0.0
        %2587 = vmatpush1.msra.mxu0 0.0
        %2588 = vmatprep.subr.mxu0 0.0
        %2589 = vmatpush1.msra.mxu0 0.0
        %2590 = vmatprep.subr.mxu0 0.0
        %2591 = vmatpush1.msra.mxu0 0.0
        %2592 = vmatprep.subr.mxu0 0.0
        %2593 = vmatpush1.msra.mxu0 0.0
        %2594 = vmatprep.subr.mxu0 0.0
        %2595 = vmatpush1.msra.mxu0 0.0
        %2596 = vmatprep.subr.mxu0 0.0
        %2597 = vmatpush1.msra.mxu0 0.0
        %2598 = vmatprep.subr.mxu0 0.0
        %2599 = vmatpush1.msra.mxu0 0.0
        %2600 = vmatprep.mubr.f32.mxu0 0.0
        %2601 = vmatmul.mubr.f32.gmra.mrb[0].mxu0 %v2451
        %v2602 = vpop.f32.mrb[0].mxu0
        %v2603 = vadd.f32 %v2534, %v2602
        %v2604 = vpop.f32.mrb[0].mxu0
        %2605 = vdwg.mxu0
        %s2606 = scalar_lea.vmem [#allocation9], 32
        %v2607 = vld [vmem:[%s2606] sm:$0xff]
        %v2608 = vld [vmem:[%s2606 + $0x8] sm:$0xff]
        %v2609 = vld [vmem:[%s2606 + $0x10] sm:$0xff]
        %v2610 = vld [vmem:[%s2606 + $0x18] sm:$0xff]
        %s2611 = scalar_lea.vmem %s8, 1
        %v2612 = vld [vmem:[%s2611] sm:$0x1]
        %v2614 = vlaneseq
        %v2615 = vshrl.u32 %v2614, 7
        %v2616 = vsub.s32 0, %v2615
        %v2617 = vrot.slane %v2612, %v2616
        %2619 = vmatprep.subr.mxu0 0.0
        %2620 = vmatpush1.msra.mxu0 %v2607
        %2621 = vmatprep.subr.mxu0 0.0
        %2622 = vmatpush1.msra.mxu0 %v2608
        %2623 = vmatprep.subr.mxu0 0.0
        %2624 = vmatpush1.msra.mxu0 %v2609
        %2625 = vmatprep.subr.mxu0 0.0
        %2626 = vmatpush1.msra.mxu0 %v2610
        %2627 = vmatprep.subr.mxu0 0.0
        %2628 = vmatpush1.msra.mxu0 0.0
        %2629 = vmatprep.subr.mxu0 0.0
        %2630 = vmatpush1.msra.mxu0 0.0
        %2631 = vmatprep.subr.mxu0 0.0
        %2632 = vmatpush1.msra.mxu0 0.0
        %2633 = vmatprep.subr.mxu0 0.0
        %2634 = vmatpush1.msra.mxu0 0.0
        %2635 = vmatprep.subr.mxu0 0.0
        %2636 = vmatpush1.msra.mxu0 0.0
        %2637 = vmatprep.subr.mxu0 0.0
        %2638 = vmatpush1.msra.mxu0 0.0
        %2639 = vmatprep.subr.mxu0 0.0
        %2640 = vmatpush1.msra.mxu0 0.0
        %2641 = vmatprep.subr.mxu0 0.0
        %2642 = vmatpush1.msra.mxu0 0.0
        %2643 = vmatprep.subr.mxu0 0.0
        %2644 = vmatpush1.msra.mxu0 0.0
        %2645 = vmatprep.subr.mxu0 0.0
        %2646 = vmatpush1.msra.mxu0 0.0
        %2647 = vmatprep.subr.mxu0 0.0
        %2648 = vmatpush1.msra.mxu0 0.0
        %2649 = vmatprep.subr.mxu0 0.0
        %2650 = vmatpush1.msra.mxu0 0.0
        %2651 = vmatprep.subr.mxu0 0.0
        %2652 = vmatpush1.msra.mxu0 0.0
        %2653 = vmatprep.subr.mxu0 0.0
        %2654 = vmatpush1.msra.mxu0 0.0
        %2655 = vmatprep.subr.mxu0 0.0
        %2656 = vmatpush1.msra.mxu0 0.0
        %2657 = vmatprep.subr.mxu0 0.0
        %2658 = vmatpush1.msra.mxu0 0.0
        %2659 = vmatprep.subr.mxu0 0.0
        %2660 = vmatpush1.msra.mxu0 0.0
        %2661 = vmatprep.subr.mxu0 0.0
        %2662 = vmatpush1.msra.mxu0 0.0
        %2663 = vmatprep.subr.mxu0 0.0
        %2664 = vmatpush1.msra.mxu0 0.0
        %2665 = vmatprep.subr.mxu0 0.0
        %2666 = vmatpush1.msra.mxu0 0.0
        %2667 = vmatprep.subr.mxu0 0.0
        %2668 = vmatpush1.msra.mxu0 0.0
        %2669 = vmatprep.subr.mxu0 0.0
        %2670 = vmatpush1.msra.mxu0 0.0
        %2671 = vmatprep.subr.mxu0 0.0
        %2672 = vmatpush1.msra.mxu0 0.0
        %2673 = vmatprep.subr.mxu0 0.0
        %2674 = vmatpush1.msra.mxu0 0.0
        %2675 = vmatprep.subr.mxu0 0.0
        %2676 = vmatpush1.msra.mxu0 0.0
        %2677 = vmatprep.subr.mxu0 0.0
        %2678 = vmatpush1.msra.mxu0 0.0
        %2679 = vmatprep.subr.mxu0 0.0
        %2680 = vmatpush1.msra.mxu0 0.0
        %2681 = vmatprep.subr.mxu0 0.0
        %2682 = vmatpush1.msra.mxu0 0.0
        %2683 = vmatprep.mubr.f32.mxu0 0.0
        %2684 = vmatmul.mubr.f32.gmra.mrb[0].mxu0 %v2451
        %v2685 = vpop.f32.mrb[0].mxu0
        %v2686 = vadd.f32 %v2617, %v2685
        %v2687 = vpop.f32.mrb[0].mxu0
        %2688 = vdwg.mxu0
        %s2689 = scalar_lea.vmem [#allocation10], 32
        %v2690 = vld [vmem:[%s2689] sm:$0xff]
        %v2691 = vld [vmem:[%s2689 + $0x8] sm:$0xff]
        %v2692 = vld [vmem:[%s2689 + $0x10] sm:$0xff]
        %v2693 = vld [vmem:[%s2689 + $0x18] sm:$0xff]
        %v2695 = vsel %vm1232, %v2520, 0
        %v2698 = vsel %vm1232, %v2603, 0
        %2700 = vmatprep.subr.mxu0 0.0
        %2701 = vmatpush1.xpose.msra.mxu0 %v2698
        %2702 = vmatprep.subr.mxu0 0.0
        %2703 = vmatpush1.xpose.msra.mxu0 0.0
        %2704 = vmatprep.subr.mxu0 0.0
        %2705 = vmatpush1.xpose.msra.mxu0 0.0
        %2706 = vmatprep.subr.mxu0 0.0
        %2707 = vmatpush1.xpose.msra.mxu0 0.0
        %2708 = vmatprep.subr.mxu0 0.0
        %2709 = vmatpush1.xpose.msra.mxu0 0.0
        %2710 = vmatprep.subr.mxu0 0.0
        %2711 = vmatpush1.xpose.msra.mxu0 0.0
        %2712 = vmatprep.subr.mxu0 0.0
        %2713 = vmatpush1.xpose.msra.mxu0 0.0
        %2714 = vmatprep.subr.mxu0 0.0
        %2715 = vmatpush1.xpose.msra.mxu0 0.0
        %2716 = vmatprep.subr.mxu0 0.0
        %2717 = vmatpush1.xpose.msra.mxu0 0.0
        %2718 = vmatprep.subr.mxu0 0.0
        %2719 = vmatpush1.xpose.msra.mxu0 0.0
        %2720 = vmatprep.subr.mxu0 0.0
        %2721 = vmatpush1.xpose.msra.mxu0 0.0
        %2722 = vmatprep.subr.mxu0 0.0
        %2723 = vmatpush1.xpose.msra.mxu0 0.0
        %2724 = vmatprep.subr.mxu0 0.0
        %2725 = vmatpush1.xpose.msra.mxu0 0.0
        %2726 = vmatprep.subr.mxu0 0.0
        %2727 = vmatpush1.xpose.msra.mxu0 0.0
        %2728 = vmatprep.subr.mxu0 0.0
        %2729 = vmatpush1.xpose.msra.mxu0 0.0
        %2730 = vmatprep.subr.mxu0 0.0
        %2731 = vmatpush1.xpose.msra.mxu0 0.0
        %2732 = vmatprep.subr.mxu0 0.0
        %2733 = vmatpush1.xpose.msra.mxu0 0.0
        %2734 = vmatprep.subr.mxu0 0.0
        %2735 = vmatpush1.xpose.msra.mxu0 0.0
        %2736 = vmatprep.subr.mxu0 0.0
        %2737 = vmatpush1.xpose.msra.mxu0 0.0
        %2738 = vmatprep.subr.mxu0 0.0
        %2739 = vmatpush1.xpose.msra.mxu0 0.0
        %2740 = vmatprep.subr.mxu0 0.0
        %2741 = vmatpush1.xpose.msra.mxu0 0.0
        %2742 = vmatprep.subr.mxu0 0.0
        %2743 = vmatpush1.xpose.msra.mxu0 0.0
        %2744 = vmatprep.subr.mxu0 0.0
        %2745 = vmatpush1.xpose.msra.mxu0 0.0
        %2746 = vmatprep.subr.mxu0 0.0
        %2747 = vmatpush1.xpose.msra.mxu0 0.0
        %2748 = vmatprep.subr.mxu0 0.0
        %2749 = vmatpush1.xpose.msra.mxu0 0.0
        %2750 = vmatprep.subr.mxu0 0.0
        %2751 = vmatpush1.xpose.msra.mxu0 0.0
        %2752 = vmatprep.subr.mxu0 0.0
        %2753 = vmatpush1.xpose.msra.mxu0 0.0
        %2754 = vmatprep.subr.mxu0 0.0
        %2755 = vmatpush1.xpose.msra.mxu0 0.0
        %2756 = vmatprep.subr.mxu0 0.0
        %2757 = vmatpush1.xpose.msra.mxu0 0.0
        %2758 = vmatprep.subr.mxu0 0.0
        %2759 = vmatpush1.xpose.msra.mxu0 0.0
        %2760 = vmatprep.subr.mxu0 0.0
        %2761 = vmatpush1.xpose.msra.mxu0 0.0
        %2762 = vmatprep.subr.mxu0 0.0
        %2763 = vmatpush1.xpose.msra.mxu0 0.0
        %2764 = vmatprep.mubr.f32.mxu0 0.0
        %2765 = vmatmul.mubr.f32.gmra.mrb[0].mxu0 %v2695
        %v2766 = vpop.f32.mrb[0].mxu0
        %v2767 = vadd.f32 0.0, %v2766
        %v2768 = vpop.f32.mrb[0].mxu0
        %2769 = vdwg.mxu0
        %v2770 = vmul.f32 %v2767, 0.35355338
        %v2771 = vadd.f32 %v2770, %v1313
        %v2772 = vsel %vm1232, %v2771, -inf
        %2773 = vmax.xlane.f32.xlu0 %v2772
        %v2774 = vpop.xlane.xlu0 %2773
        %v2775 = vsub.f32 %v2771, %v2774
        %v2776 = vmul.f32 %v2775, 1.442695
        %v2777 = vpow.pop %v2776
        %v2778 = vsel %vm1232, %v2777, 0.0
        %2779 = vadd.xlane.f32.xlu0 %v2778
        %v2780 = vpop.xlane.xlu0 %2779
        %v2781 = vrcp.pop %v2780
        %v2782 = vmul.f32 %v2777, %v2781
        %v2784 = vsel %vm1232, %v2782, 0
        %2786 = vmatprep.subr.mxu0 0.0
        %2787 = vmatpush1.msra.mxu0 %v2686
        %2788 = vmatprep.subr.mxu0 0.0
        %2789 = vmatpush1.msra.mxu0 0.0
        %2790 = vmatprep.subr.mxu0 0.0
        %2791 = vmatpush1.msra.mxu0 0.0
        %2792 = vmatprep.subr.mxu0 0.0
        %2793 = vmatpush1.msra.mxu0 0.0
        %2794 = vmatprep.subr.mxu0 0.0
        %2795 = vmatpush1.msra.mxu0 0.0
        %2796 = vmatprep.subr.mxu0 0.0
        %2797 = vmatpush1.msra.mxu0 0.0
        %2798 = vmatprep.subr.mxu0 0.0
        %2799 = vmatpush1.msra.mxu0 0.0
        %2800 = vmatprep.subr.mxu0 0.0
        %2801 = vmatpush1.msra.mxu0 0.0
        %2802 = vmatprep.subr.mxu0 0.0
        %2803 = vmatpush1.msra.mxu0 0.0
        %2804 = vmatprep.subr.mxu0 0.0
        %2805 = vmatpush1.msra.mxu0 0.0
        %2806 = vmatprep.subr.mxu0 0.0
        %2807 = vmatpush1.msra.mxu0 0.0
        %2808 = vmatprep.subr.mxu0 0.0
        %2809 = vmatpush1.msra.mxu0 0.0
        %2810 = vmatprep.subr.mxu0 0.0
        %2811 = vmatpush1.msra.mxu0 0.0
        %2812 = vmatprep.subr.mxu0 0.0
        %2813 = vmatpush1.msra.mxu0 0.0
        %2814 = vmatprep.subr.mxu0 0.0
        %2815 = vmatpush1.msra.mxu0 0.0
        %2816 = vmatprep.subr.mxu0 0.0
        %2817 = vmatpush1.msra.mxu0 0.0
        %2818 = vmatprep.subr.mxu0 0.0
        %2819 = vmatpush1.msra.mxu0 0.0
        %2820 = vmatprep.subr.mxu0 0.0
        %2821 = vmatpush1.msra.mxu0 0.0
        %2822 = vmatprep.subr.mxu0 0.0
        %2823 = vmatpush1.msra.mxu0 0.0
        %2824 = vmatprep.subr.mxu0 0.0
        %2825 = vmatpush1.msra.mxu0 0.0
        %2826 = vmatprep.subr.mxu0 0.0
        %2827 = vmatpush1.msra.mxu0 0.0
        %2828 = vmatprep.subr.mxu0 0.0
        %2829 = vmatpush1.msra.mxu0 0.0
        %2830 = vmatprep.subr.mxu0 0.0
        %2831 = vmatpush1.msra.mxu0 0.0
        %2832 = vmatprep.subr.mxu0 0.0
        %2833 = vmatpush1.msra.mxu0 0.0
        %2834 = vmatprep.subr.mxu0 0.0
        %2835 = vmatpush1.msra.mxu0 0.0
        %2836 = vmatprep.subr.mxu0 0.0
        %2837 = vmatpush1.msra.mxu0 0.0
        %2838 = vmatprep.subr.mxu0 0.0
        %2839 = vmatpush1.msra.mxu0 0.0
        %2840 = vmatprep.subr.mxu0 0.0
        %2841 = vmatpush1.msra.mxu0 0.0
        %2842 = vmatprep.subr.mxu0 0.0
        %2843 = vmatpush1.msra.mxu0 0.0
        %2844 = vmatprep.subr.mxu0 0.0
        %2845 = vmatpush1.msra.mxu0 0.0
        %2846 = vmatprep.subr.mxu0 0.0
        %2847 = vmatpush1.msra.mxu0 0.0
        %2848 = vmatprep.subr.mxu0 0.0
        %2849 = vmatpush1.msra.mxu0 0.0
        %2850 = vmatprep.mubr.f32.mxu0 0.0
        %2851 = vmatmul.mubr.f32.gmra.mrb[0].mxu0 %v2784
        %v2852 = vpop.f32.mrb[0].mxu0
        %v2853 = vadd.f32 0.0, %v2852
        %v2854 = vpop.f32.mrb[0].mxu0
        %2855 = vdwg.mxu0
        %2856 = vrot.lane.b32.xlu0 %v2520, 120
        %v2857 = vpop.permute.xlu0 %2856
        %2858 = vrot.lane.b32.xlu0 %v2603, 120
        %v2859 = vpop.permute.xlu0 %2858
        %v2860 = vsel %vm1232, %v2857, 0
        %v2862 = vsel %vm1232, %v2859, 0
        %2864 = vmatprep.subr.mxu0 0.0
        %2865 = vmatpush1.xpose.msra.mxu0 %v2862
        %2866 = vmatprep.subr.mxu0 0.0
        %2867 = vmatpush1.xpose.msra.mxu0 0.0
        %2868 = vmatprep.subr.mxu0 0.0
        %2869 = vmatpush1.xpose.msra.mxu0 0.0
        %2870 = vmatprep.subr.mxu0 0.0
        %2871 = vmatpush1.xpose.msra.mxu0 0.0
        %2872 = vmatprep.subr.mxu0 0.0
        %2873 = vmatpush1.xpose.msra.mxu0 0.0
        %2874 = vmatprep.subr.mxu0 0.0
        %2875 = vmatpush1.xpose.msra.mxu0 0.0
        %2876 = vmatprep.subr.mxu0 0.0
        %2877 = vmatpush1.xpose.msra.mxu0 0.0
        %2878 = vmatprep.subr.mxu0 0.0
        %2879 = vmatpush1.xpose.msra.mxu0 0.0
        %2880 = vmatprep.subr.mxu0 0.0
        %2881 = vmatpush1.xpose.msra.mxu0 0.0
        %2882 = vmatprep.subr.mxu0 0.0
        %2883 = vmatpush1.xpose.msra.mxu0 0.0
        %2884 = vmatprep.subr.mxu0 0.0
        %2885 = vmatpush1.xpose.msra.mxu0 0.0
        %2886 = vmatprep.subr.mxu0 0.0
        %2887 = vmatpush1.xpose.msra.mxu0 0.0
        %2888 = vmatprep.subr.mxu0 0.0
        %2889 = vmatpush1.xpose.msra.mxu0 0.0
        %2890 = vmatprep.subr.mxu0 0.0
        %2891 = vmatpush1.xpose.msra.mxu0 0.0
        %2892 = vmatprep.subr.mxu0 0.0
        %2893 = vmatpush1.xpose.msra.mxu0 0.0
        %2894 = vmatprep.subr.mxu0 0.0
        %2895 = vmatpush1.xpose.msra.mxu0 0.0
        %2896 = vmatprep.subr.mxu0 0.0
        %2897 = vmatpush1.xpose.msra.mxu0 0.0
        %2898 = vmatprep.subr.mxu0 0.0
        %2899 = vmatpush1.xpose.msra.mxu0 0.0
        %2900 = vmatprep.subr.mxu0 0.0
        %2901 = vmatpush1.xpose.msra.mxu0 0.0
        %2902 = vmatprep.subr.mxu0 0.0
        %2903 = vmatpush1.xpose.msra.mxu0 0.0
        %2904 = vmatprep.subr.mxu0 0.0
        %2905 = vmatpush1.xpose.msra.mxu0 0.0
        %2906 = vmatprep.subr.mxu0 0.0
        %2907 = vmatpush1.xpose.msra.mxu0 0.0
        %2908 = vmatprep.subr.mxu0 0.0
        %2909 = vmatpush1.xpose.msra.mxu0 0.0
        %2910 = vmatprep.subr.mxu0 0.0
        %2911 = vmatpush1.xpose.msra.mxu0 0.0
        %2912 = vmatprep.subr.mxu0 0.0
        %2913 = vmatpush1.xpose.msra.mxu0 0.0
        %2914 = vmatprep.subr.mxu0 0.0
        %2915 = vmatpush1.xpose.msra.mxu0 0.0
        %2916 = vmatprep.subr.mxu0 0.0
        %2917 = vmatpush1.xpose.msra.mxu0 0.0
        %2918 = vmatprep.subr.mxu0 0.0
        %2919 = vmatpush1.xpose.msra.mxu0 0.0
        %2920 = vmatprep.subr.mxu0 0.0
        %2921 = vmatpush1.xpose.msra.mxu0 0.0
        %2922 = vmatprep.subr.mxu0 0.0
        %2923 = vmatpush1.xpose.msra.mxu0 0.0
        %2924 = vmatprep.subr.mxu0 0.0
        %2925 = vmatpush1.xpose.msra.mxu0 0.0
        %2926 = vmatprep.subr.mxu0 0.0
        %2927 = vmatpush1.xpose.msra.mxu0 0.0
        %2928 = vmatprep.mubr.f32.mxu0 0.0
        %2929 = vmatmul.mubr.f32.gmra.mrb[0].mxu0 %v2860
        %v2930 = vpop.f32.mrb[0].mxu0
        %v2931 = vadd.f32 0.0, %v2930
        %v2932 = vpop.f32.mrb[0].mxu0
        %2933 = vdwg.mxu0
        %v2934 = vmul.f32 %v2931, 0.35355338
        %v2935 = vadd.f32 %v2934, %v1313
        %v2936 = vsel %vm1232, %v2935, -inf
        %2937 = vmax.xlane.f32.xlu0 %v2936
        %v2938 = vpop.xlane.xlu0 %2937
        %v2939 = vsub.f32 %v2935, %v2938
        %v2940 = vmul.f32 %v2939, 1.442695
        %v2941 = vpow.pop %v2940
        %v2942 = vsel %vm1232, %v2941, 0.0
        %2943 = vadd.xlane.f32.xlu0 %v2942
        %v2944 = vpop.xlane.xlu0 %2943
        %v2945 = vrcp.pop %v2944
        %v2946 = vmul.f32 %v2941, %v2945
        %2948 = vrot.lane.b32.xlu0 %v2686, 120
        %v2949 = vpop.permute.xlu0 %2948
        %v2952 = vsel %vm1232, %v2946, 0
        %2954 = vmatprep.subr.mxu0 0.0
        %2955 = vmatpush1.msra.mxu0 %v2949
        %2956 = vmatprep.subr.mxu0 0.0
        %2957 = vmatpush1.msra.mxu0 0.0
        %2958 = vmatprep.subr.mxu0 0.0
        %2959 = vmatpush1.msra.mxu0 0.0
        %2960 = vmatprep.subr.mxu0 0.0
        %2961 = vmatpush1.msra.mxu0 0.0
        %2962 = vmatprep.subr.mxu0 0.0
        %2963 = vmatpush1.msra.mxu0 0.0
        %2964 = vmatprep.subr.mxu0 0.0
        %2965 = vmatpush1.msra.mxu0 0.0
        %2966 = vmatprep.subr.mxu0 0.0
        %2967 = vmatpush1.msra.mxu0 0.0
        %2968 = vmatprep.subr.mxu0 0.0
        %2969 = vmatpush1.msra.mxu0 0.0
        %2970 = vmatprep.subr.mxu0 0.0
        %2971 = vmatpush1.msra.mxu0 0.0
        %2972 = vmatprep.subr.mxu0 0.0
        %2973 = vmatpush1.msra.mxu0 0.0
        %2974 = vmatprep.subr.mxu0 0.0
        %2975 = vmatpush1.msra.mxu0 0.0
        %2976 = vmatprep.subr.mxu0 0.0
        %2977 = vmatpush1.msra.mxu0 0.0
        %2978 = vmatprep.subr.mxu0 0.0
        %2979 = vmatpush1.msra.mxu0 0.0
        %2980 = vmatprep.subr.mxu0 0.0
        %2981 = vmatpush1.msra.mxu0 0.0
        %2982 = vmatprep.subr.mxu0 0.0
        %2983 = vmatpush1.msra.mxu0 0.0
        %2984 = vmatprep.subr.mxu0 0.0
        %2985 = vmatpush1.msra.mxu0 0.0
        %2986 = vmatprep.subr.mxu0 0.0
        %2987 = vmatpush1.msra.mxu0 0.0
        %2988 = vmatprep.subr.mxu0 0.0
        %2989 = vmatpush1.msra.mxu0 0.0
        %2990 = vmatprep.subr.mxu0 0.0
        %2991 = vmatpush1.msra.mxu0 0.0
        %2992 = vmatprep.subr.mxu0 0.0
        %2993 = vmatpush1.msra.mxu0 0.0
        %2994 = vmatprep.subr.mxu0 0.0
        %2995 = vmatpush1.msra.mxu0 0.0
        %2996 = vmatprep.subr.mxu0 0.0
        %2997 = vmatpush1.msra.mxu0 0.0
        %2998 = vmatprep.subr.mxu0 0.0
        %2999 = vmatpush1.msra.mxu0 0.0
        %3000 = vmatprep.subr.mxu0 0.0
        %3001 = vmatpush1.msra.mxu0 0.0
        %3002 = vmatprep.subr.mxu0 0.0
        %3003 = vmatpush1.msra.mxu0 0.0
        %3004 = vmatprep.subr.mxu0 0.0
        %3005 = vmatpush1.msra.mxu0 0.0
        %3006 = vmatprep.subr.mxu0 0.0
        %3007 = vmatpush1.msra.mxu0 0.0
        %3008 = vmatprep.subr.mxu0 0.0
        %3009 = vmatpush1.msra.mxu0 0.0
        %3010 = vmatprep.subr.mxu0 0.0
        %3011 = vmatpush1.msra.mxu0 0.0
        %3012 = vmatprep.subr.mxu0 0.0
        %3013 = vmatpush1.msra.mxu0 0.0
        %3014 = vmatprep.subr.mxu0 0.0
        %3015 = vmatpush1.msra.mxu0 0.0
        %3016 = vmatprep.subr.mxu0 0.0
        %3017 = vmatpush1.msra.mxu0 0.0
        %3018 = vmatprep.mubr.f32.mxu0 0.0
        %3019 = vmatmul.mubr.f32.gmra.mrb[0].mxu0 %v2952
        %v3020 = vpop.f32.mrb[0].mxu0
        %v3021 = vadd.f32 0.0, %v3020
        %v3022 = vpop.f32.mrb[0].mxu0
        %3023 = vdwg.mxu0
        %v3025 = vsel %vm1232, %v3021, 0
        %3027 = vmatprep.subr.mxu0 0.0
        %3028 = vmatpush1.msra.mxu0 %v2691
        %3029 = vmatprep.subr.mxu0 0.0
        %3030 = vmatpush1.msra.mxu0 0.0
        %3031 = vmatprep.subr.mxu0 0.0
        %3032 = vmatpush1.msra.mxu0 0.0
        %3033 = vmatprep.subr.mxu0 0.0
        %3034 = vmatpush1.msra.mxu0 0.0
        %3035 = vmatprep.subr.mxu0 0.0
        %3036 = vmatpush1.msra.mxu0 0.0
        %3037 = vmatprep.subr.mxu0 0.0
        %3038 = vmatpush1.msra.mxu0 0.0
        %3039 = vmatprep.subr.mxu0 0.0
        %3040 = vmatpush1.msra.mxu0 0.0
        %3041 = vmatprep.subr.mxu0 0.0
        %3042 = vmatpush1.msra.mxu0 0.0
        %3043 = vmatprep.subr.mxu0 0.0
        %3044 = vmatpush1.msra.mxu0 0.0
        %3045 = vmatprep.subr.mxu0 0.0
        %3046 = vmatpush1.msra.mxu0 0.0
        %3047 = vmatprep.subr.mxu0 0.0
        %3048 = vmatpush1.msra.mxu0 0.0
        %3049 = vmatprep.subr.mxu0 0.0
        %3050 = vmatpush1.msra.mxu0 0.0
        %3051 = vmatprep.subr.mxu0 0.0
        %3052 = vmatpush1.msra.mxu0 0.0
        %3053 = vmatprep.subr.mxu0 0.0
        %3054 = vmatpush1.msra.mxu0 0.0
        %3055 = vmatprep.subr.mxu0 0.0
        %3056 = vmatpush1.msra.mxu0 0.0
        %3057 = vmatprep.subr.mxu0 0.0
        %3058 = vmatpush1.msra.mxu0 0.0
        %3059 = vmatprep.subr.mxu0 0.0
        %3060 = vmatpush1.msra.mxu0 0.0
        %3061 = vmatprep.subr.mxu0 0.0
        %3062 = vmatpush1.msra.mxu0 0.0
        %3063 = vmatprep.subr.mxu0 0.0
        %3064 = vmatpush1.msra.mxu0 0.0
        %3065 = vmatprep.subr.mxu0 0.0
        %3066 = vmatpush1.msra.mxu0 0.0
        %3067 = vmatprep.subr.mxu0 0.0
        %3068 = vmatpush1.msra.mxu0 0.0
        %3069 = vmatprep.subr.mxu0 0.0
        %3070 = vmatpush1.msra.mxu0 0.0
        %3071 = vmatprep.subr.mxu0 0.0
        %3072 = vmatpush1.msra.mxu0 0.0
        %3073 = vmatprep.subr.mxu0 0.0
        %3074 = vmatpush1.msra.mxu0 0.0
        %3075 = vmatprep.subr.mxu0 0.0
        %3076 = vmatpush1.msra.mxu0 0.0
        %3077 = vmatprep.subr.mxu0 0.0
        %3078 = vmatpush1.msra.mxu0 0.0
        %3079 = vmatprep.subr.mxu0 0.0
        %3080 = vmatpush1.msra.mxu0 0.0
        %3081 = vmatprep.subr.mxu0 0.0
        %3082 = vmatpush1.msra.mxu0 0.0
        %3083 = vmatprep.subr.mxu0 0.0
        %3084 = vmatpush1.msra.mxu0 0.0
        %3085 = vmatprep.subr.mxu0 0.0
        %3086 = vmatpush1.msra.mxu0 0.0
        %3087 = vmatprep.subr.mxu0 0.0
        %3088 = vmatpush1.msra.mxu0 0.0
        %3089 = vmatprep.subr.mxu0 0.0
        %3090 = vmatpush1.msra.mxu0 0.0
        %3091 = vmatprep.mubr.f32.mxu0 0.0
        %3092 = vmatmul.mubr.f32.gmra.mrb[0].mxu0 %v3025
        %v3093 = vpop.f32.mrb[0].mxu0
        %v3094 = vadd.f32 0.0, %v3093
        %v3095 = vpop.f32.mrb[0].mxu0
        %3096 = vdwg.mxu0
        %v3098 = vsel %vm1232, %v2853, 0
        %3100 = vmatprep.subr.mxu0 0.0
        %3101 = vmatpush1.msra.mxu0 %v2690
        %3102 = vmatprep.subr.mxu0 0.0
        %3103 = vmatpush1.msra.mxu0 0.0
        %3104 = vmatprep.subr.mxu0 0.0
        %3105 = vmatpush1.msra.mxu0 0.0
        %3106 = vmatprep.subr.mxu0 0.0
        %3107 = vmatpush1.msra.mxu0 0.0
        %3108 = vmatprep.subr.mxu0 0.0
        %3109 = vmatpush1.msra.mxu0 0.0
        %3110 = vmatprep.subr.mxu0 0.0
        %3111 = vmatpush1.msra.mxu0 0.0
        %3112 = vmatprep.subr.mxu0 0.0
        %3113 = vmatpush1.msra.mxu0 0.0
        %3114 = vmatprep.subr.mxu0 0.0
        %3115 = vmatpush1.msra.mxu0 0.0
        %3116 = vmatprep.subr.mxu0 0.0
        %3117 = vmatpush1.msra.mxu0 0.0
        %3118 = vmatprep.subr.mxu0 0.0
        %3119 = vmatpush1.msra.mxu0 0.0
        %3120 = vmatprep.subr.mxu0 0.0
        %3121 = vmatpush1.msra.mxu0 0.0
        %3122 = vmatprep.subr.mxu0 0.0
        %3123 = vmatpush1.msra.mxu0 0.0
        %3124 = vmatprep.subr.mxu0 0.0
        %3125 = vmatpush1.msra.mxu0 0.0
        %3126 = vmatprep.subr.mxu0 0.0
        %3127 = vmatpush1.msra.mxu0 0.0
        %3128 = vmatprep.subr.mxu0 0.0
        %3129 = vmatpush1.msra.mxu0 0.0
        %3130 = vmatprep.subr.mxu0 0.0
        %3131 = vmatpush1.msra.mxu0 0.0
        %3132 = vmatprep.subr.mxu0 0.0
        %3133 = vmatpush1.msra.mxu0 0.0
        %3134 = vmatprep.subr.mxu0 0.0
        %3135 = vmatpush1.msra.mxu0 0.0
        %3136 = vmatprep.subr.mxu0 0.0
        %3137 = vmatpush1.msra.mxu0 0.0
        %3138 = vmatprep.subr.mxu0 0.0
        %3139 = vmatpush1.msra.mxu0 0.0
        %3140 = vmatprep.subr.mxu0 0.0
        %3141 = vmatpush1.msra.mxu0 0.0
        %3142 = vmatprep.subr.mxu0 0.0
        %3143 = vmatpush1.msra.mxu0 0.0
        %3144 = vmatprep.subr.mxu0 0.0
        %3145 = vmatpush1.msra.mxu0 0.0
        %3146 = vmatprep.subr.mxu0 0.0
        %3147 = vmatpush1.msra.mxu0 0.0
        %3148 = vmatprep.subr.mxu0 0.0
        %3149 = vmatpush1.msra.mxu0 0.0
        %3150 = vmatprep.subr.mxu0 0.0
        %3151 = vmatpush1.msra.mxu0 0.0
        %3152 = vmatprep.subr.mxu0 0.0
        %3153 = vmatpush1.msra.mxu0 0.0
        %3154 = vmatprep.subr.mxu0 0.0
        %3155 = vmatpush1.msra.mxu0 0.0
        %3156 = vmatprep.subr.mxu0 0.0
        %3157 = vmatpush1.msra.mxu0 0.0
        %3158 = vmatprep.subr.mxu0 0.0
        %3159 = vmatpush1.msra.mxu0 0.0
        %3160 = vmatprep.subr.mxu0 0.0
        %3161 = vmatpush1.msra.mxu0 0.0
        %3162 = vmatprep.subr.mxu0 0.0
        %3163 = vmatpush1.msra.mxu0 0.0
        %3164 = vmatprep.mubr.f32.mxu0 0.0
        %3165 = vmatmul.mubr.f32.gmra.mrb[0].mxu0 %v3098
        %v3166 = vpop.f32.mrb[0].mxu0
        %v3167 = vadd.f32 %v3094, %v3166
        %v3168 = vpop.f32.mrb[0].mxu0
        %3169 = vdwg.mxu0
        %3170 = vrot.lane.b32.xlu0 %v2520, 112
        %v3171 = vpop.permute.xlu0 %3170
        %3172 = vrot.lane.b32.xlu0 %v2603, 112
        %v3173 = vpop.permute.xlu0 %3172
        %v3174 = vsel %vm1232, %v3171, 0
        %v3176 = vsel %vm1232, %v3173, 0
        %3178 = vmatprep.subr.mxu0 0.0
        %3179 = vmatpush1.xpose.msra.mxu0 %v3176
        %3180 = vmatprep.subr.mxu0 0.0
        %3181 = vmatpush1.xpose.msra.mxu0 0.0
        %3182 = vmatprep.subr.mxu0 0.0
        %3183 = vmatpush1.xpose.msra.mxu0 0.0
        %3184 = vmatprep.subr.mxu0 0.0
        %3185 = vmatpush1.xpose.msra.mxu0 0.0
        %3186 = vmatprep.subr.mxu0 0.0
        %3187 = vmatpush1.xpose.msra.mxu0 0.0
        %3188 = vmatprep.subr.mxu0 0.0
        %3189 = vmatpush1.xpose.msra.mxu0 0.0
        %3190 = vmatprep.subr.mxu0 0.0
        %3191 = vmatpush1.xpose.msra.mxu0 0.0
        %3192 = vmatprep.subr.mxu0 0.0
        %3193 = vmatpush1.xpose.msra.mxu0 0.0
        %3194 = vmatprep.subr.mxu0 0.0
        %3195 = vmatpush1.xpose.msra.mxu0 0.0
        %3196 = vmatprep.subr.mxu0 0.0
        %3197 = vmatpush1.xpose.msra.mxu0 0.0
        %3198 = vmatprep.subr.mxu0 0.0
        %3199 = vmatpush1.xpose.msra.mxu0 0.0
        %3200 = vmatprep.subr.mxu0 0.0
        %3201 = vmatpush1.xpose.msra.mxu0 0.0
        %3202 = vmatprep.subr.mxu0 0.0
        %3203 = vmatpush1.xpose.msra.mxu0 0.0
        %3204 = vmatprep.subr.mxu0 0.0
        %3205 = vmatpush1.xpose.msra.mxu0 0.0
        %3206 = vmatprep.subr.mxu0 0.0
        %3207 = vmatpush1.xpose.msra.mxu0 0.0
        %3208 = vmatprep.subr.mxu0 0.0
        %3209 = vmatpush1.xpose.msra.mxu0 0.0
        %3210 = vmatprep.subr.mxu0 0.0
        %3211 = vmatpush1.xpose.msra.mxu0 0.0
        %3212 = vmatprep.subr.mxu0 0.0
        %3213 = vmatpush1.xpose.msra.mxu0 0.0
        %3214 = vmatprep.subr.mxu0 0.0
        %3215 = vmatpush1.xpose.msra.mxu0 0.0
        %3216 = vmatprep.subr.mxu0 0.0
        %3217 = vmatpush1.xpose.msra.mxu0 0.0
        %3218 = vmatprep.subr.mxu0 0.0
        %3219 = vmatpush1.xpose.msra.mxu0 0.0
        %3220 = vmatprep.subr.mxu0 0.0
        %3221 = vmatpush1.xpose.msra.mxu0 0.0
        %3222 = vmatprep.subr.mxu0 0.0
        %3223 = vmatpush1.xpose.msra.mxu0 0.0
        %3224 = vmatprep.subr.mxu0 0.0
        %3225 = vmatpush1.xpose.msra.mxu0 0.0
        %3226 = vmatprep.subr.mxu0 0.0
        %3227 = vmatpush1.xpose.msra.mxu0 0.0
        %3228 = vmatprep.subr.mxu0 0.0
        %3229 = vmatpush1.xpose.msra.mxu0 0.0
        %3230 = vmatprep.subr.mxu0 0.0
        %3231 = vmatpush1.xpose.msra.mxu0 0.0
        %3232 = vmatprep.subr.mxu0 0.0
        %3233 = vmatpush1.xpose.msra.mxu0 0.0
        %3234 = vmatprep.subr.mxu0 0.0
        %3235 = vmatpush1.xpose.msra.mxu0 0.0
        %3236 = vmatprep.subr.mxu0 0.0
        %3237 = vmatpush1.xpose.msra.mxu0 0.0
        %3238 = vmatprep.subr.mxu0 0.0
        %3239 = vmatpush1.xpose.msra.mxu0 0.0
        %3240 = vmatprep.subr.mxu0 0.0
        %3241 = vmatpush1.xpose.msra.mxu0 0.0
        %3242 = vmatprep.mubr.f32.mxu0 0.0
        %3243 = vmatmul.mubr.f32.gmra.mrb[0].mxu0 %v3174
        %v3244 = vpop.f32.mrb[0].mxu0
        %v3245 = vadd.f32 0.0, %v3244
        %v3246 = vpop.f32.mrb[0].mxu0
        %3247 = vdwg.mxu0
        %v3248 = vmul.f32 %v3245, 0.35355338
        %v3249 = vadd.f32 %v3248, %v1313
        %v3250 = vsel %vm1232, %v3249, -inf
        %3251 = vmax.xlane.f32.xlu0 %v3250
        %v3252 = vpop.xlane.xlu0 %3251
        %v3253 = vsub.f32 %v3249, %v3252
        %v3254 = vmul.f32 %v3253, 1.442695
        %v3255 = vpow.pop %v3254
        %v3256 = vsel %vm1232, %v3255, 0.0
        %3257 = vadd.xlane.f32.xlu0 %v3256
        %v3258 = vpop.xlane.xlu0 %3257
        %v3259 = vrcp.pop %v3258
        %v3260 = vmul.f32 %v3255, %v3259
        %3261 = vrot.lane.b32.xlu0 %v2686, 112
        %v3262 = vpop.permute.xlu0 %3261
        %v3265 = vsel %vm1232, %v3260, 0
        %3267 = vmatprep.subr.mxu0 0.0
        %3268 = vmatpush1.msra.mxu0 %v3262
        %3269 = vmatprep.subr.mxu0 0.0
        %3270 = vmatpush1.msra.mxu0 0.0
        %3271 = vmatprep.subr.mxu0 0.0
        %3272 = vmatpush1.msra.mxu0 0.0
        %3273 = vmatprep.subr.mxu0 0.0
        %3274 = vmatpush1.msra.mxu0 0.0
        %3275 = vmatprep.subr.mxu0 0.0
        %3276 = vmatpush1.msra.mxu0 0.0
        %3277 = vmatprep.subr.mxu0 0.0
        %3278 = vmatpush1.msra.mxu0 0.0
        %3279 = vmatprep.subr.mxu0 0.0
        %3280 = vmatpush1.msra.mxu0 0.0
        %3281 = vmatprep.subr.mxu0 0.0
        %3282 = vmatpush1.msra.mxu0 0.0
        %3283 = vmatprep.subr.mxu0 0.0
        %3284 = vmatpush1.msra.mxu0 0.0
        %3285 = vmatprep.subr.mxu0 0.0
        %3286 = vmatpush1.msra.mxu0 0.0
        %3287 = vmatprep.subr.mxu0 0.0
        %3288 = vmatpush1.msra.mxu0 0.0
        %3289 = vmatprep.subr.mxu0 0.0
        %3290 = vmatpush1.msra.mxu0 0.0
        %3291 = vmatprep.subr.mxu0 0.0
        %3292 = vmatpush1.msra.mxu0 0.0
        %3293 = vmatprep.subr.mxu0 0.0
        %3294 = vmatpush1.msra.mxu0 0.0
        %3295 = vmatprep.subr.mxu0 0.0
        %3296 = vmatpush1.msra.mxu0 0.0
        %3297 = vmatprep.subr.mxu0 0.0
        %3298 = vmatpush1.msra.mxu0 0.0
        %3299 = vmatprep.subr.mxu0 0.0
        %3300 = vmatpush1.msra.mxu0 0.0
        %3301 = vmatprep.subr.mxu0 0.0
        %3302 = vmatpush1.msra.mxu0 0.0
        %3303 = vmatprep.subr.mxu0 0.0
        %3304 = vmatpush1.msra.mxu0 0.0
        %3305 = vmatprep.subr.mxu0 0.0
        %3306 = vmatpush1.msra.mxu0 0.0
        %3307 = vmatprep.subr.mxu0 0.0
        %3308 = vmatpush1.msra.mxu0 0.0
        %3309 = vmatprep.subr.mxu0 0.0
        %3310 = vmatpush1.msra.mxu0 0.0
        %3311 = vmatprep.subr.mxu0 0.0
        %3312 = vmatpush1.msra.mxu0 0.0
        %3313 = vmatprep.subr.mxu0 0.0
        %3314 = vmatpush1.msra.mxu0 0.0
        %3315 = vmatprep.subr.mxu0 0.0
        %3316 = vmatpush1.msra.mxu0 0.0
        %3317 = vmatprep.subr.mxu0 0.0
        %3318 = vmatpush1.msra.mxu0 0.0
        %3319 = vmatprep.subr.mxu0 0.0
        %3320 = vmatpush1.msra.mxu0 0.0
        %3321 = vmatprep.subr.mxu0 0.0
        %3322 = vmatpush1.msra.mxu0 0.0
        %3323 = vmatprep.subr.mxu0 0.0
        %3324 = vmatpush1.msra.mxu0 0.0
        %3325 = vmatprep.subr.mxu0 0.0
        %3326 = vmatpush1.msra.mxu0 0.0
        %3327 = vmatprep.subr.mxu0 0.0
        %3328 = vmatpush1.msra.mxu0 0.0
        %3329 = vmatprep.subr.mxu0 0.0
        %3330 = vmatpush1.msra.mxu0 0.0
        %3331 = vmatprep.mubr.f32.mxu0 0.0
        %3332 = vmatmul.mubr.f32.gmra.mrb[0].mxu0 %v3265
        %v3333 = vpop.f32.mrb[0].mxu0
        %v3334 = vadd.f32 0.0, %v3333
        %v3335 = vpop.f32.mrb[0].mxu0
        %3336 = vdwg.mxu0
        %v3338 = vsel %vm1232, %v3334, 0
        %3340 = vmatprep.subr.mxu0 0.0
        %3341 = vmatpush1.msra.mxu0 %v2692
        %3342 = vmatprep.subr.mxu0 0.0
        %3343 = vmatpush1.msra.mxu0 0.0
        %3344 = vmatprep.subr.mxu0 0.0
        %3345 = vmatpush1.msra.mxu0 0.0
        %3346 = vmatprep.subr.mxu0 0.0
        %3347 = vmatpush1.msra.mxu0 0.0
        %3348 = vmatprep.subr.mxu0 0.0
        %3349 = vmatpush1.msra.mxu0 0.0
        %3350 = vmatprep.subr.mxu0 0.0
        %3351 = vmatpush1.msra.mxu0 0.0
        %3352 = vmatprep.subr.mxu0 0.0
        %3353 = vmatpush1.msra.mxu0 0.0
        %3354 = vmatprep.subr.mxu0 0.0
        %3355 = vmatpush1.msra.mxu0 0.0
        %3356 = vmatprep.subr.mxu0 0.0
        %3357 = vmatpush1.msra.mxu0 0.0
        %3358 = vmatprep.subr.mxu0 0.0
        %3359 = vmatpush1.msra.mxu0 0.0
        %3360 = vmatprep.subr.mxu0 0.0
        %3361 = vmatpush1.msra.mxu0 0.0
        %3362 = vmatprep.subr.mxu0 0.0
        %3363 = vmatpush1.msra.mxu0 0.0
        %3364 = vmatprep.subr.mxu0 0.0
        %3365 = vmatpush1.msra.mxu0 0.0
        %3366 = vmatprep.subr.mxu0 0.0
        %3367 = vmatpush1.msra.mxu0 0.0
        %3368 = vmatprep.subr.mxu0 0.0
        %3369 = vmatpush1.msra.mxu0 0.0
        %3370 = vmatprep.subr.mxu0 0.0
        %3371 = vmatpush1.msra.mxu0 0.0
        %3372 = vmatprep.subr.mxu0 0.0
        %3373 = vmatpush1.msra.mxu0 0.0
        %3374 = vmatprep.subr.mxu0 0.0
        %3375 = vmatpush1.msra.mxu0 0.0
        %3376 = vmatprep.subr.mxu0 0.0
        %3377 = vmatpush1.msra.mxu0 0.0
        %3378 = vmatprep.subr.mxu0 0.0
        %3379 = vmatpush1.msra.mxu0 0.0
        %3380 = vmatprep.subr.mxu0 0.0
        %3381 = vmatpush1.msra.mxu0 0.0
        %3382 = vmatprep.subr.mxu0 0.0
        %3383 = vmatpush1.msra.mxu0 0.0
        %3384 = vmatprep.subr.mxu0 0.0
        %3385 = vmatpush1.msra.mxu0 0.0
        %3386 = vmatprep.subr.mxu0 0.0
        %3387 = vmatpush1.msra.mxu0 0.0
        %3388 = vmatprep.subr.mxu0 0.0
        %3389 = vmatpush1.msra.mxu0 0.0
        %3390 = vmatprep.subr.mxu0 0.0
        %3391 = vmatpush1.msra.mxu0 0.0
        %3392 = vmatprep.subr.mxu0 0.0
        %3393 = vmatpush1.msra.mxu0 0.0
        %3394 = vmatprep.subr.mxu0 0.0
        %3395 = vmatpush1.msra.mxu0 0.0
        %3396 = vmatprep.subr.mxu0 0.0
        %3397 = vmatpush1.msra.mxu0 0.0
        %3398 = vmatprep.subr.mxu0 0.0
        %3399 = vmatpush1.msra.mxu0 0.0
        %3400 = vmatprep.subr.mxu0 0.0
        %3401 = vmatpush1.msra.mxu0 0.0
        %3402 = vmatprep.subr.mxu0 0.0
        %3403 = vmatpush1.msra.mxu0 0.0
        %3404 = vmatprep.mubr.f32.mxu0 0.0
        %3405 = vmatmul.mubr.f32.gmra.mrb[0].mxu0 %v3338
        %v3406 = vpop.f32.mrb[0].mxu0
        %v3407 = vadd.f32 0.0, %v3406
        %v3408 = vpop.f32.mrb[0].mxu0
        %3409 = vdwg.mxu0
        %v3410 = vadd.f32 %v3167, %v3407
        %3411 = vrot.lane.b32.xlu0 %v2520, 104
        %v3412 = vpop.permute.xlu0 %3411
        %3413 = vrot.lane.b32.xlu0 %v2603, 104
        %v3414 = vpop.permute.xlu0 %3413
        %v3415 = vsel %vm1232, %v3412, 0
        %v3417 = vsel %vm1232, %v3414, 0
        %3419 = vmatprep.subr.mxu0 0.0
        %3420 = vmatpush1.xpose.msra.mxu0 %v3417
        %3421 = vmatprep.subr.mxu0 0.0
        %3422 = vmatpush1.xpose.msra.mxu0 0.0
        %3423 = vmatprep.subr.mxu0 0.0
        %3424 = vmatpush1.xpose.msra.mxu0 0.0
        %3425 = vmatprep.subr.mxu0 0.0
        %3426 = vmatpush1.xpose.msra.mxu0 0.0
        %3427 = vmatprep.subr.mxu0 0.0
        %3428 = vmatpush1.xpose.msra.mxu0 0.0
        %3429 = vmatprep.subr.mxu0 0.0
        %3430 = vmatpush1.xpose.msra.mxu0 0.0
        %3431 = vmatprep.subr.mxu0 0.0
        %3432 = vmatpush1.xpose.msra.mxu0 0.0
        %3433 = vmatprep.subr.mxu0 0.0
        %3434 = vmatpush1.xpose.msra.mxu0 0.0
        %3435 = vmatprep.subr.mxu0 0.0
        %3436 = vmatpush1.xpose.msra.mxu0 0.0
        %3437 = vmatprep.subr.mxu0 0.0
        %3438 = vmatpush1.xpose.msra.mxu0 0.0
        %3439 = vmatprep.subr.mxu0 0.0
        %3440 = vmatpush1.xpose.msra.mxu0 0.0
        %3441 = vmatprep.subr.mxu0 0.0
        %3442 = vmatpush1.xpose.msra.mxu0 0.0
        %3443 = vmatprep.subr.mxu0 0.0
        %3444 = vmatpush1.xpose.msra.mxu0 0.0
        %3445 = vmatprep.subr.mxu0 0.0
        %3446 = vmatpush1.xpose.msra.mxu0 0.0
        %3447 = vmatprep.subr.mxu0 0.0
        %3448 = vmatpush1.xpose.msra.mxu0 0.0
        %3449 = vmatprep.subr.mxu0 0.0
        %3450 = vmatpush1.xpose.msra.mxu0 0.0
        %3451 = vmatprep.subr.mxu0 0.0
        %3452 = vmatpush1.xpose.msra.mxu0 0.0
        %3453 = vmatprep.subr.mxu0 0.0
        %3454 = vmatpush1.xpose.msra.mxu0 0.0
        %3455 = vmatprep.subr.mxu0 0.0
        %3456 = vmatpush1.xpose.msra.mxu0 0.0
        %3457 = vmatprep.subr.mxu0 0.0
        %3458 = vmatpush1.xpose.msra.mxu0 0.0
        %3459 = vmatprep.subr.mxu0 0.0
        %3460 = vmatpush1.xpose.msra.mxu0 0.0
        %3461 = vmatprep.subr.mxu0 0.0
        %3462 = vmatpush1.xpose.msra.mxu0 0.0
        %3463 = vmatprep.subr.mxu0 0.0
        %3464 = vmatpush1.xpose.msra.mxu0 0.0
        %3465 = vmatprep.subr.mxu0 0.0
        %3466 = vmatpush1.xpose.msra.mxu0 0.0
        %3467 = vmatprep.subr.mxu0 0.0
        %3468 = vmatpush1.xpose.msra.mxu0 0.0
        %3469 = vmatprep.subr.mxu0 0.0
        %3470 = vmatpush1.xpose.msra.mxu0 0.0
        %3471 = vmatprep.subr.mxu0 0.0
        %3472 = vmatpush1.xpose.msra.mxu0 0.0
        %3473 = vmatprep.subr.mxu0 0.0
        %3474 = vmatpush1.xpose.msra.mxu0 0.0
        %3475 = vmatprep.subr.mxu0 0.0
        %3476 = vmatpush1.xpose.msra.mxu0 0.0
        %3477 = vmatprep.subr.mxu0 0.0
        %3478 = vmatpush1.xpose.msra.mxu0 0.0
        %3479 = vmatprep.subr.mxu0 0.0
        %3480 = vmatpush1.xpose.msra.mxu0 0.0
        %3481 = vmatprep.subr.mxu0 0.0
        %3482 = vmatpush1.xpose.msra.mxu0 0.0
        %3483 = vmatprep.mubr.f32.mxu0 0.0
        %3484 = vmatmul.mubr.f32.gmra.mrb[0].mxu0 %v3415
        %v3485 = vpop.f32.mrb[0].mxu0
        %v3486 = vadd.f32 0.0, %v3485
        %v3487 = vpop.f32.mrb[0].mxu0
        %3488 = vdwg.mxu0
        %v3489 = vmul.f32 %v3486, 0.35355338
        %v3490 = vadd.f32 %v3489, %v1313
        %v3491 = vsel %vm1232, %v3490, -inf
        %3492 = vmax.xlane.f32.xlu0 %v3491
        %v3493 = vpop.xlane.xlu0 %3492
        %v3494 = vsub.f32 %v3490, %v3493
        %v3495 = vmul.f32 %v3494, 1.442695
        %v3496 = vpow.pop %v3495
        %v3497 = vsel %vm1232, %v3496, 0.0
        %3498 = vadd.xlane.f32.xlu0 %v3497
        %v3499 = vpop.xlane.xlu0 %3498
        %v3500 = vrcp.pop %v3499
        %v3501 = vmul.f32 %v3496, %v3500
        %3502 = vrot.lane.b32.xlu0 %v2686, 104
        %v3503 = vpop.permute.xlu0 %3502
        %v3506 = vsel %vm1232, %v3501, 0
        %3508 = vmatprep.subr.mxu0 0.0
        %3509 = vmatpush1.msra.mxu0 %v3503
        %3510 = vmatprep.subr.mxu0 0.0
        %3511 = vmatpush1.msra.mxu0 0.0
        %3512 = vmatprep.subr.mxu0 0.0
        %3513 = vmatpush1.msra.mxu0 0.0
        %3514 = vmatprep.subr.mxu0 0.0
        %3515 = vmatpush1.msra.mxu0 0.0
        %3516 = vmatprep.subr.mxu0 0.0
        %3517 = vmatpush1.msra.mxu0 0.0
        %3518 = vmatprep.subr.mxu0 0.0
        %3519 = vmatpush1.msra.mxu0 0.0
        %3520 = vmatprep.subr.mxu0 0.0
        %3521 = vmatpush1.msra.mxu0 0.0
        %3522 = vmatprep.subr.mxu0 0.0
        %3523 = vmatpush1.msra.mxu0 0.0
        %3524 = vmatprep.subr.mxu0 0.0
        %3525 = vmatpush1.msra.mxu0 0.0
        %3526 = vmatprep.subr.mxu0 0.0
        %3527 = vmatpush1.msra.mxu0 0.0
        %3528 = vmatprep.subr.mxu0 0.0
        %3529 = vmatpush1.msra.mxu0 0.0
        %3530 = vmatprep.subr.mxu0 0.0
        %3531 = vmatpush1.msra.mxu0 0.0
        %3532 = vmatprep.subr.mxu0 0.0
        %3533 = vmatpush1.msra.mxu0 0.0
        %3534 = vmatprep.subr.mxu0 0.0
        %3535 = vmatpush1.msra.mxu0 0.0
        %3536 = vmatprep.subr.mxu0 0.0
        %3537 = vmatpush1.msra.mxu0 0.0
        %3538 = vmatprep.subr.mxu0 0.0
        %3539 = vmatpush1.msra.mxu0 0.0
        %3540 = vmatprep.subr.mxu0 0.0
        %3541 = vmatpush1.msra.mxu0 0.0
        %3542 = vmatprep.subr.mxu0 0.0
        %3543 = vmatpush1.msra.mxu0 0.0
        %3544 = vmatprep.subr.mxu0 0.0
        %3545 = vmatpush1.msra.mxu0 0.0
        %3546 = vmatprep.subr.mxu0 0.0
        %3547 = vmatpush1.msra.mxu0 0.0
        %3548 = vmatprep.subr.mxu0 0.0
        %3549 = vmatpush1.msra.mxu0 0.0
        %3550 = vmatprep.subr.mxu0 0.0
        %3551 = vmatpush1.msra.mxu0 0.0
        %3552 = vmatprep.subr.mxu0 0.0
        %3553 = vmatpush1.msra.mxu0 0.0
        %3554 = vmatprep.subr.mxu0 0.0
        %3555 = vmatpush1.msra.mxu0 0.0
        %3556 = vmatprep.subr.mxu0 0.0
        %3557 = vmatpush1.msra.mxu0 0.0
        %3558 = vmatprep.subr.mxu0 0.0
        %3559 = vmatpush1.msra.mxu0 0.0
        %3560 = vmatprep.subr.mxu0 0.0
        %3561 = vmatpush1.msra.mxu0 0.0
        %3562 = vmatprep.subr.mxu0 0.0
        %3563 = vmatpush1.msra.mxu0 0.0
        %3564 = vmatprep.subr.mxu0 0.0
        %3565 = vmatpush1.msra.mxu0 0.0
        %3566 = vmatprep.subr.mxu0 0.0
        %3567 = vmatpush1.msra.mxu0 0.0
        %3568 = vmatprep.subr.mxu0 0.0
        %3569 = vmatpush1.msra.mxu0 0.0
        %3570 = vmatprep.subr.mxu0 0.0
        %3571 = vmatpush1.msra.mxu0 0.0
        %3572 = vmatprep.mubr.f32.mxu0 0.0
        %3573 = vmatmul.mubr.f32.gmra.mrb[0].mxu0 %v3506
        %v3574 = vpop.f32.mrb[0].mxu0
        %v3575 = vadd.f32 0.0, %v3574
        %v3576 = vpop.f32.mrb[0].mxu0
        %3577 = vdwg.mxu0
        %v3579 = vsel %vm1232, %v3575, 0
        %3581 = vmatprep.subr.mxu0 0.0
        %3582 = vmatpush1.msra.mxu0 %v2693
        %3583 = vmatprep.subr.mxu0 0.0
        %3584 = vmatpush1.msra.mxu0 0.0
        %3585 = vmatprep.subr.mxu0 0.0
        %3586 = vmatpush1.msra.mxu0 0.0
        %3587 = vmatprep.subr.mxu0 0.0
        %3588 = vmatpush1.msra.mxu0 0.0
        %3589 = vmatprep.subr.mxu0 0.0
        %3590 = vmatpush1.msra.mxu0 0.0
        %3591 = vmatprep.subr.mxu0 0.0
        %3592 = vmatpush1.msra.mxu0 0.0
        %3593 = vmatprep.subr.mxu0 0.0
        %3594 = vmatpush1.msra.mxu0 0.0
        %3595 = vmatprep.subr.mxu0 0.0
        %3596 = vmatpush1.msra.mxu0 0.0
        %3597 = vmatprep.subr.mxu0 0.0
        %3598 = vmatpush1.msra.mxu0 0.0
        %3599 = vmatprep.subr.mxu0 0.0
        %3600 = vmatpush1.msra.mxu0 0.0
        %3601 = vmatprep.subr.mxu0 0.0
        %3602 = vmatpush1.msra.mxu0 0.0
        %3603 = vmatprep.subr.mxu0 0.0
        %3604 = vmatpush1.msra.mxu0 0.0
        %3605 = vmatprep.subr.mxu0 0.0
        %3606 = vmatpush1.msra.mxu0 0.0
        %3607 = vmatprep.subr.mxu0 0.0
        %3608 = vmatpush1.msra.mxu0 0.0
        %3609 = vmatprep.subr.mxu0 0.0
        %3610 = vmatpush1.msra.mxu0 0.0
        %3611 = vmatprep.subr.mxu0 0.0
        %3612 = vmatpush1.msra.mxu0 0.0
        %3613 = vmatprep.subr.mxu0 0.0
        %3614 = vmatpush1.msra.mxu0 0.0
        %3615 = vmatprep.subr.mxu0 0.0
        %3616 = vmatpush1.msra.mxu0 0.0
        %3617 = vmatprep.subr.mxu0 0.0
        %3618 = vmatpush1.msra.mxu0 0.0
        %3619 = vmatprep.subr.mxu0 0.0
        %3620 = vmatpush1.msra.mxu0 0.0
        %3621 = vmatprep.subr.mxu0 0.0
        %3622 = vmatpush1.msra.mxu0 0.0
        %3623 = vmatprep.subr.mxu0 0.0
        %3624 = vmatpush1.msra.mxu0 0.0
        %3625 = vmatprep.subr.mxu0 0.0
        %3626 = vmatpush1.msra.mxu0 0.0
        %3627 = vmatprep.subr.mxu0 0.0
        %3628 = vmatpush1.msra.mxu0 0.0
        %3629 = vmatprep.subr.mxu0 0.0
        %3630 = vmatpush1.msra.mxu0 0.0
        %3631 = vmatprep.subr.mxu0 0.0
        %3632 = vmatpush1.msra.mxu0 0.0
        %3633 = vmatprep.subr.mxu0 0.0
        %3634 = vmatpush1.msra.mxu0 0.0
        %3635 = vmatprep.subr.mxu0 0.0
        %3636 = vmatpush1.msra.mxu0 0.0
        %3637 = vmatprep.subr.mxu0 0.0
        %3638 = vmatpush1.msra.mxu0 0.0
        %3639 = vmatprep.subr.mxu0 0.0
        %3640 = vmatpush1.msra.mxu0 0.0
        %3641 = vmatprep.subr.mxu0 0.0
        %3642 = vmatpush1.msra.mxu0 0.0
        %3643 = vmatprep.subr.mxu0 0.0
        %3644 = vmatpush1.msra.mxu0 0.0
        %3645 = vmatprep.mubr.f32.mxu0 0.0
        %3646 = vmatmul.mubr.f32.gmra.mrb[0].mxu0 %v3579
        %v3647 = vpop.f32.mrb[0].mxu0
        %v3648 = vadd.f32 0.0, %v3647
        %v3649 = vpop.f32.mrb[0].mxu0
        %3650 = vdwg.mxu0
        %v3651 = vadd.f32 %v3410, %v3648
        %s3652 = scalar_lea.vmem %s10, 1
        %v3653 = vld [vmem:[%s3652] sm:$0x1]
        %v3655 = vlaneseq
        %v3656 = vshrl.u32 %v3655, 7
        %v3657 = vsub.s32 0, %v3656
        %v3658 = vrot.slane %v3653, %v3657
        %v3660 = vadd.f32 %v3651, %v3658
        %v3661 = vadd.f32 %v3660, %v2436
        %s3662 = scalar_lea.vmem %s15, 1
        %v3663 = vld [vmem:[%s3662] sm:$0x1]
        %s3664 = scalar_lea.vmem %s16, 1
        %v3665 = vld [vmem:[%s3664] sm:$0x1]
        %v3666 = vsel %vm901, %v3661, 0.0
        %3667 = vadd.xlane.f32.xlu0 %v3666
        %v3668 = vpop.xlane.xlu0 %3667
        %v3669 = vmul.f32 %v3668, %v2209
        %v3670 = vsub.f32 %v3661, %v3669
        %v3671 = vmul.f32 %v3670, %v3670
        %v3672 = vsel %vm901, %v3671, 0.0
        %3673 = vadd.xlane.f32.xlu0 %v3672
        %v3674 = vpop.xlane.xlu0 %3673
        %v3675 = vmul.f32 %v3674, %v2209
        %v3676 = vadd.f32 %v3675, 1e-05
        %v3677 = vrsqrt.pop %v3676
        %v3678 = vmul.f32 %v3670, %v3677
        %v3680 = vlaneseq
        %v3681 = vshrl.u32 %v3680, 7
        %v3682 = vsub.s32 0, %v3681
        %v3683 = vrot.slane %v3663, %v3682
        %v3685 = vmul.f32 %v3678, %v3683
        %v3687 = vlaneseq
        %v3688 = vshrl.u32 %v3687, 7
        %v3689 = vsub.s32 0, %v3688
        %v3690 = vrot.slane %v3665, %v3689
        %v3692 = vadd.f32 %v3685, %v3690
        %s3693 = scalar_lea.vmem [#allocation12], 32
        %v3694 = vld [vmem:[%s3693] sm:$0xff]
        %v3695 = vld [vmem:[%s3693 + $0x8] sm:$0xff]
        %v3696 = vld [vmem:[%s3693 + $0x10] sm:$0xff]
        %v3697 = vld [vmem:[%s3693 + $0x18] sm:$0xff]
        %s3698 = scalar_lea.vmem %s12, 1
        %v3699 = vld [vmem:[%s3698] sm:$0x1]
        %v3701 = vlaneseq
        %v3702 = vshrl.u32 %v3701, 7
        %v3703 = vsub.s32 0, %v3702
        %v3704 = vrot.slane %v3699, %v3703
        %v3707 = vsel %vm901, %v3692, 0
        %3709 = vmatprep.subr.mxu0 0.0
        %3710 = vmatpush1.msra.mxu0 %v3694
        %3711 = vmatprep.subr.mxu0 0.0
        %3712 = vmatpush1.msra.mxu0 %v3695
        %3713 = vmatprep.subr.mxu0 0.0
        %3714 = vmatpush1.msra.mxu0 %v3696
        %3715 = vmatprep.subr.mxu0 0.0
        %3716 = vmatpush1.msra.mxu0 %v3697
        %3717 = vmatprep.subr.mxu0 0.0
        %3718 = vmatpush1.msra.mxu0 0.0
        %3719 = vmatprep.subr.mxu0 0.0
        %3720 = vmatpush1.msra.mxu0 0.0
        %3721 = vmatprep.subr.mxu0 0.0
        %3722 = vmatpush1.msra.mxu0 0.0
        %3723 = vmatprep.subr.mxu0 0.0
        %3724 = vmatpush1.msra.mxu0 0.0
        %3725 = vmatprep.subr.mxu0 0.0
        %3726 = vmatpush1.msra.mxu0 0.0
        %3727 = vmatprep.subr.mxu0 0.0
        %3728 = vmatpush1.msra.mxu0 0.0
        %3729 = vmatprep.subr.mxu0 0.0
        %3730 = vmatpush1.msra.mxu0 0.0
        %3731 = vmatprep.subr.mxu0 0.0
        %3732 = vmatpush1.msra.mxu0 0.0
        %3733 = vmatprep.subr.mxu0 0.0
        %3734 = vmatpush1.msra.mxu0 0.0
        %3735 = vmatprep.subr.mxu0 0.0
        %3736 = vmatpush1.msra.mxu0 0.0
        %3737 = vmatprep.subr.mxu0 0.0
        %3738 = vmatpush1.msra.mxu0 0.0
        %3739 = vmatprep.subr.mxu0 0.0
        %3740 = vmatpush1.msra.mxu0 0.0
        %3741 = vmatprep.subr.mxu0 0.0
        %3742 = vmatpush1.msra.mxu0 0.0
        %3743 = vmatprep.subr.mxu0 0.0
        %3744 = vmatpush1.msra.mxu0 0.0
        %3745 = vmatprep.subr.mxu0 0.0
        %3746 = vmatpush1.msra.mxu0 0.0
        %3747 = vmatprep.subr.mxu0 0.0
        %3748 = vmatpush1.msra.mxu0 0.0
        %3749 = vmatprep.subr.mxu0 0.0
        %3750 = vmatpush1.msra.mxu0 0.0
        %3751 = vmatprep.subr.mxu0 0.0
        %3752 = vmatpush1.msra.mxu0 0.0
        %3753 = vmatprep.subr.mxu0 0.0
        %3754 = vmatpush1.msra.mxu0 0.0
        %3755 = vmatprep.subr.mxu0 0.0
        %3756 = vmatpush1.msra.mxu0 0.0
        %3757 = vmatprep.subr.mxu0 0.0
        %3758 = vmatpush1.msra.mxu0 0.0
        %3759 = vmatprep.subr.mxu0 0.0
        %3760 = vmatpush1.msra.mxu0 0.0
        %3761 = vmatprep.subr.mxu0 0.0
        %3762 = vmatpush1.msra.mxu0 0.0
        %3763 = vmatprep.subr.mxu0 0.0
        %3764 = vmatpush1.msra.mxu0 0.0
        %3765 = vmatprep.subr.mxu0 0.0
        %3766 = vmatpush1.msra.mxu0 0.0
        %3767 = vmatprep.subr.mxu0 0.0
        %3768 = vmatpush1.msra.mxu0 0.0
        %3769 = vmatprep.subr.mxu0 0.0
        %3770 = vmatpush1.msra.mxu0 0.0
        %3771 = vmatprep.subr.mxu0 0.0
        %3772 = vmatpush1.msra.mxu0 0.0
        %3773 = vmatprep.mubr.f32.mxu0 0.0
        %3774 = vmatmul.mubr.f32.gmra.mrb[0].mxu0 %v3707
        %v3775 = vpop.f32.mrb[0].mxu0
        %v3776 = vadd.f32 %v3704, %v3775
        %v3777 = vpop.f32.mrb[0].mxu0
        %3778 = vdwg.mxu0
        %v3779 = vmax.f32 %v3776, 0.0
        %s3780 = scalar_lea.vmem [#allocation13], 64
        %v3781 = vld [vmem:[%s3780] sm:$0xff]
        %v3782 = vld [vmem:[%s3780 + $0x8] sm:$0xff]
        %v3783 = vld [vmem:[%s3780 + $0x10] sm:$0xff]
        %v3784 = vld [vmem:[%s3780 + $0x18] sm:$0xff]
        %v3785 = vld [vmem:[%s3780 + $0x20] sm:$0xff]
        %v3786 = vld [vmem:[%s3780 + $0x28] sm:$0xff]
        %v3787 = vld [vmem:[%s3780 + $0x30] sm:$0xff]
        %v3788 = vld [vmem:[%s3780 + $0x38] sm:$0xff]
        %s3789 = scalar_lea.vmem %s14, 1
        %v3790 = vld [vmem:[%s3789] sm:$0x1]
        %v3792 = vlaneseq
        %v3793 = vshrl.u32 %v3792, 7
        %v3794 = vsub.s32 0, %v3793
        %v3795 = vrot.slane %v3790, %v3794
        %v3798 = vsel %vm826, %v3779, 0
        %3800 = vmatprep.subr.mxu0 0.0
        %3801 = vmatpush1.msra.mxu0 %v3781
        %3802 = vmatprep.subr.mxu0 0.0
        %3803 = vmatpush1.msra.mxu0 %v3782
        %3804 = vmatprep.subr.mxu0 0.0
        %3805 = vmatpush1.msra.mxu0 %v3783
        %3806 = vmatprep.subr.mxu0 0.0
        %3807 = vmatpush1.msra.mxu0 %v3784
        %3808 = vmatprep.subr.mxu0 0.0
        %3809 = vmatpush1.msra.mxu0 %v3785
        %3810 = vmatprep.subr.mxu0 0.0
        %3811 = vmatpush1.msra.mxu0 %v3786
        %3812 = vmatprep.subr.mxu0 0.0
        %3813 = vmatpush1.msra.mxu0 %v3787
        %3814 = vmatprep.subr.mxu0 0.0
        %3815 = vmatpush1.msra.mxu0 %v3788
        %3816 = vmatprep.subr.mxu0 0.0
        %3817 = vmatpush1.msra.mxu0 0.0
        %3818 = vmatprep.subr.mxu0 0.0
        %3819 = vmatpush1.msra.mxu0 0.0
        %3820 = vmatprep.subr.mxu0 0.0
        %3821 = vmatpush1.msra.mxu0 0.0
        %3822 = vmatprep.subr.mxu0 0.0
        %3823 = vmatpush1.msra.mxu0 0.0
        %3824 = vmatprep.subr.mxu0 0.0
        %3825 = vmatpush1.msra.mxu0 0.0
        %3826 = vmatprep.subr.mxu0 0.0
        %3827 = vmatpush1.msra.mxu0 0.0
        %3828 = vmatprep.subr.mxu0 0.0
        %3829 = vmatpush1.msra.mxu0 0.0
        %3830 = vmatprep.subr.mxu0 0.0
        %3831 = vmatpush1.msra.mxu0 0.0
        %3832 = vmatprep.subr.mxu0 0.0
        %3833 = vmatpush1.msra.mxu0 0.0
        %3834 = vmatprep.subr.mxu0 0.0
        %3835 = vmatpush1.msra.mxu0 0.0
        %3836 = vmatprep.subr.mxu0 0.0
        %3837 = vmatpush1.msra.mxu0 0.0
        %3838 = vmatprep.subr.mxu0 0.0
        %3839 = vmatpush1.msra.mxu0 0.0
        %3840 = vmatprep.subr.mxu0 0.0
        %3841 = vmatpush1.msra.mxu0 0.0
        %3842 = vmatprep.subr.mxu0 0.0
        %3843 = vmatpush1.msra.mxu0 0.0
        %3844 = vmatprep.subr.mxu0 0.0
        %3845 = vmatpush1.msra.mxu0 0.0
        %3846 = vmatprep.subr.mxu0 0.0
        %3847 = vmatpush1.msra.mxu0 0.0
        %3848 = vmatprep.subr.mxu0 0.0
        %3849 = vmatpush1.msra.mxu0 0.0
        %3850 = vmatprep.subr.mxu0 0.0
        %3851 = vmatpush1.msra.mxu0 0.0
        %3852 = vmatprep.subr.mxu0 0.0
        %3853 = vmatpush1.msra.mxu0 0.0
        %3854 = vmatprep.subr.mxu0 0.0
        %3855 = vmatpush1.msra.mxu0 0.0
        %3856 = vmatprep.subr.mxu0 0.0
        %3857 = vmatpush1.msra.mxu0 0.0
        %3858 = vmatprep.subr.mxu0 0.0
        %3859 = vmatpush1.msra.mxu0 0.0
        %3860 = vmatprep.subr.mxu0 0.0
        %3861 = vmatpush1.msra.mxu0 0.0
        %3862 = vmatprep.subr.mxu0 0.0
        %3863 = vmatpush1.msra.mxu0 0.0
        %3864 = vmatprep.mubr.f32.mxu0 0.0
        %3865 = vmatmul.mubr.f32.gmra.mrb[0].mxu0 %v3798
        %v3866 = vpop.f32.mrb[0].mxu0
        %v3867 = vadd.f32 %v3795, %v3866
        %v3868 = vpop.f32.mrb[0].mxu0
        %3869 = vdwg.mxu0
        %v3870 = vadd.f32 %v3867, %v3692
        %s3871 = scalar_lea.vmem %s17, 1
        %v3872 = vld [vmem:[%s3871] sm:$0x1]
        %s3873 = scalar_lea.vmem %s18, 1
        %v3874 = vld [vmem:[%s3873] sm:$0x1]
        %v3875 = vsel %vm901, %v3870, 0.0
        %3876 = vadd.xlane.f32.xlu0 %v3875
        %v3877 = vpop.xlane.xlu0 %3876
        %v3878 = vmul.f32 %v3877, %v2209
        %v3879 = vsub.f32 %v3870, %v3878
        %v3880 = vmul.f32 %v3879, %v3879
        %v3881 = vsel %vm901, %v3880, 0.0
        %3882 = vadd.xlane.f32.xlu0 %v3881
        %v3883 = vpop.xlane.xlu0 %3882
        %v3884 = vmul.f32 %v3883, %v2209
        %v3885 = vadd.f32 %v3884, 1e-05
        %v3886 = vrsqrt.pop %v3885
        %v3887 = vmul.f32 %v3879, %v3886
        %v3889 = vlaneseq
        %v3890 = vshrl.u32 %v3889, 7
        %v3891 = vsub.s32 0, %v3890
        %v3892 = vrot.slane %v3872, %v3891
        %v3894 = vmul.f32 %v3887, %v3892
        %v3896 = vlaneseq
        %v3897 = vshrl.u32 %v3896, 7
        %v3898 = vsub.s32 0, %v3897
        %v3899 = vrot.slane %v3874, %v3898
        %v3901 = vadd.f32 %v3894, %v3899
        %v3902 = vld [vmem:[%s19] sm:$0xff]
        %v3903 = vld [vmem:[%s19 + $0x8] sm:$0xff]
        %v3904 = vld [vmem:[%s19 + $0x10] sm:$0xff]
        %v3905 = vld [vmem:[%s19 + $0x18] sm:$0xff]
        %v3906 = vld [vmem:[%s20] sm:$0x1]
        %v3908 = vlaneseq
        %v3909 = vshrl.u32 %v3908, 7
        %v3910 = vsub.s32 0, %v3909
        %v3911 = vrot.slane %v3906, %v3910
        %v3914 = vsel %vm901, %v3901, 0
        %3916 = vmatprep.subr.mxu0 0.0
        %3917 = vmatpush1.msra.mxu0 %v3902
        %3918 = vmatprep.subr.mxu0 0.0
        %3919 = vmatpush1.msra.mxu0 %v3903
        %3920 = vmatprep.subr.mxu0 0.0
        %3921 = vmatpush1.msra.mxu0 %v3904
        %3922 = vmatprep.subr.mxu0 0.0
        %3923 = vmatpush1.msra.mxu0 %v3905
        %3924 = vmatprep.subr.mxu0 0.0
        %3925 = vmatpush1.msra.mxu0 0.0
        %3926 = vmatprep.subr.mxu0 0.0
        %3927 = vmatpush1.msra.mxu0 0.0
        %3928 = vmatprep.subr.mxu0 0.0
        %3929 = vmatpush1.msra.mxu0 0.0
        %3930 = vmatprep.subr.mxu0 0.0
        %3931 = vmatpush1.msra.mxu0 0.0
        %3932 = vmatprep.subr.mxu0 0.0
        %3933 = vmatpush1.msra.mxu0 0.0
        %3934 = vmatprep.subr.mxu0 0.0
        %3935 = vmatpush1.msra.mxu0 0.0
        %3936 = vmatprep.subr.mxu0 0.0
        %3937 = vmatpush1.msra.mxu0 0.0
        %3938 = vmatprep.subr.mxu0 0.0
        %3939 = vmatpush1.msra.mxu0 0.0
        %3940 = vmatprep.subr.mxu0 0.0
        %3941 = vmatpush1.msra.mxu0 0.0
        %3942 = vmatprep.subr.mxu0 0.0
        %3943 = vmatpush1.msra.mxu0 0.0
        %3944 = vmatprep.subr.mxu0 0.0
        %3945 = vmatpush1.msra.mxu0 0.0
        %3946 = vmatprep.subr.mxu0 0.0
        %3947 = vmatpush1.msra.mxu0 0.0
        %3948 = vmatprep.subr.mxu0 0.0
        %3949 = vmatpush1.msra.mxu0 0.0
        %3950 = vmatprep.subr.mxu0 0.0
        %3951 = vmatpush1.msra.mxu0 0.0
        %3952 = vmatprep.subr.mxu0 0.0
        %3953 = vmatpush1.msra.mxu0 0.0
        %3954 = vmatprep.subr.mxu0 0.0
        %3955 = vmatpush1.msra.mxu0 0.0
        %3956 = vmatprep.subr.mxu0 0.0
        %3957 = vmatpush1.msra.mxu0 0.0
        %3958 = vmatprep.subr.mxu0 0.0
        %3959 = vmatpush1.msra.mxu0 0.0
        %3960 = vmatprep.subr.mxu0 0.0
        %3961 = vmatpush1.msra.mxu0 0.0
        %3962 = vmatprep.subr.mxu0 0.0
        %3963 = vmatpush1.msra.mxu0 0.0
        %3964 = vmatprep.subr.mxu0 0.0
        %3965 = vmatpush1.msra.mxu0 0.0
        %3966 = vmatprep.subr.mxu0 0.0
        %3967 = vmatpush1.msra.mxu0 0.0
        %3968 = vmatprep.subr.mxu0 0.0
        %3969 = vmatpush1.msra.mxu0 0.0
        %3970 = vmatprep.subr.mxu0 0.0
        %3971 = vmatpush1.msra.mxu0 0.0
        %3972 = vmatprep.subr.mxu0 0.0
        %3973 = vmatpush1.msra.mxu0 0.0
        %3974 = vmatprep.subr.mxu0 0.0
        %3975 = vmatpush1.msra.mxu0 0.0
        %3976 = vmatprep.subr.mxu0 0.0
        %3977 = vmatpush1.msra.mxu0 0.0
        %3978 = vmatprep.subr.mxu0 0.0
        %3979 = vmatpush1.msra.mxu0 0.0
        %3980 = vmatprep.mubr.f32.mxu0 0.0
        %3981 = vmatmul.mubr.f32.gmra.mrb[0].mxu0 %v3914
        %v3982 = vpop.f32.mrb[0].mxu0
        %v3983 = vadd.f32 %v3911, %v3982
        %v3984 = vpop.f32.mrb[0].mxu0
        %3985 = vdwg.mxu0
        %vm3986 = vcmask 130048
        %3987 = vst.msk [vmem:[%s806] sm:$0xff] %vm3986, %v3983
        %p3988 = scmp.lt.s32.totalorder %s41, 1
        %s3989 = scalar_select %p3988, %s41, 1
        %s3990 = smul.addr %s3989, 8
        %s3991 = scalar_lea.vmem %s21, %s3990
        %p3992 = scmp.lt.s32.totalorder %s41, 1
        %s3993 = scalar_select %p3992, %s41, 1
        %s3994 = scalar_lea.vmem %s22, %s3993
        // Predicated region
        $region137: #{image_encoder_forward.1} parent=103 // pred_check
          %p3995 = pneg %p505
        $region138: #{image_encoder_forward.1} parent=103 // pred_check_branch
          %3997 = sbr.rel (%p3995) target = $region140
        $region139: #{image_encoder_forward.1} parent=103 // pred_region
          _
        $region140: #{image_encoder_forward.1} parent=103 // pred_fallthru
          _
        // Predicated region
        $region141: #{image_encoder_forward.1} parent=103 // pred_check
          %p3998 = pneg %p531
        $region142: #{image_encoder_forward.1} parent=103 // pred_check_branch
          %4000 = sbr.rel (%p3998) target = $region144
        $region143: #{image_encoder_forward.1} parent=103 // pred_region
          _
        $region144: #{image_encoder_forward.1} parent=103 // pred_fallthru
          _
      $region104: #{image_encoder_forward.1} parent=5 // pred_fallthru
        _
      %p4001 = scmp.le.s32.totalorder 2, %s36
      // Predicated region
      $region145: #{image_encoder_forward.1} parent=5 // pred_check
        %p4002 = pneg %p4001
      $region146: #{image_encoder_forward.1} parent=5 // pred_check_branch
        %4004 = sbr.rel (%p4002) target = $region148
      $region147: #{image_encoder_forward.1} parent=5 // pred_region
        %s4005 = ssub.s32 %s36, 2
        // Predicated region
        $region149: #{image_encoder_forward.1} parent=147 // pred_check
          %p4006 = pneg %p511
        $region150: #{image_encoder_forward.1} parent=147 // pred_check_branch
          %4008 = sbr.rel (%p4006) target = $region152
        $region151: #{image_encoder_forward.1} parent=147 // pred_region
          %p4009 = scmp.lt.s32.totalorder %s42, 1
          %s4010 = scalar_select %p4009, %s42, 1
          %s4011 = smul.addr %s4010, 8
          %s4012 = scalar_lea.vmem %s21, %s4011
        $region152: #{image_encoder_forward.1} parent=147 // pred_fallthru
          _
        // Predicated region
        $region153: #{image_encoder_forward.1} parent=147 // pred_check
          %p4013 = pneg %p537
        $region154: #{image_encoder_forward.1} parent=147 // pred_check_branch
          %4015 = sbr.rel (%p4013) target = $region156
        $region155: #{image_encoder_forward.1} parent=147 // pred_region
          %p4016 = scmp.lt.s32.totalorder %s42, 1
          %s4017 = scalar_select %p4016, %s42, 1
          %s4018 = scalar_lea.vmem %s22, %s4017
        $region156: #{image_encoder_forward.1} parent=147 // pred_fallthru
          _
      $region148: #{image_encoder_forward.1} parent=5 // pred_fallthru
        _
    $region6: #{image_encoder_forward.1} parent=1 // loop_footer
      %s40 = sadd.s32 1, %s36
    $region7: #{image_encoder_forward.1} parent=1 // loop_footer_branch
      %35 = sbr.rel target = $region3
    $region8: #{image_encoder_forward.1} parent=1 // loop_exit
      _
    %4019 = vsyncpa [#allocation3], 1
    %s4020 = scalar_lea.sflag [#allocation3], 1
    %4021 = vsyncpa %s4020, 1
    %4022 = vsyncpa [#allocation5], 1
    %4023 = vsyncpa [#allocation8], 1
    %4024 = vsyncpa [#allocation11], 1
    %4025 = vsyncpa [#allocation14], 1

</llo_original>
